<compile_context>
chip_gen: v6e
topology: v6e:2x2x1
jax: 0.10.0
libtpu: 0.0.40
codegen_flags: <defaults>
</compile_context>

<pallas_src>
import jax
import jax.numpy as jnp
from jax import lax
from jax.experimental import pallas as pl
from jax.experimental.pallas import tpu as pltpu

EPS = 1e-5  # torch.nn.InstanceNorm2d default eps


# ---------------------------------------------------------------- kernel body
def _make_kernel(H, W, C):
    inv_n = 1.0 / float(H * W)

    def reflect_pad(img):
        # img: (H, W, C) -> (H+2, W+2, C), 1-pixel reflect halo, built in VMEM.
        rows = jnp.concatenate(
            [img[:, 1:2, :], img, img[:, W - 2:W - 1, :]], axis=1)        # (H, W+2, C)
        return jnp.concatenate(
            [rows[1:2, :, :], rows, rows[H - 2:H - 1, :, :]], axis=0)     # (H+2, W+2, C)

    def conv3x3(xpad, w_flat):
        # xpad: (H+2, W+2, C); w_flat: (9C, Cout).  Full im2col -> ONE MXU matmul.
        taps = [xpad[ky:ky + H, kx:kx + W, :]
                for ky in range(3) for kx in range(3)]
        patches = jnp.concatenate(taps, axis=-1)                          # (H, W, 9C)
        out = jnp.dot(patches.reshape(H * W, 9 * C), w_flat,
                      preferred_element_type=jnp.float32)                 # (H*W, Cout)
        return out.reshape(H, W, w_flat.shape[1])

    def cond_instance_norm(h, gamma, beta):
        # Single-pass biased variance (f32 accumulation), fused affine.
        s = jnp.sum(h, axis=(0, 1), keepdims=True)
        sq = jnp.sum(h * h, axis=(0, 1), keepdims=True)
        mean = s * inv_n
        var = sq * inv_n - mean * mean
        scale = gamma[None, None, :] * lax.rsqrt(var + EPS)
        offset = beta[None, None, :] - mean * scale
        return h * scale + offset

    def kernel(x_ref, w1_ref, b1_ref, g1_ref, be1_ref,
               w2_ref, g2_ref, be2_ref, o_ref):
        x = x_ref[0]                                                      # (H, W, C)

        # stage 1: reflect pad -> conv1 + bias -> ReLU -> cond. instance norm
        h = conv3x3(reflect_pad(x), w1_ref[...]) + b1_ref[0][None, None, :]
        h = jnp.maximum(h, 0.0)                                           # clamp(min=0)
        h = cond_instance_norm(h, g1_ref[0, 0], be1_ref[0, 0])

        # stage 2: reflect pad -> conv2 (bias cancelled by IN) -> cond. IN -> + x
        h2 = conv3x3(reflect_pad(h), w2_ref[...])
        h2 = cond_instance_norm(h2, g2_ref[0, 0], be2_ref[0, 0])

        o_ref[0] = h2 + x                                                 # residual

    return kernel


# ------------------------------------------------------------------- wrapper
def residual_block_forward(x_nhwc, styles, params):
    B, H, W, C = x_nhwc.shape
    f32 = jnp.float32

    # per-sample conditional affine params (embedding gather = layout glue)
    g1 = params["gamma1"][styles].reshape(B, 1, C).astype(f32)
    be1 = params["beta1"][styles].reshape(B, 1, C).astype(f32)
    g2 = params["gamma2"][styles].reshape(B, 1, C).astype(f32)
    be2 = params["beta2"][styles].reshape(B, 1, C).astype(f32)

    # (3,3,Cin,Cout) -> (9*Cin, Cout); row order (ky,kx,cin) matches the kernel im2col.
    w1 = params["w1"].reshape(9 * C, C).astype(f32)
    w2 = params["w2"].reshape(9 * C, C).astype(f32)
    b1 = params["b1"].reshape(1, C).astype(f32)
    # NOTE: conv-2 bias is mathematically a no-op (instance_norm2 subtracts the
    # mean immediately after), so it is not passed to the kernel at all.

    x_spec = pl.BlockSpec((1, H, W, C), lambda n: (n, 0, 0, 0))
    w_spec = pl.BlockSpec((9 * C, C), lambda n: (0, 0))
    b_spec = pl.BlockSpec((1, C), lambda n: (0, 0))
    per_sample = pl.BlockSpec((1, 1, C), lambda n: (n, 0, 0))

    return pl.pallas_call(
        _make_kernel(H, W, C),
        out_shape=jax.ShapeDtypeStruct((B, H, W, C), f32),
        grid=(B,),
        in_specs=[x_spec, w_spec, b_spec, per_sample, per_sample,
                  w_spec, per_sample, per_sample],
        out_specs=x_spec,
        compiler_params=pltpu.CompilerParams(
            dimension_semantics=("parallel",)),
    )(x_nhwc.astype(f32), w1, b1, g1, be1, w2, g2, be2)


# -------------------------------------------------------- pure-JAX reference
def reference_forward(x_nhwc, styles, params):
    def conv(x, w, b):
        xp = jnp.pad(x, ((0, 0), (1, 1), (1, 1), (0, 0)), mode="reflect")
        y = lax.conv_general_dilated(
            xp, w, window_strides=(1, 1), padding="VALID",
            dimension_numbers=("NHWC", "HWIO", "NHWC"))
        return y + b[None, None, None, :]

    def cin(h, gamma, beta):
        mean = jnp.mean(h, axis=(1, 2), keepdims=True)
        var = jnp.mean((h - mean) ** 2, axis=(1, 2), keepdims=True)
        hn = (h - mean) / jnp.sqrt(var + EPS)
        return gamma[:, None, None, :] * hn + beta[:, None, None, :]

    h = jnp.maximum(conv(x_nhwc, params["w1"], params["b1"]), 0.0)
    h = cin(h, params["gamma1"][styles], params["beta1"][styles])
    h2 = conv(x_nhwc=None, w=None, b=None) if False else conv(h, params["w2"], params["b2"])
    h2 = cin(h2, params["gamma2"][styles], params["beta2"][styles])
    return h2 + x_nhwc


# ----------------------------------------------------------------------- main
if __name__ == "__main__":
    B, C, H, W = 2, 4, 16, 16
    n_styles = 3

    key = jax.random.PRNGKey(0)
    kx, kw1, kb1, kw2, kb2, kg1, ke1, kg2, ke2, ks = jax.random.split(key, 10)

    # input in the PyTorch NCHW convention, then moved to the kernel layout
    x_nchw = jax.random.normal(kx, (B, C, H, W), dtype=jnp.float32)
    x_nhwc = jnp.transpose(x_nchw, (0, 2, 3, 1))
    styles = jax.random.randint(ks, (B,), 0, n_styles)

    fan_in = C * 3 * 3
    bound = 1.0 / (fan_in ** 0.5)
    params = {
        # conv weights stored as (kh, kw, Cin, Cout)
        "w1": jax.random.uniform(kw1, (3, 3, C, C), jnp.float32, -bound, bound),
        "b1": jax.random.uniform(kb1, (C,), jnp.float32, -bound, bound),
        "w2": jax.random.uniform(kw2, (3, 3, C, C), jnp.float32, -bound, bound),
        "b2": jax.random.uniform(kb2, (C,), jnp.float32, -bound, bound),
        # conditional instance-norm embeddings: (n_styles, C)
        "gamma1": 1.0 + 0.1 * jax.random.normal(kg1, (n_styles, C), jnp.float32),
        "beta1": 0.1 * jax.random.normal(ke1, (n_styles, C), jnp.float32),
        "gamma2": 1.0 + 0.1 * jax.random.normal(kg2, (n_styles, C), jnp.float32),
        "beta2": 0.1 * jax.random.normal(ke2, (n_styles, C), jnp.float32),
    }

    out = residual_block_forward(x_nhwc, styles, params)
    out = jax.block_until_ready(out)

    ref = jax.block_until_ready(reference_forward(x_nhwc, styles, params))
    assert out.shape == (B, H, W, C)
    assert jnp.allclose(out, ref, atol=1e-4, rtol=1e-4), "mismatch vs JAX reference"

    print("KERNEL_OK")
</pallas_src>

<mosaic_0001>
module attributes {stable_mosaic.version = 11 : i64} {
  func.func @kernel(%arg0: i32, %arg1: memref<1x16x16x4xf32, #tpu.memory_space<vmem>>, %arg2: memref<36x4xf32, #tpu.memory_space<vmem>>, %arg3: memref<1x4xf32, #tpu.memory_space<vmem>>, %arg4: memref<1x1x4xf32, #tpu.memory_space<vmem>>, %arg5: memref<1x1x4xf32, #tpu.memory_space<vmem>>, %arg6: memref<36x4xf32, #tpu.memory_space<vmem>>, %arg7: memref<1x1x4xf32, #tpu.memory_space<vmem>>, %arg8: memref<1x1x4xf32, #tpu.memory_space<vmem>>, %arg9: memref<1x16x16x4xf32, #tpu.memory_space<vmem>>) attributes {dimension_semantics = [#tpu.dimension_semantics<parallel>], iteration_bounds = array<i64: 2>, scalar_prefetch = 0 : i64, scratch_operands = 0 : i64, tpu.core_type = #tpu.core_type<tc>, window_params = [{transform_indices = @transform_0, window_bounds = array<i64: 1, 16, 16, 4>}, {pipeline_mode = #tpu.pipeline_mode<synchronous>, transform_indices = @transform_1, window_bounds = array<i64: 36, 4>}, {pipeline_mode = #tpu.pipeline_mode<synchronous>, transform_indices = @transform_2, window_bounds = array<i64: 1, 4>}, {transform_indices = @transform_3, window_bounds = array<i64: 1, 1, 4>}, {transform_indices = @transform_4, window_bounds = array<i64: 1, 1, 4>}, {pipeline_mode = #tpu.pipeline_mode<synchronous>, transform_indices = @transform_5, window_bounds = array<i64: 36, 4>}, {transform_indices = @transform_6, window_bounds = array<i64: 1, 1, 4>}, {transform_indices = @transform_7, window_bounds = array<i64: 1, 1, 4>}, {transform_indices = @transform_8, window_bounds = array<i64: 1, 16, 16, 4>}]} {
    %c0 = arith.constant 0 : index
    %c0_0 = arith.constant 0 : index
    %c0_1 = arith.constant 0 : index
    %c0_2 = arith.constant 0 : index
    %0 = vector.load %arg1[%c0, %c0_0, %c0_1, %c0_2] : memref<1x16x16x4xf32, #tpu.memory_space<vmem>>, vector<1x16x16x4xf32>
    %1 = vector.shape_cast %0 : vector<1x16x16x4xf32> to vector<16x16x4xf32>
    %2 = vector.extract_strided_slice %1 {offsets = [0, 1, 0], sizes = [16, 1, 4], strides = [1, 1, 1]} : vector<16x16x4xf32> to vector<16x1x4xf32>
    %3 = vector.extract_strided_slice %1 {offsets = [0, 14, 0], sizes = [16, 1, 4], strides = [1, 1, 1]} : vector<16x16x4xf32> to vector<16x1x4xf32>
    %4 = tpu.concatenate %2, %1, %3 in 1 : vector<16x1x4xf32>, vector<16x16x4xf32>, vector<16x1x4xf32> -> vector<16x18x4xf32>
    %5 = vector.extract_strided_slice %4 {offsets = [1, 0, 0], sizes = [1, 18, 4], strides = [1, 1, 1]} : vector<16x18x4xf32> to vector<1x18x4xf32>
    %6 = vector.extract_strided_slice %4 {offsets = [14, 0, 0], sizes = [1, 18, 4], strides = [1, 1, 1]} : vector<16x18x4xf32> to vector<1x18x4xf32>
    %7 = tpu.concatenate %5, %4, %6 in 0 : vector<1x18x4xf32>, vector<16x18x4xf32>, vector<1x18x4xf32> -> vector<18x18x4xf32>
    %c0_3 = arith.constant 0 : index
    %c0_4 = arith.constant 0 : index
    %8 = vector.load %arg2[%c0_3, %c0_4] : memref<36x4xf32, #tpu.memory_space<vmem>>, vector<36x4xf32>
    %9 = vector.extract_strided_slice %7 {offsets = [0, 0, 0], sizes = [16, 16, 4], strides = [1, 1, 1]} : vector<18x18x4xf32> to vector<16x16x4xf32>
    %10 = vector.extract_strided_slice %7 {offsets = [0, 1, 0], sizes = [16, 16, 4], strides = [1, 1, 1]} : vector<18x18x4xf32> to vector<16x16x4xf32>
    %11 = vector.extract_strided_slice %7 {offsets = [0, 2, 0], sizes = [16, 16, 4], strides = [1, 1, 1]} : vector<18x18x4xf32> to vector<16x16x4xf32>
    %12 = vector.extract_strided_slice %7 {offsets = [1, 0, 0], sizes = [16, 16, 4], strides = [1, 1, 1]} : vector<18x18x4xf32> to vector<16x16x4xf32>
    %13 = vector.extract_strided_slice %7 {offsets = [1, 1, 0], sizes = [16, 16, 4], strides = [1, 1, 1]} : vector<18x18x4xf32> to vector<16x16x4xf32>
    %14 = vector.extract_strided_slice %7 {offsets = [1, 2, 0], sizes = [16, 16, 4], strides = [1, 1, 1]} : vector<18x18x4xf32> to vector<16x16x4xf32>
    %15 = vector.extract_strided_slice %7 {offsets = [2, 0, 0], sizes = [16, 16, 4], strides = [1, 1, 1]} : vector<18x18x4xf32> to vector<16x16x4xf32>
    %16 = vector.extract_strided_slice %7 {offsets = [2, 1, 0], sizes = [16, 16, 4], strides = [1, 1, 1]} : vector<18x18x4xf32> to vector<16x16x4xf32>
    %17 = vector.extract_strided_slice %7 {offsets = [2, 2, 0], sizes = [16, 16, 4], strides = [1, 1, 1]} : vector<18x18x4xf32> to vector<16x16x4xf32>
    %18 = tpu.concatenate %9, %10, %11, %12, %13, %14, %15, %16, %17 in 2 : vector<16x16x4xf32>, vector<16x16x4xf32>, vector<16x16x4xf32>, vector<16x16x4xf32>, vector<16x16x4xf32>, vector<16x16x4xf32>, vector<16x16x4xf32>, vector<16x16x4xf32>, vector<16x16x4xf32> -> vector<16x16x36xf32>
    %19 = vector.shape_cast %18 : vector<16x16x36xf32> to vector<256x36xf32>
    %cst = arith.constant dense<0.000000e+00> : vector<256x4xf32>
    %20 = tpu.matmul %19, %8, %cst {dimension_numbers = #tpu.dot_dimension_numbers<[1], [0], [0], [1], [0, 0, 1, 1], [], []>} : vector<256x36xf32>, vector<36x4xf32>, vector<256x4xf32> -> vector<256x4xf32>
    %21 = vector.shape_cast %20 : vector<256x4xf32> to vector<16x16x4xf32>
    %c0_5 = arith.constant 0 : index
    %c0_6 = arith.constant 0 : index
    %22 = vector.load %arg3[%c0_5, %c0_6] : memref<1x4xf32, #tpu.memory_space<vmem>>, vector<1x4xf32>
    %23 = vector.shape_cast %22 : vector<1x4xf32> to vector<4xf32>
    %24 = vector.shape_cast %23 : vector<4xf32> to vector<1x1x4xf32>
    %25 = vector.broadcast %24 : vector<1x1x4xf32> to vector<16x16x4xf32>
    %26 = arith.addf %21, %25 : vector<16x16x4xf32>
    %cst_7 = arith.constant 0.000000e+00 : f32
    %27 = vector.broadcast %cst_7 : f32 to vector<16x16x4xf32>
    %28 = arith.maximumf %26, %27 : vector<16x16x4xf32>
    %c0_8 = arith.constant 0 : index
    %c0_9 = arith.constant 0 : index
    %c0_10 = arith.constant 0 : index
    %29 = vector.load %arg4[%c0_8, %c0_9, %c0_10] : memref<1x1x4xf32, #tpu.memory_space<vmem>>, vector<1x1x4xf32>
    %30 = vector.shape_cast %29 : vector<1x1x4xf32> to vector<4xf32>
    %c0_11 = arith.constant 0 : index
    %c0_12 = arith.constant 0 : index
    %c0_13 = arith.constant 0 : index
    %31 = vector.load %arg5[%c0_11, %c0_12, %c0_13] : memref<1x1x4xf32, #tpu.memory_space<vmem>>, vector<1x1x4xf32>
    %32 = vector.shape_cast %31 : vector<1x1x4xf32> to vector<4xf32>
    %cst_14 = arith.constant dense<0.000000e+00> : vector<4xf32>
    %33 = vector.multi_reduction <add>, %28, %cst_14 [0, 1] : vector<16x16x4xf32> to vector<4xf32>
    %34 = vector.shape_cast %33 : vector<4xf32> to vector<1x1x4xf32>
    %35 = arith.mulf %28, %28 : vector<16x16x4xf32>
    %cst_15 = arith.constant dense<0.000000e+00> : vector<4xf32>
    %36 = vector.multi_reduction <add>, %35, %cst_15 [0, 1] : vector<16x16x4xf32> to vector<4xf32>
    %37 = vector.shape_cast %36 : vector<4xf32> to vector<1x1x4xf32>
    %cst_16 = arith.constant 3.906250e-03 : f32
    %38 = vector.broadcast %cst_16 : f32 to vector<1x1x4xf32>
    %39 = arith.mulf %34, %38 : vector<1x1x4xf32>
    %cst_17 = arith.constant 3.906250e-03 : f32
    %40 = vector.broadcast %cst_17 : f32 to vector<1x1x4xf32>
    %41 = arith.mulf %37, %40 : vector<1x1x4xf32>
    %42 = arith.mulf %39, %39 : vector<1x1x4xf32>
    %43 = arith.subf %41, %42 : vector<1x1x4xf32>
    %44 = vector.shape_cast %30 : vector<4xf32> to vector<1x1x4xf32>
    %cst_18 = arith.constant 9.99999974E-6 : f32
    %45 = vector.broadcast %cst_18 : f32 to vector<1x1x4xf32>
    %46 = arith.addf %43, %45 : vector<1x1x4xf32>
    %47 = math.rsqrt %46 : vector<1x1x4xf32>
    %48 = arith.mulf %44, %47 : vector<1x1x4xf32>
    %49 = vector.shape_cast %32 : vector<4xf32> to vector<1x1x4xf32>
    %50 = arith.mulf %39, %48 : vector<1x1x4xf32>
    %51 = arith.subf %49, %50 : vector<1x1x4xf32>
    %52 = vector.broadcast %48 : vector<1x1x4xf32> to vector<16x16x4xf32>
    %53 = arith.mulf %28, %52 : vector<16x16x4xf32>
    %54 = vector.broadcast %51 : vector<1x1x4xf32> to vector<16x16x4xf32>
    %55 = arith.addf %53, %54 : vector<16x16x4xf32>
    %56 = vector.extract_strided_slice %55 {offsets = [0, 1, 0], sizes = [16, 1, 4], strides = [1, 1, 1]} : vector<16x16x4xf32> to vector<16x1x4xf32>
    %57 = vector.extract_strided_slice %55 {offsets = [0, 14, 0], sizes = [16, 1, 4], strides = [1, 1, 1]} : vector<16x16x4xf32> to vector<16x1x4xf32>
    %58 = tpu.concatenate %56, %55, %57 in 1 : vector<16x1x4xf32>, vector<16x16x4xf32>, vector<16x1x4xf32> -> vector<16x18x4xf32>
    %59 = vector.extract_strided_slice %58 {offsets = [1, 0, 0], sizes = [1, 18, 4], strides = [1, 1, 1]} : vector<16x18x4xf32> to vector<1x18x4xf32>
    %60 = vector.extract_strided_slice %58 {offsets = [14, 0, 0], sizes = [1, 18, 4], strides = [1, 1, 1]} : vector<16x18x4xf32> to vector<1x18x4xf32>
    %61 = tpu.concatenate %59, %58, %60 in 0 : vector<1x18x4xf32>, vector<16x18x4xf32>, vector<1x18x4xf32> -> vector<18x18x4xf32>
    %c0_19 = arith.constant 0 : index
    %c0_20 = arith.constant 0 : index
    %62 = vector.load %arg6[%c0_19, %c0_20] : memref<36x4xf32, #tpu.memory_space<vmem>>, vector<36x4xf32>
    %63 = vector.extract_strided_slice %61 {offsets = [0, 0, 0], sizes = [16, 16, 4], strides = [1, 1, 1]} : vector<18x18x4xf32> to vector<16x16x4xf32>
    %64 = vector.extract_strided_slice %61 {offsets = [0, 1, 0], sizes = [16, 16, 4], strides = [1, 1, 1]} : vector<18x18x4xf32> to vector<16x16x4xf32>
    %65 = vector.extract_strided_slice %61 {offsets = [0, 2, 0], sizes = [16, 16, 4], strides = [1, 1, 1]} : vector<18x18x4xf32> to vector<16x16x4xf32>
    %66 = vector.extract_strided_slice %61 {offsets = [1, 0, 0], sizes = [16, 16, 4], strides = [1, 1, 1]} : vector<18x18x4xf32> to vector<16x16x4xf32>
    %67 = vector.extract_strided_slice %61 {offsets = [1, 1, 0], sizes = [16, 16, 4], strides = [1, 1, 1]} : vector<18x18x4xf32> to vector<16x16x4xf32>
    %68 = vector.extract_strided_slice %61 {offsets = [1, 2, 0], sizes = [16, 16, 4], strides = [1, 1, 1]} : vector<18x18x4xf32> to vector<16x16x4xf32>
    %69 = vector.extract_strided_slice %61 {offsets = [2, 0, 0], sizes = [16, 16, 4], strides = [1, 1, 1]} : vector<18x18x4xf32> to vector<16x16x4xf32>
    %70 = vector.extract_strided_slice %61 {offsets = [2, 1, 0], sizes = [16, 16, 4], strides = [1, 1, 1]} : vector<18x18x4xf32> to vector<16x16x4xf32>
    %71 = vector.extract_strided_slice %61 {offsets = [2, 2, 0], sizes = [16, 16, 4], strides = [1, 1, 1]} : vector<18x18x4xf32> to vector<16x16x4xf32>
    %72 = tpu.concatenate %63, %64, %65, %66, %67, %68, %69, %70, %71 in 2 : vector<16x16x4xf32>, vector<16x16x4xf32>, vector<16x16x4xf32>, vector<16x16x4xf32>, vector<16x16x4xf32>, vector<16x16x4xf32>, vector<16x16x4xf32>, vector<16x16x4xf32>, vector<16x16x4xf32> -> vector<16x16x36xf32>
    %73 = vector.shape_cast %72 : vector<16x16x36xf32> to vector<256x36xf32>
    %cst_21 = arith.constant dense<0.000000e+00> : vector<256x4xf32>
    %74 = tpu.matmul %73, %62, %cst_21 {dimension_numbers = #tpu.dot_dimension_numbers<[1], [0], [0], [1], [0, 0, 1, 1], [], []>} : vector<256x36xf32>, vector<36x4xf32>, vector<256x4xf32> -> vector<256x4xf32>
    %75 = vector.shape_cast %74 : vector<256x4xf32> to vector<16x16x4xf32>
    %c0_22 = arith.constant 0 : index
    %c0_23 = arith.constant 0 : index
    %c0_24 = arith.constant 0 : index
    %76 = vector.load %arg7[%c0_22, %c0_23, %c0_24] : memref<1x1x4xf32, #tpu.memory_space<vmem>>, vector<1x1x4xf32>
    %77 = vector.shape_cast %76 : vector<1x1x4xf32> to vector<4xf32>
    %c0_25 = arith.constant 0 : index
    %c0_26 = arith.constant 0 : index
    %c0_27 = arith.constant 0 : index
    %78 = vector.load %arg8[%c0_25, %c0_26, %c0_27] : memref<1x1x4xf32, #tpu.memory_space<vmem>>, vector<1x1x4xf32>
    %79 = vector.shape_cast %78 : vector<1x1x4xf32> to vector<4xf32>
    %cst_28 = arith.constant dense<0.000000e+00> : vector<4xf32>
    %80 = vector.multi_reduction <add>, %75, %cst_28 [0, 1] : vector<16x16x4xf32> to vector<4xf32>
    %81 = vector.shape_cast %80 : vector<4xf32> to vector<1x1x4xf32>
    %82 = arith.mulf %75, %75 : vector<16x16x4xf32>
    %cst_29 = arith.constant dense<0.000000e+00> : vector<4xf32>
    %83 = vector.multi_reduction <add>, %82, %cst_29 [0, 1] : vector<16x16x4xf32> to vector<4xf32>
    %84 = vector.shape_cast %83 : vector<4xf32> to vector<1x1x4xf32>
    %cst_30 = arith.constant 3.906250e-03 : f32
    %85 = vector.broadcast %cst_30 : f32 to vector<1x1x4xf32>
    %86 = arith.mulf %81, %85 : vector<1x1x4xf32>
    %cst_31 = arith.constant 3.906250e-03 : f32
    %87 = vector.broadcast %cst_31 : f32 to vector<1x1x4xf32>
    %88 = arith.mulf %84, %87 : vector<1x1x4xf32>
    %89 = arith.mulf %86, %86 : vector<1x1x4xf32>
    %90 = arith.subf %88, %89 : vector<1x1x4xf32>
    %91 = vector.shape_cast %77 : vector<4xf32> to vector<1x1x4xf32>
    %cst_32 = arith.constant 9.99999974E-6 : f32
    %92 = vector.broadcast %cst_32 : f32 to vector<1x1x4xf32>
    %93 = arith.addf %90, %92 : vector<1x1x4xf32>
    %94 = math.rsqrt %93 : vector<1x1x4xf32>
    %95 = arith.mulf %91, %94 : vector<1x1x4xf32>
    %96 = vector.shape_cast %79 : vector<4xf32> to vector<1x1x4xf32>
    %97 = arith.mulf %86, %95 : vector<1x1x4xf32>
    %98 = arith.subf %96, %97 : vector<1x1x4xf32>
    %99 = vector.broadcast %95 : vector<1x1x4xf32> to vector<16x16x4xf32>
    %100 = arith.mulf %75, %99 : vector<16x16x4xf32>
    %101 = vector.broadcast %98 : vector<1x1x4xf32> to vector<16x16x4xf32>
    %102 = arith.addf %100, %101 : vector<16x16x4xf32>
    %103 = arith.addf %102, %1 : vector<16x16x4xf32>
    %c0_33 = arith.constant 0 : index
    %c0_34 = arith.constant 0 : index
    %c0_35 = arith.constant 0 : index
    %c0_36 = arith.constant 0 : index
    %104 = vector.load %arg9[%c0_33, %c0_34, %c0_35, %c0_36] : memref<1x16x16x4xf32, #tpu.memory_space<vmem>>, vector<1x16x16x4xf32>
    %105 = vector.shape_cast %104 : vector<1x16x16x4xf32> to vector<16x16x4xf32>
    %106 = vector.shape_cast %103 : vector<16x16x4xf32> to vector<1x16x16x4xf32>
    tpu.vector_store %arg9[%c0_33, %c0_34, %c0_35, %c0_36], %106 {strides = array<i32>} : memref<1x16x16x4xf32, #tpu.memory_space<vmem>>, vector<1x16x16x4xf32>,
    return
  }
  func.func @transform_0(%arg0: i32) -> (i32, i32, i32, i32) {
    %c0_i32 = arith.constant 0 : i32
    %c0_i32_0 = arith.constant 0 : i32
    %c0_i32_1 = arith.constant 0 : i32
    %c0_i32_2 = arith.constant 0 : i32
    return %arg0, %c0_i32, %c0_i32_0, %c0_i32_1 : i32, i32, i32, i32
  }
  func.func @transform_1(%arg0: i32) -> (i32, i32) {
    %c0_i32 = arith.constant 0 : i32
    %c0_i32_0 = arith.constant 0 : i32
    %c0_i32_1 = arith.constant 0 : i32
    return %c0_i32, %c0_i32_0 : i32, i32
  }
  func.func @transform_2(%arg0: i32) -> (i32, i32) {
    %c0_i32 = arith.constant 0 : i32
    %c0_i32_0 = arith.constant 0 : i32
    %c0_i32_1 = arith.constant 0 : i32
    return %c0_i32, %c0_i32_0 : i32, i32
  }
  func.func @transform_3(%arg0: i32) -> (i32, i32, i32) {
    %c0_i32 = arith.constant 0 : i32
    %c0_i32_0 = arith.constant 0 : i32
    %c0_i32_1 = arith.constant 0 : i32
    return %arg0, %c0_i32, %c0_i32_0 : i32, i32, i32
  }
  func.func @transform_4(%arg0: i32) -> (i32, i32, i32) {
    %c0_i32 = arith.constant 0 : i32
    %c0_i32_0 = arith.constant 0 : i32
    %c0_i32_1 = arith.constant 0 : i32
    return %arg0, %c0_i32, %c0_i32_0 : i32, i32, i32
  }
  func.func @transform_5(%arg0: i32) -> (i32, i32) {
    %c0_i32 = arith.constant 0 : i32
    %c0_i32_0 = arith.constant 0 : i32
    %c0_i32_1 = arith.constant 0 : i32
    return %c0_i32, %c0_i32_0 : i32, i32
  }
  func.func @transform_6(%arg0: i32) -> (i32, i32, i32) {
    %c0_i32 = arith.constant 0 : i32
    %c0_i32_0 = arith.constant 0 : i32
    %c0_i32_1 = arith.constant 0 : i32
    return %arg0, %c0_i32, %c0_i32_0 : i32, i32, i32
  }
  func.func @transform_7(%arg0: i32) -> (i32, i32, i32) {
    %c0_i32 = arith.constant 0 : i32
    %c0_i32_0 = arith.constant 0 : i32
    %c0_i32_1 = arith.constant 0 : i32
    return %arg0, %c0_i32, %c0_i32_0 : i32, i32, i32
  }
  func.func @transform_8(%arg0: i32) -> (i32, i32, i32, i32) {
    %c0_i32 = arith.constant 0 : i32
    %c0_i32_0 = arith.constant 0 : i32
    %c0_i32_1 = arith.constant 0 : i32
    %c0_i32_2 = arith.constant 0 : i32
    return %arg0, %c0_i32, %c0_i32_0, %c0_i32_1 : i32, i32, i32, i32
  }
}

</mosaic_0001>

<llo_original>
// kernel: tpu_custom_call.1
$region0: #{tpu_custom_call.1}
  #allocation0 [shape = 'u32[]', space=smem, size = 0x4, offset = 0x4, fixed_abs, tag = 'smem constant byte address 0x4 - core index']
  #allocation1 [shape = 'u32[144,128]{1,0:T(1,128)}', space=vmem, size = 0x12000, scoped, tag = 'internal scratch']
  %s0 = inlined_call_operand.vmem [shape: f32[2,16,16,4], index: 0, kind: input, shape index: {}]
  %s1 = inlined_call_operand.vmem [shape: f32[36,4], index: 1, kind: input, shape index: {}]
  %s2 = inlined_call_operand.vmem [shape: f32[1,4], index: 2, kind: input, shape index: {}]
  %s3 = inlined_call_operand.vmem [shape: f32[2,1,4], index: 3, kind: input, shape index: {}]
  %s4 = inlined_call_operand.vmem [shape: f32[2,1,4], index: 4, kind: input, shape index: {}]
  %s5 = inlined_call_operand.vmem [shape: f32[36,4], index: 5, kind: input, shape index: {}]
  %s6 = inlined_call_operand.vmem [shape: f32[2,1,4], index: 6, kind: input, shape index: {}]
  %s7 = inlined_call_operand.vmem [shape: f32[2,1,4], index: 7, kind: input, shape index: {}]
  %s8 = inlined_call_operand.vmem [shape: f32[2,16,16,4], index: 8, kind: output, shape index: {}]
  %s9 = sld [smem:[#allocation0]]
  $region65: #{tpu_custom_call.1} parent=0
    _
  %s11 = ssub.s32 1, %s9
  %s12 = scalar_select 0, %s11, %s9
  loop: start=0, step=1, limit=4
  $region2: #{tpu_custom_call.1} parent=0 // loop_pre_header
    _
  $region3: #{tpu_custom_call.1} parent=0 // loop_header
    %s14 = sphi 0, %s18
    %p15 = scmp.ge.s32.totalorder %s14, 4
    %s24 = sphi 0, %s26
    %s27 = sphi 0, %s24
    %s28 = sphi 0, %s27
    %s44 = sphi 0, %s28
    %s48 = sphi 0, %s48
    %s50 = sphi 0, %s48
    %s51 = sphi 0, %s50
    %s65 = sphi 0, %s51
    %s69 = sphi 0, %s69
    %s71 = sphi 0, %s69
    %s72 = sphi 0, %s71
    %s86 = sphi 0, %s72
    %s92 = sphi 0, %s94
    %s95 = sphi 0, %s92
    %s96 = sphi 0, %s95
    %s112 = sphi 0, %s96
    %s118 = sphi 0, %s120
    %s121 = sphi 0, %s118
    %s122 = sphi 0, %s121
    %s138 = sphi 0, %s122
    %s142 = sphi 0, %s142
    %s144 = sphi 0, %s142
    %s145 = sphi 0, %s144
    %s159 = sphi 0, %s145
    %s165 = sphi 0, %s167
    %s168 = sphi 0, %s165
    %s169 = sphi 0, %s168
    %s185 = sphi 0, %s169
    %s191 = sphi 0, %s193
    %s194 = sphi 0, %s191
    %s195 = sphi 0, %s194
    %s211 = sphi 0, %s195
    %s217 = sphi 0, %s219
    %s220 = sphi 0, %s217
    %s221 = sphi 0, %s220
    %s237 = sphi 0, %s221
  $region4: #{tpu_custom_call.1} parent=0 // loop_header_branch
    %17 = sbr.rel (%p15) target = $region8
  $region5: #{tpu_custom_call.1} parent=0 // loop_body
    %s19 = ssub.s32 %s14, 1
    %s20 = ssub.s32 %s14, 2
    %s21 = sadd.s32 %s14, 1
    %s22 = ssub.s32 %s14, %s21
    %p23 = scmp.eq.s32.totalorder %s22, 0
    %s25 = sadd.s32 %s24, 1
    %s26 = scalar_select %p23, %s24, %s25
    %p29 = pneg %p23
    %p30 = scmp.eq.s32.totalorder %s14, 1
    %p31 = por %p29, %p30
    %p32 = scmp.ne.s32.totalorder %s24, %s27
    %p33 = scmp.eq.s32.totalorder %s14, 0
    %p34 = por %p32, %p33
    %p35 = scmp.ne.s32.totalorder %s24, %s27
    %p36 = scmp.eq.s32.totalorder %s19, 1
    %p37 = por %p35, %p36
    %p38 = scmp.ne.s32.totalorder %s27, %s28
    %p39 = scmp.eq.s32.totalorder %s19, 0
    %p40 = por %p38, %p39
    %p41 = scmp.ne.s32.totalorder %s27, %s28
    %p42 = scmp.eq.s32.totalorder %s20, 1
    %p43 = por %p41, %p42
    %p45 = scmp.ne.s32.totalorder %s28, %s44
    %p46 = scmp.eq.s32.totalorder %s20, 0
    %p47 = por %p45, %p46
    %s49 = sadd.s32 %s48, 1
    %p52 = scmp.eq.s32.totalorder %s14, 1
    %p53 = scmp.ne.s32.totalorder %s48, %s50
    %p54 = scmp.eq.s32.totalorder %s14, 0
    %p55 = por %p53, %p54
    %p56 = scmp.ne.s32.totalorder %s48, %s50
    %p57 = scmp.eq.s32.totalorder %s19, 1
    %p58 = por %p56, %p57
    %p59 = scmp.ne.s32.totalorder %s50, %s51
    %p60 = scmp.eq.s32.totalorder %s19, 0
    %p61 = por %p59, %p60
    %p62 = scmp.ne.s32.totalorder %s50, %s51
    %p63 = scmp.eq.s32.totalorder %s20, 1
    %p64 = por %p62, %p63
    %p66 = scmp.ne.s32.totalorder %s51, %s65
    %p67 = scmp.eq.s32.totalorder %s20, 0
    %p68 = por %p66, %p67
    %s70 = sadd.s32 %s69, 1
    %p73 = scmp.eq.s32.totalorder %s14, 1
    %p74 = scmp.ne.s32.totalorder %s69, %s71
    %p75 = scmp.eq.s32.totalorder %s14, 0
    %p76 = por %p74, %p75
    %p77 = scmp.ne.s32.totalorder %s69, %s71
    %p78 = scmp.eq.s32.totalorder %s19, 1
    %p79 = por %p77, %p78
    %p80 = scmp.ne.s32.totalorder %s71, %s72
    %p81 = scmp.eq.s32.totalorder %s19, 0
    %p82 = por %p80, %p81
    %p83 = scmp.ne.s32.totalorder %s71, %s72
    %p84 = scmp.eq.s32.totalorder %s20, 1
    %p85 = por %p83, %p84
    %p87 = scmp.ne.s32.totalorder %s72, %s86
    %p88 = scmp.eq.s32.totalorder %s20, 0
    %p89 = por %p87, %p88
    %s90 = ssub.s32 %s14, %s21
    %p91 = scmp.eq.s32.totalorder %s90, 0
    %s93 = sadd.s32 %s92, 1
    %s94 = scalar_select %p91, %s92, %s93
    %p97 = pneg %p91
    %p98 = scmp.eq.s32.totalorder %s14, 1
    %p99 = por %p97, %p98
    %p100 = scmp.ne.s32.totalorder %s92, %s95
    %p101 = scmp.eq.s32.totalorder %s14, 0
    %p102 = por %p100, %p101
    %p103 = scmp.ne.s32.totalorder %s92, %s95
    %p104 = scmp.eq.s32.totalorder %s19, 1
    %p105 = por %p103, %p104
    %p106 = scmp.ne.s32.totalorder %s95, %s96
    %p107 = scmp.eq.s32.totalorder %s19, 0
    %p108 = por %p106, %p107
    %p109 = scmp.ne.s32.totalorder %s95, %s96
    %p110 = scmp.eq.s32.totalorder %s20, 1
    %p111 = por %p109, %p110
    %p113 = scmp.ne.s32.totalorder %s96, %s112
    %p114 = scmp.eq.s32.totalorder %s20, 0
    %p115 = por %p113, %p114
    %s116 = ssub.s32 %s14, %s21
    %p117 = scmp.eq.s32.totalorder %s116, 0
    %s119 = sadd.s32 %s118, 1
    %s120 = scalar_select %p117, %s118, %s119
    %p123 = pneg %p117
    %p124 = scmp.eq.s32.totalorder %s14, 1
    %p125 = por %p123, %p124
    %p126 = scmp.ne.s32.totalorder %s118, %s121
    %p127 = scmp.eq.s32.totalorder %s14, 0
    %p128 = por %p126, %p127
    %p129 = scmp.ne.s32.totalorder %s118, %s121
    %p130 = scmp.eq.s32.totalorder %s19, 1
    %p131 = por %p129, %p130
    %p132 = scmp.ne.s32.totalorder %s121, %s122
    %p133 = scmp.eq.s32.totalorder %s19, 0
    %p134 = por %p132, %p133
    %p135 = scmp.ne.s32.totalorder %s121, %s122
    %p136 = scmp.eq.s32.totalorder %s20, 1
    %p137 = por %p135, %p136
    %p139 = scmp.ne.s32.totalorder %s122, %s138
    %p140 = scmp.eq.s32.totalorder %s20, 0
    %p141 = por %p139, %p140
    %s143 = sadd.s32 %s142, 1
    %p146 = scmp.eq.s32.totalorder %s14, 1
    %p147 = scmp.ne.s32.totalorder %s142, %s144
    %p148 = scmp.eq.s32.totalorder %s14, 0
    %p149 = por %p147, %p148
    %p150 = scmp.ne.s32.totalorder %s142, %s144
    %p151 = scmp.eq.s32.totalorder %s19, 1
    %p152 = por %p150, %p151
    %p153 = scmp.ne.s32.totalorder %s144, %s145
    %p154 = scmp.eq.s32.totalorder %s19, 0
    %p155 = por %p153, %p154
    %p156 = scmp.ne.s32.totalorder %s144, %s145
    %p157 = scmp.eq.s32.totalorder %s20, 1
    %p158 = por %p156, %p157
    %p160 = scmp.ne.s32.totalorder %s145, %s159
    %p161 = scmp.eq.s32.totalorder %s20, 0
    %p162 = por %p160, %p161
    %s163 = ssub.s32 %s14, %s21
    %p164 = scmp.eq.s32.totalorder %s163, 0
    %s166 = sadd.s32 %s165, 1
    %s167 = scalar_select %p164, %s165, %s166
    %p170 = pneg %p164
    %p171 = scmp.eq.s32.totalorder %s14, 1
    %p172 = por %p170, %p171
    %p173 = scmp.ne.s32.totalorder %s165, %s168
    %p174 = scmp.eq.s32.totalorder %s14, 0
    %p175 = por %p173, %p174
    %p176 = scmp.ne.s32.totalorder %s165, %s168
    %p177 = scmp.eq.s32.totalorder %s19, 1
    %p178 = por %p176, %p177
    %p179 = scmp.ne.s32.totalorder %s168, %s169
    %p180 = scmp.eq.s32.totalorder %s19, 0
    %p181 = por %p179, %p180
    %p182 = scmp.ne.s32.totalorder %s168, %s169
    %p183 = scmp.eq.s32.totalorder %s20, 1
    %p184 = por %p182, %p183
    %p186 = scmp.ne.s32.totalorder %s169, %s185
    %p187 = scmp.eq.s32.totalorder %s20, 0
    %p188 = por %p186, %p187
    %s189 = ssub.s32 %s14, %s21
    %p190 = scmp.eq.s32.totalorder %s189, 0
    %s192 = sadd.s32 %s191, 1
    %s193 = scalar_select %p190, %s191, %s192
    %p196 = pneg %p190
    %p197 = scmp.eq.s32.totalorder %s14, 1
    %p198 = por %p196, %p197
    %p199 = scmp.ne.s32.totalorder %s191, %s194
    %p200 = scmp.eq.s32.totalorder %s14, 0
    %p201 = por %p199, %p200
    %p202 = scmp.ne.s32.totalorder %s191, %s194
    %p203 = scmp.eq.s32.totalorder %s19, 1
    %p204 = por %p202, %p203
    %p205 = scmp.ne.s32.totalorder %s194, %s195
    %p206 = scmp.eq.s32.totalorder %s19, 0
    %p207 = por %p205, %p206
    %p208 = scmp.ne.s32.totalorder %s194, %s195
    %p209 = scmp.eq.s32.totalorder %s20, 1
    %p210 = por %p208, %p209
    %p212 = scmp.ne.s32.totalorder %s195, %s211
    %p213 = scmp.eq.s32.totalorder %s20, 0
    %p214 = por %p212, %p213
    %s215 = ssub.s32 %s14, %s21
    %p216 = scmp.eq.s32.totalorder %s215, 0
    %s218 = sadd.s32 %s217, 1
    %s219 = scalar_select %p216, %s217, %s218
    %p222 = pneg %p216
    %p223 = scmp.eq.s32.totalorder %s14, 1
    %p224 = por %p222, %p223
    %p225 = scmp.ne.s32.totalorder %s217, %s220
    %p226 = scmp.eq.s32.totalorder %s14, 0
    %p227 = por %p225, %p226
    %p228 = scmp.ne.s32.totalorder %s217, %s220
    %p229 = scmp.eq.s32.totalorder %s19, 1
    %p230 = por %p228, %p229
    %p231 = scmp.ne.s32.totalorder %s220, %s221
    %p232 = scmp.eq.s32.totalorder %s19, 0
    %p233 = por %p231, %p232
    %p234 = scmp.ne.s32.totalorder %s220, %s221
    %p235 = scmp.eq.s32.totalorder %s20, 1
    %p236 = por %p234, %p235
    %p238 = scmp.ne.s32.totalorder %s221, %s237
    %p239 = scmp.eq.s32.totalorder %s20, 0
    %p240 = por %p238, %p239
    %p241 = scmp.le.s32.totalorder 1, %s14
    %p242 = scmp.lt.s32.totalorder %s14, 3
    %p243 = pnand %p241, %p242
    %p244 = pneg %p243
    // Predicated region
    $region9: #{tpu_custom_call.1} parent=5 // pred_check
      _
    $region10: #{tpu_custom_call.1} parent=5 // pred_check_branch
      %246 = sbr.rel (%p243) target = $region12
    $region11: #{tpu_custom_call.1} parent=5 // pred_region
      %s247 = ssub.s32 %s14, 1
      // Predicated region
      $region13: #{tpu_custom_call.1} parent=11 // pred_check
        %p248 = pneg %p61
      $region14: #{tpu_custom_call.1} parent=11 // pred_check_branch
        %250 = sbr.rel (%p248) target = $region16
      $region15: #{tpu_custom_call.1} parent=11 // pred_region
        _
      $region16: #{tpu_custom_call.1} parent=11 // pred_fallthru
        _
      // Predicated region
      $region17: #{tpu_custom_call.1} parent=11 // pred_check
        %p251 = pneg %p82
      $region18: #{tpu_custom_call.1} parent=11 // pred_check_branch
        %253 = sbr.rel (%p251) target = $region20
      $region19: #{tpu_custom_call.1} parent=11 // pred_region
        _
      $region20: #{tpu_custom_call.1} parent=11 // pred_fallthru
        _
      // Predicated region
      $region21: #{tpu_custom_call.1} parent=11 // pred_check
        %p254 = pneg %p155
      $region22: #{tpu_custom_call.1} parent=11 // pred_check_branch
        %256 = sbr.rel (%p254) target = $region24
      $region23: #{tpu_custom_call.1} parent=11 // pred_region
        _
      $region24: #{tpu_custom_call.1} parent=11 // pred_fallthru
        _
    $region12: #{tpu_custom_call.1} parent=5 // pred_fallthru
      _
    %p257 = scmp.lt.s32.totalorder %s14, 2
    // Predicated region
    $region25: #{tpu_custom_call.1} parent=5 // pred_check
      %p258 = pneg %p257
    $region26: #{tpu_custom_call.1} parent=5 // pred_check_branch
      %260 = sbr.rel (%p258) target = $region28
    $region27: #{tpu_custom_call.1} parent=5 // pred_region
      // Predicated region
      $region29: #{tpu_custom_call.1} parent=27 // pred_check
        %p261 = pneg %p34
      $region30: #{tpu_custom_call.1} parent=27 // pred_check_branch
        %263 = sbr.rel (%p261) target = $region32
      $region31: #{tpu_custom_call.1} parent=27 // pred_region
        %p264 = scmp.lt.s32.totalorder %s14, 1
        %s265 = scalar_select %p264, %s14, 1
        %s266 = smul.addr %s265, 32
        %s267 = smul.addr %s266, 8
        %s268 = scalar_lea.vmem %s0, %s267
      $region32: #{tpu_custom_call.1} parent=27 // pred_fallthru
        _
      // Predicated region
      $region33: #{tpu_custom_call.1} parent=27 // pred_check
        %p269 = pneg %p102
      $region34: #{tpu_custom_call.1} parent=27 // pred_check_branch
        %271 = sbr.rel (%p269) target = $region36
      $region35: #{tpu_custom_call.1} parent=27 // pred_region
        %p272 = scmp.lt.s32.totalorder %s14, 1
        %s273 = scalar_select %p272, %s14, 1
        %s274 = scalar_lea.vmem %s3, %s273
      $region36: #{tpu_custom_call.1} parent=27 // pred_fallthru
        _
      // Predicated region
      $region37: #{tpu_custom_call.1} parent=27 // pred_check
        %p275 = pneg %p128
      $region38: #{tpu_custom_call.1} parent=27 // pred_check_branch
        %277 = sbr.rel (%p275) target = $region40
      $region39: #{tpu_custom_call.1} parent=27 // pred_region
        %p278 = scmp.lt.s32.totalorder %s14, 1
        %s279 = scalar_select %p278, %s14, 1
        %s280 = scalar_lea.vmem %s4, %s279
      $region40: #{tpu_custom_call.1} parent=27 // pred_fallthru
        _
      // Predicated region
      $region41: #{tpu_custom_call.1} parent=27 // pred_check
        %p281 = pneg %p175
      $region42: #{tpu_custom_call.1} parent=27 // pred_check_branch
        %283 = sbr.rel (%p281) target = $region44
      $region43: #{tpu_custom_call.1} parent=27 // pred_region
        %p284 = scmp.lt.s32.totalorder %s14, 1
        %s285 = scalar_select %p284, %s14, 1
        %s286 = scalar_lea.vmem %s6, %s285
      $region44: #{tpu_custom_call.1} parent=27 // pred_fallthru
        _
      // Predicated region
      $region45: #{tpu_custom_call.1} parent=27 // pred_check
        %p287 = pneg %p201
      $region46: #{tpu_custom_call.1} parent=27 // pred_check_branch
        %289 = sbr.rel (%p287) target = $region48
      $region47: #{tpu_custom_call.1} parent=27 // pred_region
        %p290 = scmp.lt.s32.totalorder %s14, 1
        %s291 = scalar_select %p290, %s14, 1
        %s292 = scalar_lea.vmem %s7, %s291
      $region48: #{tpu_custom_call.1} parent=27 // pred_fallthru
        _
    $region28: #{tpu_custom_call.1} parent=5 // pred_fallthru
      _
    %p293 = scmp.le.s32.totalorder 1, %s14
    %p294 = scmp.lt.s32.totalorder %s14, 3
    %p295 = pnand %p293, %p294
    %p296 = pneg %p295
    // Predicated region
    $region49: #{tpu_custom_call.1} parent=5 // pred_check
      _
    $region50: #{tpu_custom_call.1} parent=5 // pred_check_branch
      %298 = sbr.rel (%p295) target = $region52
    $region51: #{tpu_custom_call.1} parent=5 // pred_region
      %s299 = ssub.s32 %s14, 1
      %p300 = scmp.lt.s32.totalorder %s19, 1
      %s301 = scalar_select %p300, %s19, 1
      %s302 = smul.addr %s301, 32
      %s303 = smul.addr %s302, 8
      %s304 = scalar_lea.vmem %s0, %s303
      %p305 = pneg %p40
      %p306 = pneg %p37
      %p307 = pneg %p61
      %p308 = pneg %p58
      %p309 = pneg %p82
      %p310 = pneg %p79
      %p311 = scmp.lt.s32.totalorder %s19, 1
      %s312 = scalar_select %p311, %s19, 1
      %s313 = scalar_lea.vmem %s3, %s312
      %p314 = pneg %p108
      %p315 = pneg %p105
      %p316 = scmp.lt.s32.totalorder %s19, 1
      %s317 = scalar_select %p316, %s19, 1
      %s318 = scalar_lea.vmem %s4, %s317
      %p319 = pneg %p134
      %p320 = pneg %p131
      %p321 = pneg %p155
      %p322 = pneg %p152
      %p323 = scmp.lt.s32.totalorder %s19, 1
      %s324 = scalar_select %p323, %s19, 1
      %s325 = scalar_lea.vmem %s6, %s324
      %p326 = pneg %p181
      %p327 = pneg %p178
      %p328 = scmp.lt.s32.totalorder %s19, 1
      %s329 = scalar_select %p328, %s19, 1
      %s330 = scalar_lea.vmem %s7, %s329
      %p331 = pneg %p207
      %p332 = pneg %p204
      %p333 = pneg %p233
      %p334 = pneg %p230
      %p335 = scmp.lt.s32.totalorder %s19, 1
      %s336 = scalar_select %p335, %s19, 1
      %s337 = smul.addr %s336, 32
      %s338 = smul.addr %s337, 8
      %s339 = scalar_lea.vmem %s8, %s338
      %p340 = scmp.lt.s32.totalorder %s19, 1
      %s341 = scalar_select %p340, %s19, 1
      %s342 = smul.addr %s341, 32
      %s343 = smul.addr %s342, 8
      %s344 = scalar_lea.vmem %s0, %s343
      %p345 = scmp.lt.s32.totalorder %s19, 1
      %s346 = scalar_select %p345, %s19, 1
      %s347 = scalar_lea.vmem %s3, %s346
      %p348 = scmp.lt.s32.totalorder %s19, 1
      %s349 = scalar_select %p348, %s19, 1
      %s350 = scalar_lea.vmem %s4, %s349
      %p351 = scmp.lt.s32.totalorder %s19, 1
      %s352 = scalar_select %p351, %s19, 1
      %s353 = scalar_lea.vmem %s6, %s352
      %p354 = scmp.lt.s32.totalorder %s19, 1
      %s355 = scalar_select %p354, %s19, 1
      %s356 = scalar_lea.vmem %s7, %s355
      %p357 = scmp.lt.s32.totalorder %s19, 1
      %s358 = scalar_select %p357, %s19, 1
      %s359 = smul.addr %s358, 32
      %s360 = smul.addr %s359, 8
      %s361 = scalar_lea.vmem %s8, %s360
      %v362 = vld [vmem:[%s344] sm:$0xff]
      %v363 = vld [vmem:[%s344 + $0x8] sm:$0xff]
      %v364 = vld [vmem:[%s344 + $0x10] sm:$0xff]
      %v365 = vld [vmem:[%s344 + $0x18] sm:$0xff]
      %v366 = vld [vmem:[%s344 + $0x20] sm:$0xff]
      %v367 = vld [vmem:[%s344 + $0x28] sm:$0xff]
      %v368 = vld [vmem:[%s344 + $0x30] sm:$0xff]
      %v369 = vld [vmem:[%s344 + $0x38] sm:$0xff]
      %v370 = vld [vmem:[%s344 + $0x40] sm:$0xff]
      %v371 = vld [vmem:[%s344 + $0x48] sm:$0xff]
      %v372 = vld [vmem:[%s344 + $0x50] sm:$0xff]
      %v373 = vld [vmem:[%s344 + $0x58] sm:$0xff]
      %v374 = vld [vmem:[%s344 + $0x60] sm:$0xff]
      %v375 = vld [vmem:[%s344 + $0x68] sm:$0xff]
      %v376 = vld [vmem:[%s344 + $0x70] sm:$0xff]
      %v377 = vld [vmem:[%s344 + $0x78] sm:$0xff]
      %v378 = vld [vmem:[%s344 + $0x80] sm:$0xff]
      %v379 = vld [vmem:[%s344 + $0x88] sm:$0xff]
      %v380 = vld [vmem:[%s344 + $0x90] sm:$0xff]
      %v381 = vld [vmem:[%s344 + $0x98] sm:$0xff]
      %v382 = vld [vmem:[%s344 + $0xa0] sm:$0xff]
      %v383 = vld [vmem:[%s344 + $0xa8] sm:$0xff]
      %v384 = vld [vmem:[%s344 + $0xb0] sm:$0xff]
      %v385 = vld [vmem:[%s344 + $0xb8] sm:$0xff]
      %v386 = vld [vmem:[%s344 + $0xc0] sm:$0xff]
      %v387 = vld [vmem:[%s344 + $0xc8] sm:$0xff]
      %v388 = vld [vmem:[%s344 + $0xd0] sm:$0xff]
      %v389 = vld [vmem:[%s344 + $0xd8] sm:$0xff]
      %v390 = vld [vmem:[%s344 + $0xe0] sm:$0xff]
      %v391 = vld [vmem:[%s344 + $0xe8] sm:$0xff]
      %v392 = vld [vmem:[%s344 + $0xf0] sm:$0xff]
      %v393 = vld [vmem:[%s344 + $0xf8] sm:$0xff]
      %v410 = vrot.slane %v362, 1
      %v411 = vrot.slane %v364, 1
      %v412 = vrot.slane %v366, 1
      %v413 = vrot.slane %v368, 1
      %v414 = vrot.slane %v370, 1
      %v415 = vrot.slane %v372, 1
      %v416 = vrot.slane %v374, 1
      %v417 = vrot.slane %v376, 1
      %v418 = vrot.slane %v378, 1
      %v419 = vrot.slane %v380, 1
      %v420 = vrot.slane %v382, 1
      %v421 = vrot.slane %v384, 1
      %v422 = vrot.slane %v386, 1
      %v423 = vrot.slane %v388, 1
      %v424 = vrot.slane %v390, 1
      %v425 = vrot.slane %v392, 1
      %vm458 = vcmask 1040384
      %v459 = vrot.slane %v362, 7
      %v460 = vrot.slane %v363, 7
      %v461 = vsel %vm458, %v459, %v460
      %v462 = vrot.slane %v364, 7
      %v463 = vrot.slane %v365, 7
      %v464 = vsel %vm458, %v462, %v463
      %v465 = vrot.slane %v366, 7
      %v466 = vrot.slane %v367, 7
      %v467 = vsel %vm458, %v465, %v466
      %v468 = vrot.slane %v368, 7
      %v469 = vrot.slane %v369, 7
      %v470 = vsel %vm458, %v468, %v469
      %v471 = vrot.slane %v370, 7
      %v472 = vrot.slane %v371, 7
      %v473 = vsel %vm458, %v471, %v472
      %v474 = vrot.slane %v372, 7
      %v475 = vrot.slane %v373, 7
      %v476 = vsel %vm458, %v474, %v475
      %v477 = vrot.slane %v374, 7
      %v478 = vrot.slane %v375, 7
      %v479 = vsel %vm458, %v477, %v478
      %v480 = vrot.slane %v376, 7
      %v481 = vrot.slane %v377, 7
      %v482 = vsel %vm458, %v480, %v481
      %v483 = vrot.slane %v378, 7
      %v484 = vrot.slane %v379, 7
      %v485 = vsel %vm458, %v483, %v484
      %v486 = vrot.slane %v380, 7
      %v487 = vrot.slane %v381, 7
      %v488 = vsel %vm458, %v486, %v487
      %v489 = vrot.slane %v382, 7
      %v490 = vrot.slane %v383, 7
      %v491 = vsel %vm458, %v489, %v490
      %v492 = vrot.slane %v384, 7
      %v493 = vrot.slane %v385, 7
      %v494 = vsel %vm458, %v492, %v493
      %v495 = vrot.slane %v386, 7
      %v496 = vrot.slane %v387, 7
      %v497 = vsel %vm458, %v495, %v496
      %v498 = vrot.slane %v388, 7
      %v499 = vrot.slane %v389, 7
      %v500 = vsel %vm458, %v498, %v499
      %v501 = vrot.slane %v390, 7
      %v502 = vrot.slane %v391, 7
      %v503 = vsel %vm458, %v501, %v502
      %v504 = vrot.slane %v392, 7
      %v505 = vrot.slane %v393, 7
      %v506 = vsel %vm458, %v504, %v505
      %v554 = vrot.slane %v363, 5
      %v555 = vrot.slane %v365, 5
      %v556 = vrot.slane %v367, 5
      %v557 = vrot.slane %v369, 5
      %v558 = vrot.slane %v371, 5
      %v559 = vrot.slane %v373, 5
      %v560 = vrot.slane %v375, 5
      %v561 = vrot.slane %v377, 5
      %v562 = vrot.slane %v379, 5
      %v563 = vrot.slane %v381, 5
      %v564 = vrot.slane %v383, 5
      %v565 = vrot.slane %v385, 5
      %v566 = vrot.slane %v387, 5
      %v567 = vrot.slane %v389, 5
      %v568 = vrot.slane %v391, 5
      %v569 = vrot.slane %v393, 5
      %v586 = vsel %vm458, %v410, %v459
      %v587 = vsel %vm458, %v411, %v462
      %v588 = vsel %vm458, %v412, %v465
      %v589 = vsel %vm458, %v413, %v468
      %v590 = vsel %vm458, %v414, %v471
      %v591 = vsel %vm458, %v415, %v474
      %v592 = vsel %vm458, %v416, %v477
      %v593 = vsel %vm458, %v417, %v480
      %v594 = vsel %vm458, %v418, %v483
      %v595 = vsel %vm458, %v419, %v486
      %v596 = vsel %vm458, %v420, %v489
      %v597 = vsel %vm458, %v421, %v492
      %v598 = vsel %vm458, %v422, %v495
      %v599 = vsel %vm458, %v423, %v498
      %v600 = vsel %vm458, %v424, %v501
      %v601 = vsel %vm458, %v425, %v504
      %v602 = vsel %vm458, %v460, %v554
      %v603 = vsel %vm458, %v463, %v555
      %v604 = vsel %vm458, %v466, %v556
      %v605 = vsel %vm458, %v469, %v557
      %v606 = vsel %vm458, %v472, %v558
      %v607 = vsel %vm458, %v475, %v559
      %v608 = vsel %vm458, %v478, %v560
      %v609 = vsel %vm458, %v481, %v561
      %v610 = vsel %vm458, %v484, %v562
      %v611 = vsel %vm458, %v487, %v563
      %v612 = vsel %vm458, %v490, %v564
      %v613 = vsel %vm458, %v493, %v565
      %v614 = vsel %vm458, %v496, %v566
      %v615 = vsel %vm458, %v499, %v567
      %v616 = vsel %vm458, %v502, %v568
      %v617 = vsel %vm458, %v505, %v569
      %v618 = vld [vmem:[%s1] sm:$0xff]
      %v619 = vld [vmem:[%s1 + $0x8] sm:$0xff]
      %v620 = vld [vmem:[%s1 + $0x10] sm:$0xff]
      %v621 = vld [vmem:[%s1 + $0x18] sm:$0xff]
      %v622 = vld [vmem:[%s1 + $0x20] sm:$0xf]
      %vm653 = vcmask 1046528
      %v654 = vrot.slane %v587, 1
      %v655 = vrot.slane %v464, 1
      %v656 = vsel %vm653, %v654, %v655
      %v657 = vrot.slane %v603, 1
      %v658 = vsel %vm653, %v655, %v657
      %v659 = vrot.slane %v586, 1
      %v660 = vrot.slane %v461, 1
      %v661 = vsel %vm653, %v659, %v660
      %v662 = vrot.slane %v602, 1
      %v663 = vsel %vm653, %v660, %v662
      %v664 = vrot.slane %v588, 1
      %v665 = vrot.slane %v467, 1
      %v666 = vsel %vm653, %v664, %v665
      %v667 = vrot.slane %v604, 1
      %v668 = vsel %vm653, %v665, %v667
      %v669 = vrot.slane %v589, 1
      %v670 = vrot.slane %v470, 1
      %v671 = vsel %vm653, %v669, %v670
      %v672 = vrot.slane %v605, 1
      %v673 = vsel %vm653, %v670, %v672
      %v674 = vrot.slane %v590, 1
      %v675 = vrot.slane %v473, 1
      %v676 = vsel %vm653, %v674, %v675
      %v677 = vrot.slane %v606, 1
      %v678 = vsel %vm653, %v675, %v677
      %v679 = vrot.slane %v591, 1
      %v680 = vrot.slane %v476, 1
      %v681 = vsel %vm653, %v679, %v680
      %v682 = vrot.slane %v607, 1
      %v683 = vsel %vm653, %v680, %v682
      %v684 = vrot.slane %v592, 1
      %v685 = vrot.slane %v479, 1
      %v686 = vsel %vm653, %v684, %v685
      %v687 = vrot.slane %v608, 1
      %v688 = vsel %vm653, %v685, %v687
      %v689 = vrot.slane %v593, 1
      %v690 = vrot.slane %v482, 1
      %v691 = vsel %vm653, %v689, %v690
      %v692 = vrot.slane %v609, 1
      %v693 = vsel %vm653, %v690, %v692
      %v694 = vrot.slane %v594, 1
      %v695 = vrot.slane %v485, 1
      %v696 = vsel %vm653, %v694, %v695
      %v697 = vrot.slane %v610, 1
      %v698 = vsel %vm653, %v695, %v697
      %v699 = vrot.slane %v595, 1
      %v700 = vrot.slane %v488, 1
      %v701 = vsel %vm653, %v699, %v700
      %v702 = vrot.slane %v611, 1
      %v703 = vsel %vm653, %v700, %v702
      %v704 = vrot.slane %v596, 1
      %v705 = vrot.slane %v491, 1
      %v706 = vsel %vm653, %v704, %v705
      %v707 = vrot.slane %v612, 1
      %v708 = vsel %vm653, %v705, %v707
      %v709 = vrot.slane %v597, 1
      %v710 = vrot.slane %v494, 1
      %v711 = vsel %vm653, %v709, %v710
      %v712 = vrot.slane %v613, 1
      %v713 = vsel %vm653, %v710, %v712
      %v714 = vrot.slane %v598, 1
      %v715 = vrot.slane %v497, 1
      %v716 = vsel %vm653, %v714, %v715
      %v717 = vrot.slane %v614, 1
      %v718 = vsel %vm653, %v715, %v717
      %v719 = vrot.slane %v599, 1
      %v720 = vrot.slane %v500, 1
      %v721 = vsel %vm653, %v719, %v720
      %v722 = vrot.slane %v615, 1
      %v723 = vsel %vm653, %v720, %v722
      %v724 = vrot.slane %v600, 1
      %v725 = vrot.slane %v503, 1
      %v726 = vsel %vm653, %v724, %v725
      %v727 = vrot.slane %v616, 1
      %v728 = vsel %vm653, %v725, %v727
      %729 = vrot.lane.b32.xlu0 %v656, 4
      %v730 = vpop.permute.xlu0 %729
      %731 = vrot.lane.b32.xlu0 %v658, 4
      %v732 = vpop.permute.xlu0 %731
      %733 = vrot.lane.b32.xlu0 %v661, 4
      %v734 = vpop.permute.xlu0 %733
      %735 = vrot.lane.b32.xlu0 %v663, 4
      %v736 = vpop.permute.xlu0 %735
      %737 = vrot.lane.b32.xlu0 %v666, 4
      %v738 = vpop.permute.xlu0 %737
      %739 = vrot.lane.b32.xlu0 %v668, 4
      %v740 = vpop.permute.xlu0 %739
      %741 = vrot.lane.b32.xlu0 %v671, 4
      %v742 = vpop.permute.xlu0 %741
      %743 = vrot.lane.b32.xlu0 %v673, 4
      %v744 = vpop.permute.xlu0 %743
      %745 = vrot.lane.b32.xlu0 %v676, 4
      %v746 = vpop.permute.xlu0 %745
      %747 = vrot.lane.b32.xlu0 %v678, 4
      %v748 = vpop.permute.xlu0 %747
      %749 = vrot.lane.b32.xlu0 %v681, 4
      %v750 = vpop.permute.xlu0 %749
      %751 = vrot.lane.b32.xlu0 %v683, 4
      %v752 = vpop.permute.xlu0 %751
      %753 = vrot.lane.b32.xlu0 %v686, 4
      %v754 = vpop.permute.xlu0 %753
      %755 = vrot.lane.b32.xlu0 %v688, 4
      %v756 = vpop.permute.xlu0 %755
      %757 = vrot.lane.b32.xlu0 %v691, 4
      %v758 = vpop.permute.xlu0 %757
      %759 = vrot.lane.b32.xlu0 %v693, 4
      %v760 = vpop.permute.xlu0 %759
      %761 = vrot.lane.b32.xlu0 %v696, 4
      %v762 = vpop.permute.xlu0 %761
      %763 = vrot.lane.b32.xlu0 %v698, 4
      %v764 = vpop.permute.xlu0 %763
      %765 = vrot.lane.b32.xlu0 %v701, 4
      %v766 = vpop.permute.xlu0 %765
      %767 = vrot.lane.b32.xlu0 %v703, 4
      %v768 = vpop.permute.xlu0 %767
      %769 = vrot.lane.b32.xlu0 %v706, 4
      %v770 = vpop.permute.xlu0 %769
      %771 = vrot.lane.b32.xlu0 %v708, 4
      %v772 = vpop.permute.xlu0 %771
      %773 = vrot.lane.b32.xlu0 %v711, 4
      %v774 = vpop.permute.xlu0 %773
      %775 = vrot.lane.b32.xlu0 %v713, 4
      %v776 = vpop.permute.xlu0 %775
      %777 = vrot.lane.b32.xlu0 %v716, 4
      %v778 = vpop.permute.xlu0 %777
      %779 = vrot.lane.b32.xlu0 %v718, 4
      %v780 = vpop.permute.xlu0 %779
      %781 = vrot.lane.b32.xlu0 %v721, 4
      %v782 = vpop.permute.xlu0 %781
      %783 = vrot.lane.b32.xlu0 %v723, 4
      %v784 = vpop.permute.xlu0 %783
      %785 = vrot.lane.b32.xlu0 %v726, 4
      %v786 = vpop.permute.xlu0 %785
      %787 = vrot.lane.b32.xlu0 %v728, 4
      %v788 = vpop.permute.xlu0 %787
      %vm819 = vcmask 1045504
      %v820 = vrot.slane %v587, 2
      %v821 = vrot.slane %v464, 2
      %v822 = vsel %vm819, %v820, %v821
      %v823 = vrot.slane %v603, 2
      %v824 = vsel %vm819, %v821, %v823
      %v825 = vrot.slane %v586, 2
      %v826 = vrot.slane %v461, 2
      %v827 = vsel %vm819, %v825, %v826
      %v828 = vrot.slane %v602, 2
      %v829 = vsel %vm819, %v826, %v828
      %v830 = vrot.slane %v588, 2
      %v831 = vrot.slane %v467, 2
      %v832 = vsel %vm819, %v830, %v831
      %v833 = vrot.slane %v604, 2
      %v834 = vsel %vm819, %v831, %v833
      %v835 = vrot.slane %v589, 2
      %v836 = vrot.slane %v470, 2
      %v837 = vsel %vm819, %v835, %v836
      %v838 = vrot.slane %v605, 2
      %v839 = vsel %vm819, %v836, %v838
      %v840 = vrot.slane %v590, 2
      %v841 = vrot.slane %v473, 2
      %v842 = vsel %vm819, %v840, %v841
      %v843 = vrot.slane %v606, 2
      %v844 = vsel %vm819, %v841, %v843
      %v845 = vrot.slane %v591, 2
      %v846 = vrot.slane %v476, 2
      %v847 = vsel %vm819, %v845, %v846
      %v848 = vrot.slane %v607, 2
      %v849 = vsel %vm819, %v846, %v848
      %v850 = vrot.slane %v592, 2
      %v851 = vrot.slane %v479, 2
      %v852 = vsel %vm819, %v850, %v851
      %v853 = vrot.slane %v608, 2
      %v854 = vsel %vm819, %v851, %v853
      %v855 = vrot.slane %v593, 2
      %v856 = vrot.slane %v482, 2
      %v857 = vsel %vm819, %v855, %v856
      %v858 = vrot.slane %v609, 2
      %v859 = vsel %vm819, %v856, %v858
      %v860 = vrot.slane %v594, 2
      %v861 = vrot.slane %v485, 2
      %v862 = vsel %vm819, %v860, %v861
      %v863 = vrot.slane %v610, 2
      %v864 = vsel %vm819, %v861, %v863
      %v865 = vrot.slane %v595, 2
      %v866 = vrot.slane %v488, 2
      %v867 = vsel %vm819, %v865, %v866
      %v868 = vrot.slane %v611, 2
      %v869 = vsel %vm819, %v866, %v868
      %v870 = vrot.slane %v596, 2
      %v871 = vrot.slane %v491, 2
      %v872 = vsel %vm819, %v870, %v871
      %v873 = vrot.slane %v612, 2
      %v874 = vsel %vm819, %v871, %v873
      %v875 = vrot.slane %v597, 2
      %v876 = vrot.slane %v494, 2
      %v877 = vsel %vm819, %v875, %v876
      %v878 = vrot.slane %v613, 2
      %v879 = vsel %vm819, %v876, %v878
      %v880 = vrot.slane %v598, 2
      %v881 = vrot.slane %v497, 2
      %v882 = vsel %vm819, %v880, %v881
      %v883 = vrot.slane %v614, 2
      %v884 = vsel %vm819, %v881, %v883
      %v885 = vrot.slane %v599, 2
      %v886 = vrot.slane %v500, 2
      %v887 = vsel %vm819, %v885, %v886
      %v888 = vrot.slane %v615, 2
      %v889 = vsel %vm819, %v886, %v888
      %v890 = vrot.slane %v600, 2
      %v891 = vrot.slane %v503, 2
      %v892 = vsel %vm819, %v890, %v891
      %v893 = vrot.slane %v616, 2
      %v894 = vsel %vm819, %v891, %v893
      %895 = vrot.lane.b32.xlu0 %v822, 8
      %v896 = vpop.permute.xlu0 %895
      %897 = vrot.lane.b32.xlu0 %v824, 8
      %v898 = vpop.permute.xlu0 %897
      %899 = vrot.lane.b32.xlu0 %v827, 8
      %v900 = vpop.permute.xlu0 %899
      %901 = vrot.lane.b32.xlu0 %v829, 8
      %v902 = vpop.permute.xlu0 %901
      %903 = vrot.lane.b32.xlu0 %v832, 8
      %v904 = vpop.permute.xlu0 %903
      %905 = vrot.lane.b32.xlu0 %v834, 8
      %v906 = vpop.permute.xlu0 %905
      %907 = vrot.lane.b32.xlu0 %v837, 8
      %v908 = vpop.permute.xlu0 %907
      %909 = vrot.lane.b32.xlu0 %v839, 8
      %v910 = vpop.permute.xlu0 %909
      %911 = vrot.lane.b32.xlu0 %v842, 8
      %v912 = vpop.permute.xlu0 %911
      %913 = vrot.lane.b32.xlu0 %v844, 8
      %v914 = vpop.permute.xlu0 %913
      %915 = vrot.lane.b32.xlu0 %v847, 8
      %v916 = vpop.permute.xlu0 %915
      %917 = vrot.lane.b32.xlu0 %v849, 8
      %v918 = vpop.permute.xlu0 %917
      %919 = vrot.lane.b32.xlu0 %v852, 8
      %v920 = vpop.permute.xlu0 %919
      %921 = vrot.lane.b32.xlu0 %v854, 8
      %v922 = vpop.permute.xlu0 %921
      %923 = vrot.lane.b32.xlu0 %v857, 8
      %v924 = vpop.permute.xlu0 %923
      %925 = vrot.lane.b32.xlu0 %v859, 8
      %v926 = vpop.permute.xlu0 %925
      %927 = vrot.lane.b32.xlu0 %v862, 8
      %v928 = vpop.permute.xlu0 %927
      %929 = vrot.lane.b32.xlu0 %v864, 8
      %v930 = vpop.permute.xlu0 %929
      %931 = vrot.lane.b32.xlu0 %v867, 8
      %v932 = vpop.permute.xlu0 %931
      %933 = vrot.lane.b32.xlu0 %v869, 8
      %v934 = vpop.permute.xlu0 %933
      %935 = vrot.lane.b32.xlu0 %v872, 8
      %v936 = vpop.permute.xlu0 %935
      %937 = vrot.lane.b32.xlu0 %v874, 8
      %v938 = vpop.permute.xlu0 %937
      %939 = vrot.lane.b32.xlu0 %v877, 8
      %v940 = vpop.permute.xlu0 %939
      %941 = vrot.lane.b32.xlu0 %v879, 8
      %v942 = vpop.permute.xlu0 %941
      %943 = vrot.lane.b32.xlu0 %v882, 8
      %v944 = vpop.permute.xlu0 %943
      %945 = vrot.lane.b32.xlu0 %v884, 8
      %v946 = vpop.permute.xlu0 %945
      %947 = vrot.lane.b32.xlu0 %v887, 8
      %v948 = vpop.permute.xlu0 %947
      %949 = vrot.lane.b32.xlu0 %v889, 8
      %v950 = vpop.permute.xlu0 %949
      %951 = vrot.lane.b32.xlu0 %v892, 8
      %v952 = vpop.permute.xlu0 %951
      %953 = vrot.lane.b32.xlu0 %v894, 8
      %v954 = vpop.permute.xlu0 %953
      %986 = vrot.lane.b32.xlu0 %v586, 12
      %v987 = vpop.permute.xlu0 %986
      %988 = vrot.lane.b32.xlu0 %v461, 12
      %v989 = vpop.permute.xlu0 %988
      %990 = vrot.lane.b32.xlu0 %v587, 12
      %v991 = vpop.permute.xlu0 %990
      %992 = vrot.lane.b32.xlu0 %v464, 12
      %v993 = vpop.permute.xlu0 %992
      %994 = vrot.lane.b32.xlu0 %v588, 12
      %v995 = vpop.permute.xlu0 %994
      %996 = vrot.lane.b32.xlu0 %v467, 12
      %v997 = vpop.permute.xlu0 %996
      %998 = vrot.lane.b32.xlu0 %v589, 12
      %v999 = vpop.permute.xlu0 %998
      %1000 = vrot.lane.b32.xlu0 %v470, 12
      %v1001 = vpop.permute.xlu0 %1000
      %1002 = vrot.lane.b32.xlu0 %v590, 12
      %v1003 = vpop.permute.xlu0 %1002
      %1004 = vrot.lane.b32.xlu0 %v473, 12
      %v1005 = vpop.permute.xlu0 %1004
      %1006 = vrot.lane.b32.xlu0 %v591, 12
      %v1007 = vpop.permute.xlu0 %1006
      %1008 = vrot.lane.b32.xlu0 %v476, 12
      %v1009 = vpop.permute.xlu0 %1008
      %1010 = vrot.lane.b32.xlu0 %v592, 12
      %v1011 = vpop.permute.xlu0 %1010
      %1012 = vrot.lane.b32.xlu0 %v479, 12
      %v1013 = vpop.permute.xlu0 %1012
      %1014 = vrot.lane.b32.xlu0 %v593, 12
      %v1015 = vpop.permute.xlu0 %1014
      %1016 = vrot.lane.b32.xlu0 %v482, 12
      %v1017 = vpop.permute.xlu0 %1016
      %1018 = vrot.lane.b32.xlu0 %v594, 12
      %v1019 = vpop.permute.xlu0 %1018
      %1020 = vrot.lane.b32.xlu0 %v485, 12
      %v1021 = vpop.permute.xlu0 %1020
      %1022 = vrot.lane.b32.xlu0 %v595, 12
      %v1023 = vpop.permute.xlu0 %1022
      %1024 = vrot.lane.b32.xlu0 %v488, 12
      %v1025 = vpop.permute.xlu0 %1024
      %1026 = vrot.lane.b32.xlu0 %v596, 12
      %v1027 = vpop.permute.xlu0 %1026
      %1028 = vrot.lane.b32.xlu0 %v491, 12
      %v1029 = vpop.permute.xlu0 %1028
      %1030 = vrot.lane.b32.xlu0 %v597, 12
      %v1031 = vpop.permute.xlu0 %1030
      %1032 = vrot.lane.b32.xlu0 %v494, 12
      %v1033 = vpop.permute.xlu0 %1032
      %1034 = vrot.lane.b32.xlu0 %v598, 12
      %v1035 = vpop.permute.xlu0 %1034
      %1036 = vrot.lane.b32.xlu0 %v497, 12
      %v1037 = vpop.permute.xlu0 %1036
      %1038 = vrot.lane.b32.xlu0 %v599, 12
      %v1039 = vpop.permute.xlu0 %1038
      %1040 = vrot.lane.b32.xlu0 %v500, 12
      %v1041 = vpop.permute.xlu0 %1040
      %1042 = vrot.lane.b32.xlu0 %v600, 12
      %v1043 = vpop.permute.xlu0 %1042
      %1044 = vrot.lane.b32.xlu0 %v503, 12
      %v1045 = vpop.permute.xlu0 %1044
      %1046 = vrot.lane.b32.xlu0 %v601, 12
      %v1047 = vpop.permute.xlu0 %1046
      %1048 = vrot.lane.b32.xlu0 %v506, 12
      %v1049 = vpop.permute.xlu0 %1048
      %v1083 = vrot.slane %v601, 1
      %v1084 = vrot.slane %v506, 1
      %v1085 = vsel %vm653, %v1083, %v1084
      %v1086 = vrot.slane %v617, 1
      %v1087 = vsel %vm653, %v1084, %v1086
      %1088 = vrot.lane.b32.xlu0 %v661, 16
      %v1089 = vpop.permute.xlu0 %1088
      %1090 = vrot.lane.b32.xlu0 %v663, 16
      %v1091 = vpop.permute.xlu0 %1090
      %1092 = vrot.lane.b32.xlu0 %v656, 16
      %v1093 = vpop.permute.xlu0 %1092
      %1094 = vrot.lane.b32.xlu0 %v658, 16
      %v1095 = vpop.permute.xlu0 %1094
      %1096 = vrot.lane.b32.xlu0 %v666, 16
      %v1097 = vpop.permute.xlu0 %1096
      %1098 = vrot.lane.b32.xlu0 %v668, 16
      %v1099 = vpop.permute.xlu0 %1098
      %1100 = vrot.lane.b32.xlu0 %v671, 16
      %v1101 = vpop.permute.xlu0 %1100
      %1102 = vrot.lane.b32.xlu0 %v673, 16
      %v1103 = vpop.permute.xlu0 %1102
      %1104 = vrot.lane.b32.xlu0 %v676, 16
      %v1105 = vpop.permute.xlu0 %1104
      %1106 = vrot.lane.b32.xlu0 %v678, 16
      %v1107 = vpop.permute.xlu0 %1106
      %1108 = vrot.lane.b32.xlu0 %v681, 16
      %v1109 = vpop.permute.xlu0 %1108
      %1110 = vrot.lane.b32.xlu0 %v683, 16
      %v1111 = vpop.permute.xlu0 %1110
      %1112 = vrot.lane.b32.xlu0 %v686, 16
      %v1113 = vpop.permute.xlu0 %1112
      %1114 = vrot.lane.b32.xlu0 %v688, 16
      %v1115 = vpop.permute.xlu0 %1114
      %1116 = vrot.lane.b32.xlu0 %v691, 16
      %v1117 = vpop.permute.xlu0 %1116
      %1118 = vrot.lane.b32.xlu0 %v693, 16
      %v1119 = vpop.permute.xlu0 %1118
      %1120 = vrot.lane.b32.xlu0 %v696, 16
      %v1121 = vpop.permute.xlu0 %1120
      %1122 = vrot.lane.b32.xlu0 %v698, 16
      %v1123 = vpop.permute.xlu0 %1122
      %1124 = vrot.lane.b32.xlu0 %v701, 16
      %v1125 = vpop.permute.xlu0 %1124
      %1126 = vrot.lane.b32.xlu0 %v703, 16
      %v1127 = vpop.permute.xlu0 %1126
      %1128 = vrot.lane.b32.xlu0 %v706, 16
      %v1129 = vpop.permute.xlu0 %1128
      %1130 = vrot.lane.b32.xlu0 %v708, 16
      %v1131 = vpop.permute.xlu0 %1130
      %1132 = vrot.lane.b32.xlu0 %v711, 16
      %v1133 = vpop.permute.xlu0 %1132
      %1134 = vrot.lane.b32.xlu0 %v713, 16
      %v1135 = vpop.permute.xlu0 %1134
      %1136 = vrot.lane.b32.xlu0 %v716, 16
      %v1137 = vpop.permute.xlu0 %1136
      %1138 = vrot.lane.b32.xlu0 %v718, 16
      %v1139 = vpop.permute.xlu0 %1138
      %1140 = vrot.lane.b32.xlu0 %v721, 16
      %v1141 = vpop.permute.xlu0 %1140
      %1142 = vrot.lane.b32.xlu0 %v723, 16
      %v1143 = vpop.permute.xlu0 %1142
      %1144 = vrot.lane.b32.xlu0 %v726, 16
      %v1145 = vpop.permute.xlu0 %1144
      %1146 = vrot.lane.b32.xlu0 %v728, 16
      %v1147 = vpop.permute.xlu0 %1146
      %1148 = vrot.lane.b32.xlu0 %v1085, 16
      %v1149 = vpop.permute.xlu0 %1148
      %1150 = vrot.lane.b32.xlu0 %v1087, 16
      %v1151 = vpop.permute.xlu0 %1150
      %v1184 = vrot.slane %v601, 2
      %v1185 = vrot.slane %v506, 2
      %v1186 = vsel %vm819, %v1184, %v1185
      %v1187 = vrot.slane %v617, 2
      %v1188 = vsel %vm819, %v1185, %v1187
      %1189 = vrot.lane.b32.xlu0 %v827, 20
      %v1190 = vpop.permute.xlu0 %1189
      %1191 = vrot.lane.b32.xlu0 %v829, 20
      %v1192 = vpop.permute.xlu0 %1191
      %1193 = vrot.lane.b32.xlu0 %v822, 20
      %v1194 = vpop.permute.xlu0 %1193
      %1195 = vrot.lane.b32.xlu0 %v824, 20
      %v1196 = vpop.permute.xlu0 %1195
      %1197 = vrot.lane.b32.xlu0 %v832, 20
      %v1198 = vpop.permute.xlu0 %1197
      %1199 = vrot.lane.b32.xlu0 %v834, 20
      %v1200 = vpop.permute.xlu0 %1199
      %1201 = vrot.lane.b32.xlu0 %v837, 20
      %v1202 = vpop.permute.xlu0 %1201
      %1203 = vrot.lane.b32.xlu0 %v839, 20
      %v1204 = vpop.permute.xlu0 %1203
      %1205 = vrot.lane.b32.xlu0 %v842, 20
      %v1206 = vpop.permute.xlu0 %1205
      %1207 = vrot.lane.b32.xlu0 %v844, 20
      %v1208 = vpop.permute.xlu0 %1207
      %1209 = vrot.lane.b32.xlu0 %v847, 20
      %v1210 = vpop.permute.xlu0 %1209
      %1211 = vrot.lane.b32.xlu0 %v849, 20
      %v1212 = vpop.permute.xlu0 %1211
      %1213 = vrot.lane.b32.xlu0 %v852, 20
      %v1214 = vpop.permute.xlu0 %1213
      %1215 = vrot.lane.b32.xlu0 %v854, 20
      %v1216 = vpop.permute.xlu0 %1215
      %1217 = vrot.lane.b32.xlu0 %v857, 20
      %v1218 = vpop.permute.xlu0 %1217
      %1219 = vrot.lane.b32.xlu0 %v859, 20
      %v1220 = vpop.permute.xlu0 %1219
      %1221 = vrot.lane.b32.xlu0 %v862, 20
      %v1222 = vpop.permute.xlu0 %1221
      %1223 = vrot.lane.b32.xlu0 %v864, 20
      %v1224 = vpop.permute.xlu0 %1223
      %1225 = vrot.lane.b32.xlu0 %v867, 20
      %v1226 = vpop.permute.xlu0 %1225
      %1227 = vrot.lane.b32.xlu0 %v869, 20
      %v1228 = vpop.permute.xlu0 %1227
      %1229 = vrot.lane.b32.xlu0 %v872, 20
      %v1230 = vpop.permute.xlu0 %1229
      %1231 = vrot.lane.b32.xlu0 %v874, 20
      %v1232 = vpop.permute.xlu0 %1231
      %1233 = vrot.lane.b32.xlu0 %v877, 20
      %v1234 = vpop.permute.xlu0 %1233
      %1235 = vrot.lane.b32.xlu0 %v879, 20
      %v1236 = vpop.permute.xlu0 %1235
      %1237 = vrot.lane.b32.xlu0 %v882, 20
      %v1238 = vpop.permute.xlu0 %1237
      %1239 = vrot.lane.b32.xlu0 %v884, 20
      %v1240 = vpop.permute.xlu0 %1239
      %1241 = vrot.lane.b32.xlu0 %v887, 20
      %v1242 = vpop.permute.xlu0 %1241
      %1243 = vrot.lane.b32.xlu0 %v889, 20
      %v1244 = vpop.permute.xlu0 %1243
      %1245 = vrot.lane.b32.xlu0 %v892, 20
      %v1246 = vpop.permute.xlu0 %1245
      %1247 = vrot.lane.b32.xlu0 %v894, 20
      %v1248 = vpop.permute.xlu0 %1247
      %1249 = vrot.lane.b32.xlu0 %v1186, 20
      %v1250 = vpop.permute.xlu0 %1249
      %1251 = vrot.lane.b32.xlu0 %v1188, 20
      %v1252 = vpop.permute.xlu0 %1251
      %1285 = vrot.lane.b32.xlu0 %v587, 24
      %v1286 = vpop.permute.xlu0 %1285
      %1287 = vrot.lane.b32.xlu0 %v464, 24
      %v1288 = vpop.permute.xlu0 %1287
      %1289 = vrot.lane.b32.xlu0 %v588, 24
      %v1290 = vpop.permute.xlu0 %1289
      %1291 = vrot.lane.b32.xlu0 %v467, 24
      %v1292 = vpop.permute.xlu0 %1291
      %1293 = vrot.lane.b32.xlu0 %v589, 24
      %v1294 = vpop.permute.xlu0 %1293
      %1295 = vrot.lane.b32.xlu0 %v470, 24
      %v1296 = vpop.permute.xlu0 %1295
      %1297 = vrot.lane.b32.xlu0 %v590, 24
      %v1298 = vpop.permute.xlu0 %1297
      %1299 = vrot.lane.b32.xlu0 %v473, 24
      %v1300 = vpop.permute.xlu0 %1299
      %1301 = vrot.lane.b32.xlu0 %v591, 24
      %v1302 = vpop.permute.xlu0 %1301
      %1303 = vrot.lane.b32.xlu0 %v476, 24
      %v1304 = vpop.permute.xlu0 %1303
      %1305 = vrot.lane.b32.xlu0 %v592, 24
      %v1306 = vpop.permute.xlu0 %1305
      %1307 = vrot.lane.b32.xlu0 %v479, 24
      %v1308 = vpop.permute.xlu0 %1307
      %1309 = vrot.lane.b32.xlu0 %v593, 24
      %v1310 = vpop.permute.xlu0 %1309
      %1311 = vrot.lane.b32.xlu0 %v482, 24
      %v1312 = vpop.permute.xlu0 %1311
      %1313 = vrot.lane.b32.xlu0 %v594, 24
      %v1314 = vpop.permute.xlu0 %1313
      %1315 = vrot.lane.b32.xlu0 %v485, 24
      %v1316 = vpop.permute.xlu0 %1315
      %1317 = vrot.lane.b32.xlu0 %v595, 24
      %v1318 = vpop.permute.xlu0 %1317
      %1319 = vrot.lane.b32.xlu0 %v488, 24
      %v1320 = vpop.permute.xlu0 %1319
      %1321 = vrot.lane.b32.xlu0 %v596, 24
      %v1322 = vpop.permute.xlu0 %1321
      %1323 = vrot.lane.b32.xlu0 %v491, 24
      %v1324 = vpop.permute.xlu0 %1323
      %1325 = vrot.lane.b32.xlu0 %v597, 24
      %v1326 = vpop.permute.xlu0 %1325
      %1327 = vrot.lane.b32.xlu0 %v494, 24
      %v1328 = vpop.permute.xlu0 %1327
      %1329 = vrot.lane.b32.xlu0 %v598, 24
      %v1330 = vpop.permute.xlu0 %1329
      %1331 = vrot.lane.b32.xlu0 %v497, 24
      %v1332 = vpop.permute.xlu0 %1331
      %1333 = vrot.lane.b32.xlu0 %v599, 24
      %v1334 = vpop.permute.xlu0 %1333
      %1335 = vrot.lane.b32.xlu0 %v500, 24
      %v1336 = vpop.permute.xlu0 %1335
      %1337 = vrot.lane.b32.xlu0 %v600, 24
      %v1338 = vpop.permute.xlu0 %1337
      %1339 = vrot.lane.b32.xlu0 %v503, 24
      %v1340 = vpop.permute.xlu0 %1339
      %1341 = vrot.lane.b32.xlu0 %v601, 24
      %v1342 = vpop.permute.xlu0 %1341
      %1343 = vrot.lane.b32.xlu0 %v506, 24
      %v1344 = vpop.permute.xlu0 %1343
      %1375 = vrot.lane.b32.xlu0 %v656, 28
      %v1376 = vpop.permute.xlu0 %1375
      %1377 = vrot.lane.b32.xlu0 %v658, 28
      %v1378 = vpop.permute.xlu0 %1377
      %1379 = vrot.lane.b32.xlu0 %v666, 28
      %v1380 = vpop.permute.xlu0 %1379
      %1381 = vrot.lane.b32.xlu0 %v668, 28
      %v1382 = vpop.permute.xlu0 %1381
      %1383 = vrot.lane.b32.xlu0 %v671, 28
      %v1384 = vpop.permute.xlu0 %1383
      %1385 = vrot.lane.b32.xlu0 %v673, 28
      %v1386 = vpop.permute.xlu0 %1385
      %1387 = vrot.lane.b32.xlu0 %v676, 28
      %v1388 = vpop.permute.xlu0 %1387
      %1389 = vrot.lane.b32.xlu0 %v678, 28
      %v1390 = vpop.permute.xlu0 %1389
      %1391 = vrot.lane.b32.xlu0 %v681, 28
      %v1392 = vpop.permute.xlu0 %1391
      %1393 = vrot.lane.b32.xlu0 %v683, 28
      %v1394 = vpop.permute.xlu0 %1393
      %1395 = vrot.lane.b32.xlu0 %v686, 28
      %v1396 = vpop.permute.xlu0 %1395
      %1397 = vrot.lane.b32.xlu0 %v688, 28
      %v1398 = vpop.permute.xlu0 %1397
      %1399 = vrot.lane.b32.xlu0 %v691, 28
      %v1400 = vpop.permute.xlu0 %1399
      %1401 = vrot.lane.b32.xlu0 %v693, 28
      %v1402 = vpop.permute.xlu0 %1401
      %1403 = vrot.lane.b32.xlu0 %v696, 28
      %v1404 = vpop.permute.xlu0 %1403
      %1405 = vrot.lane.b32.xlu0 %v698, 28
      %v1406 = vpop.permute.xlu0 %1405
      %1407 = vrot.lane.b32.xlu0 %v701, 28
      %v1408 = vpop.permute.xlu0 %1407
      %1409 = vrot.lane.b32.xlu0 %v703, 28
      %v1410 = vpop.permute.xlu0 %1409
      %1411 = vrot.lane.b32.xlu0 %v706, 28
      %v1412 = vpop.permute.xlu0 %1411
      %1413 = vrot.lane.b32.xlu0 %v708, 28
      %v1414 = vpop.permute.xlu0 %1413
      %1415 = vrot.lane.b32.xlu0 %v711, 28
      %v1416 = vpop.permute.xlu0 %1415
      %1417 = vrot.lane.b32.xlu0 %v713, 28
      %v1418 = vpop.permute.xlu0 %1417
      %1419 = vrot.lane.b32.xlu0 %v716, 28
      %v1420 = vpop.permute.xlu0 %1419
      %1421 = vrot.lane.b32.xlu0 %v718, 28
      %v1422 = vpop.permute.xlu0 %1421
      %1423 = vrot.lane.b32.xlu0 %v721, 28
      %v1424 = vpop.permute.xlu0 %1423
      %1425 = vrot.lane.b32.xlu0 %v723, 28
      %v1426 = vpop.permute.xlu0 %1425
      %1427 = vrot.lane.b32.xlu0 %v726, 28
      %v1428 = vpop.permute.xlu0 %1427
      %1429 = vrot.lane.b32.xlu0 %v728, 28
      %v1430 = vpop.permute.xlu0 %1429
      %1431 = vrot.lane.b32.xlu0 %v1085, 28
      %v1432 = vpop.permute.xlu0 %1431
      %1433 = vrot.lane.b32.xlu0 %v1087, 28
      %v1434 = vpop.permute.xlu0 %1433
      %1465 = vrot.lane.b32.xlu0 %v822, 32
      %v1466 = vpop.permute.xlu0 %1465
      %1467 = vrot.lane.b32.xlu0 %v824, 32
      %v1468 = vpop.permute.xlu0 %1467
      %1469 = vrot.lane.b32.xlu0 %v832, 32
      %v1470 = vpop.permute.xlu0 %1469
      %1471 = vrot.lane.b32.xlu0 %v834, 32
      %v1472 = vpop.permute.xlu0 %1471
      %1473 = vrot.lane.b32.xlu0 %v837, 32
      %v1474 = vpop.permute.xlu0 %1473
      %1475 = vrot.lane.b32.xlu0 %v839, 32
      %v1476 = vpop.permute.xlu0 %1475
      %1477 = vrot.lane.b32.xlu0 %v842, 32
      %v1478 = vpop.permute.xlu0 %1477
      %1479 = vrot.lane.b32.xlu0 %v844, 32
      %v1480 = vpop.permute.xlu0 %1479
      %1481 = vrot.lane.b32.xlu0 %v847, 32
      %v1482 = vpop.permute.xlu0 %1481
      %1483 = vrot.lane.b32.xlu0 %v849, 32
      %v1484 = vpop.permute.xlu0 %1483
      %1485 = vrot.lane.b32.xlu0 %v852, 32
      %v1486 = vpop.permute.xlu0 %1485
      %1487 = vrot.lane.b32.xlu0 %v854, 32
      %v1488 = vpop.permute.xlu0 %1487
      %1489 = vrot.lane.b32.xlu0 %v857, 32
      %v1490 = vpop.permute.xlu0 %1489
      %1491 = vrot.lane.b32.xlu0 %v859, 32
      %v1492 = vpop.permute.xlu0 %1491
      %1493 = vrot.lane.b32.xlu0 %v862, 32
      %v1494 = vpop.permute.xlu0 %1493
      %1495 = vrot.lane.b32.xlu0 %v864, 32
      %v1496 = vpop.permute.xlu0 %1495
      %1497 = vrot.lane.b32.xlu0 %v867, 32
      %v1498 = vpop.permute.xlu0 %1497
      %1499 = vrot.lane.b32.xlu0 %v869, 32
      %v1500 = vpop.permute.xlu0 %1499
      %1501 = vrot.lane.b32.xlu0 %v872, 32
      %v1502 = vpop.permute.xlu0 %1501
      %1503 = vrot.lane.b32.xlu0 %v874, 32
      %v1504 = vpop.permute.xlu0 %1503
      %1505 = vrot.lane.b32.xlu0 %v877, 32
      %v1506 = vpop.permute.xlu0 %1505
      %1507 = vrot.lane.b32.xlu0 %v879, 32
      %v1508 = vpop.permute.xlu0 %1507
      %1509 = vrot.lane.b32.xlu0 %v882, 32
      %v1510 = vpop.permute.xlu0 %1509
      %1511 = vrot.lane.b32.xlu0 %v884, 32
      %v1512 = vpop.permute.xlu0 %1511
      %1513 = vrot.lane.b32.xlu0 %v887, 32
      %v1514 = vpop.permute.xlu0 %1513
      %1515 = vrot.lane.b32.xlu0 %v889, 32
      %v1516 = vpop.permute.xlu0 %1515
      %1517 = vrot.lane.b32.xlu0 %v892, 32
      %v1518 = vpop.permute.xlu0 %1517
      %1519 = vrot.lane.b32.xlu0 %v894, 32
      %v1520 = vpop.permute.xlu0 %1519
      %1521 = vrot.lane.b32.xlu0 %v1186, 32
      %v1522 = vpop.permute.xlu0 %1521
      %1523 = vrot.lane.b32.xlu0 %v1188, 32
      %v1524 = vpop.permute.xlu0 %1523
      %vm1555 = vcmask 31744
      %v1556 = vsel %vm1555, %v587, %v730
      %v1557 = vsel %vm1555, %v464, %v732
      %v1558 = vsel %vm1555, %v586, %v734
      %v1559 = vsel %vm1555, %v461, %v736
      %v1560 = vsel %vm1555, %v588, %v738
      %v1561 = vsel %vm1555, %v467, %v740
      %v1562 = vsel %vm1555, %v589, %v742
      %v1563 = vsel %vm1555, %v470, %v744
      %v1564 = vsel %vm1555, %v590, %v746
      %v1565 = vsel %vm1555, %v473, %v748
      %v1566 = vsel %vm1555, %v591, %v750
      %v1567 = vsel %vm1555, %v476, %v752
      %v1568 = vsel %vm1555, %v592, %v754
      %v1569 = vsel %vm1555, %v479, %v756
      %v1570 = vsel %vm1555, %v593, %v758
      %v1571 = vsel %vm1555, %v482, %v760
      %v1572 = vsel %vm1555, %v594, %v762
      %v1573 = vsel %vm1555, %v485, %v764
      %v1574 = vsel %vm1555, %v595, %v766
      %v1575 = vsel %vm1555, %v488, %v768
      %v1576 = vsel %vm1555, %v596, %v770
      %v1577 = vsel %vm1555, %v491, %v772
      %v1578 = vsel %vm1555, %v597, %v774
      %v1579 = vsel %vm1555, %v494, %v776
      %v1580 = vsel %vm1555, %v598, %v778
      %v1581 = vsel %vm1555, %v497, %v780
      %v1582 = vsel %vm1555, %v599, %v782
      %v1583 = vsel %vm1555, %v500, %v784
      %v1584 = vsel %vm1555, %v600, %v786
      %v1585 = vsel %vm1555, %v503, %v788
      %vm1586 = vcmask 64512
      %v1587 = vsel %vm1586, %v1556, %v896
      %v1588 = vsel %vm1586, %v1557, %v898
      %v1589 = vsel %vm1586, %v1558, %v900
      %v1590 = vsel %vm1586, %v1559, %v902
      %v1591 = vsel %vm1586, %v1560, %v904
      %v1592 = vsel %vm1586, %v1561, %v906
      %v1593 = vsel %vm1586, %v1562, %v908
      %v1594 = vsel %vm1586, %v1563, %v910
      %v1595 = vsel %vm1586, %v1564, %v912
      %v1596 = vsel %vm1586, %v1565, %v914
      %v1597 = vsel %vm1586, %v1566, %v916
      %v1598 = vsel %vm1586, %v1567, %v918
      %v1599 = vsel %vm1586, %v1568, %v920
      %v1600 = vsel %vm1586, %v1569, %v922
      %v1601 = vsel %vm1586, %v1570, %v924
      %v1602 = vsel %vm1586, %v1571, %v926
      %v1603 = vsel %vm1586, %v1572, %v928
      %v1604 = vsel %vm1586, %v1573, %v930
      %v1605 = vsel %vm1586, %v1574, %v932
      %v1606 = vsel %vm1586, %v1575, %v934
      %v1607 = vsel %vm1586, %v1576, %v936
      %v1608 = vsel %vm1586, %v1577, %v938
      %v1609 = vsel %vm1586, %v1578, %v940
      %v1610 = vsel %vm1586, %v1579, %v942
      %v1611 = vsel %vm1586, %v1580, %v944
      %v1612 = vsel %vm1586, %v1581, %v946
      %v1613 = vsel %vm1586, %v1582, %v948
      %v1614 = vsel %vm1586, %v1583, %v950
      %v1615 = vsel %vm1586, %v1584, %v952
      %v1616 = vsel %vm1586, %v1585, %v954
      %vm1617 = vcmask 97280
      %v1618 = vsel %vm1617, %v1587, %v987
      %v1619 = vsel %vm1617, %v1588, %v989
      %v1620 = vsel %vm1617, %v1589, %v991
      %v1621 = vsel %vm1617, %v1590, %v993
      %v1622 = vsel %vm1617, %v1587, %v995
      %v1623 = vsel %vm1617, %v1588, %v997
      %v1624 = vsel %vm1617, %v1591, %v999
      %v1625 = vsel %vm1617, %v1592, %v1001
      %v1626 = vsel %vm1617, %v1593, %v1003
      %v1627 = vsel %vm1617, %v1594, %v1005
      %v1628 = vsel %vm1617, %v1595, %v1007
      %v1629 = vsel %vm1617, %v1596, %v1009
      %v1630 = vsel %vm1617, %v1597, %v1011
      %v1631 = vsel %vm1617, %v1598, %v1013
      %v1632 = vsel %vm1617, %v1599, %v1015
      %v1633 = vsel %vm1617, %v1600, %v1017
      %v1634 = vsel %vm1617, %v1601, %v1019
      %v1635 = vsel %vm1617, %v1602, %v1021
      %v1636 = vsel %vm1617, %v1603, %v1023
      %v1637 = vsel %vm1617, %v1604, %v1025
      %v1638 = vsel %vm1617, %v1605, %v1027
      %v1639 = vsel %vm1617, %v1606, %v1029
      %v1640 = vsel %vm1617, %v1607, %v1031
      %v1641 = vsel %vm1617, %v1608, %v1033
      %v1642 = vsel %vm1617, %v1609, %v1035
      %v1643 = vsel %vm1617, %v1610, %v1037
      %v1644 = vsel %vm1617, %v1611, %v1039
      %v1645 = vsel %vm1617, %v1612, %v1041
      %v1646 = vsel %vm1617, %v1613, %v1043
      %v1647 = vsel %vm1617, %v1614, %v1045
      %v1648 = vsel %vm1617, %v1615, %v1047
      %v1649 = vsel %vm1617, %v1616, %v1049
      %vm1650 = vcmask 130048
      %v1651 = vsel %vm1650, %v1618, %v1089
      %v1652 = vsel %vm1650, %v1619, %v1091
      %v1653 = vsel %vm1650, %v1620, %v1093
      %v1654 = vsel %vm1650, %v1621, %v1095
      %v1655 = vsel %vm1650, %v1622, %v1097
      %v1656 = vsel %vm1650, %v1623, %v1099
      %v1657 = vsel %vm1650, %v1624, %v1101
      %v1658 = vsel %vm1650, %v1625, %v1103
      %v1659 = vsel %vm1650, %v1626, %v1105
      %v1660 = vsel %vm1650, %v1627, %v1107
      %v1661 = vsel %vm1650, %v1628, %v1109
      %v1662 = vsel %vm1650, %v1629, %v1111
      %v1663 = vsel %vm1650, %v1630, %v1113
      %v1664 = vsel %vm1650, %v1631, %v1115
      %v1665 = vsel %vm1650, %v1632, %v1117
      %v1666 = vsel %vm1650, %v1633, %v1119
      %v1667 = vsel %vm1650, %v1634, %v1121
      %v1668 = vsel %vm1650, %v1635, %v1123
      %v1669 = vsel %vm1650, %v1636, %v1125
      %v1670 = vsel %vm1650, %v1637, %v1127
      %v1671 = vsel %vm1650, %v1638, %v1129
      %v1672 = vsel %vm1650, %v1639, %v1131
      %v1673 = vsel %vm1650, %v1640, %v1133
      %v1674 = vsel %vm1650, %v1641, %v1135
      %v1675 = vsel %vm1650, %v1642, %v1137
      %v1676 = vsel %vm1650, %v1643, %v1139
      %v1677 = vsel %vm1650, %v1644, %v1141
      %v1678 = vsel %vm1650, %v1645, %v1143
      %v1679 = vsel %vm1650, %v1646, %v1145
      %v1680 = vsel %vm1650, %v1647, %v1147
      %v1681 = vsel %vm1650, %v1648, %v1149
      %v1682 = vsel %vm1650, %v1649, %v1151
      %vm1683 = vcmask 162816
      %v1684 = vsel %vm1683, %v1651, %v1190
      %v1685 = vsel %vm1683, %v1652, %v1192
      %v1686 = vsel %vm1683, %v1653, %v1194
      %v1687 = vsel %vm1683, %v1654, %v1196
      %v1688 = vsel %vm1683, %v1655, %v1198
      %v1689 = vsel %vm1683, %v1656, %v1200
      %v1690 = vsel %vm1683, %v1657, %v1202
      %v1691 = vsel %vm1683, %v1658, %v1204
      %v1692 = vsel %vm1683, %v1659, %v1206
      %v1693 = vsel %vm1683, %v1660, %v1208
      %v1694 = vsel %vm1683, %v1661, %v1210
      %v1695 = vsel %vm1683, %v1662, %v1212
      %v1696 = vsel %vm1683, %v1663, %v1214
      %v1697 = vsel %vm1683, %v1664, %v1216
      %v1698 = vsel %vm1683, %v1665, %v1218
      %v1699 = vsel %vm1683, %v1666, %v1220
      %v1700 = vsel %vm1683, %v1667, %v1222
      %v1701 = vsel %vm1683, %v1668, %v1224
      %v1702 = vsel %vm1683, %v1669, %v1226
      %v1703 = vsel %vm1683, %v1670, %v1228
      %v1704 = vsel %vm1683, %v1671, %v1230
      %v1705 = vsel %vm1683, %v1672, %v1232
      %v1706 = vsel %vm1683, %v1673, %v1234
      %v1707 = vsel %vm1683, %v1674, %v1236
      %v1708 = vsel %vm1683, %v1675, %v1238
      %v1709 = vsel %vm1683, %v1676, %v1240
      %v1710 = vsel %vm1683, %v1677, %v1242
      %v1711 = vsel %vm1683, %v1678, %v1244
      %v1712 = vsel %vm1683, %v1679, %v1246
      %v1713 = vsel %vm1683, %v1680, %v1248
      %v1714 = vsel %vm1683, %v1681, %v1250
      %v1715 = vsel %vm1683, %v1682, %v1252
      %vm1716 = vcmask 195584
      %v1717 = vsel %vm1716, %v1684, %v1286
      %v1718 = vsel %vm1716, %v1685, %v1288
      %v1719 = vsel %vm1716, %v1686, %v1290
      %v1720 = vsel %vm1716, %v1687, %v1292
      %v1721 = vsel %vm1716, %v1688, %v1294
      %v1722 = vsel %vm1716, %v1689, %v1296
      %v1723 = vsel %vm1716, %v1690, %v1298
      %v1724 = vsel %vm1716, %v1691, %v1300
      %v1725 = vsel %vm1716, %v1692, %v1302
      %v1726 = vsel %vm1716, %v1693, %v1304
      %v1727 = vsel %vm1716, %v1694, %v1306
      %v1728 = vsel %vm1716, %v1695, %v1308
      %v1729 = vsel %vm1716, %v1696, %v1310
      %v1730 = vsel %vm1716, %v1697, %v1312
      %v1731 = vsel %vm1716, %v1698, %v1314
      %v1732 = vsel %vm1716, %v1699, %v1316
      %v1733 = vsel %vm1716, %v1700, %v1318
      %v1734 = vsel %vm1716, %v1701, %v1320
      %v1735 = vsel %vm1716, %v1702, %v1322
      %v1736 = vsel %vm1716, %v1703, %v1324
      %v1737 = vsel %vm1716, %v1704, %v1326
      %v1738 = vsel %vm1716, %v1705, %v1328
      %v1739 = vsel %vm1716, %v1706, %v1330
      %v1740 = vsel %vm1716, %v1707, %v1332
      %v1741 = vsel %vm1716, %v1708, %v1334
      %v1742 = vsel %vm1716, %v1709, %v1336
      %v1743 = vsel %vm1716, %v1710, %v1338
      %v1744 = vsel %vm1716, %v1711, %v1340
      %v1745 = vsel %vm1716, %v1712, %v1342
      %v1746 = vsel %vm1716, %v1713, %v1344
      %v1747 = vsel %vm1716, %v1714, %v1338
      %v1748 = vsel %vm1716, %v1715, %v1340
      %vm1749 = vcmask 228352
      %v1750 = vsel %vm1749, %v1717, %v1376
      %v1751 = vsel %vm1749, %v1718, %v1378
      %v1752 = vsel %vm1749, %v1719, %v1380
      %v1753 = vsel %vm1749, %v1720, %v1382
      %v1754 = vsel %vm1749, %v1721, %v1384
      %v1755 = vsel %vm1749, %v1722, %v1386
      %v1756 = vsel %vm1749, %v1723, %v1388
      %v1757 = vsel %vm1749, %v1724, %v1390
      %v1758 = vsel %vm1749, %v1725, %v1392
      %v1759 = vsel %vm1749, %v1726, %v1394
      %v1760 = vsel %vm1749, %v1727, %v1396
      %v1761 = vsel %vm1749, %v1728, %v1398
      %v1762 = vsel %vm1749, %v1729, %v1400
      %v1763 = vsel %vm1749, %v1730, %v1402
      %v1764 = vsel %vm1749, %v1731, %v1404
      %v1765 = vsel %vm1749, %v1732, %v1406
      %v1766 = vsel %vm1749, %v1733, %v1408
      %v1767 = vsel %vm1749, %v1734, %v1410
      %v1768 = vsel %vm1749, %v1735, %v1412
      %v1769 = vsel %vm1749, %v1736, %v1414
      %v1770 = vsel %vm1749, %v1737, %v1416
      %v1771 = vsel %vm1749, %v1738, %v1418
      %v1772 = vsel %vm1749, %v1739, %v1420
      %v1773 = vsel %vm1749, %v1740, %v1422
      %v1774 = vsel %vm1749, %v1741, %v1424
      %v1775 = vsel %vm1749, %v1742, %v1426
      %v1776 = vsel %vm1749, %v1743, %v1428
      %v1777 = vsel %vm1749, %v1744, %v1430
      %v1778 = vsel %vm1749, %v1745, %v1432
      %v1779 = vsel %vm1749, %v1746, %v1434
      %v1780 = vsel %vm1749, %v1747, %v1428
      %v1781 = vsel %vm1749, %v1748, %v1430
      %vm1782 = vcmask 261120
      %v1783 = vsel %vm1782, %v1750, %v1466
      %v1784 = vsel %vm1782, %v1751, %v1468
      %v1785 = vsel %vm1782, %v1752, %v1470
      %v1786 = vsel %vm1782, %v1753, %v1472
      %v1787 = vsel %vm1782, %v1754, %v1474
      %v1788 = vsel %vm1782, %v1755, %v1476
      %v1789 = vsel %vm1782, %v1756, %v1478
      %v1790 = vsel %vm1782, %v1757, %v1480
      %v1791 = vsel %vm1782, %v1758, %v1482
      %v1792 = vsel %vm1782, %v1759, %v1484
      %v1793 = vsel %vm1782, %v1760, %v1486
      %v1794 = vsel %vm1782, %v1761, %v1488
      %v1795 = vsel %vm1782, %v1762, %v1490
      %v1796 = vsel %vm1782, %v1763, %v1492
      %v1797 = vsel %vm1782, %v1764, %v1494
      %v1798 = vsel %vm1782, %v1765, %v1496
      %v1799 = vsel %vm1782, %v1766, %v1498
      %v1800 = vsel %vm1782, %v1767, %v1500
      %v1801 = vsel %vm1782, %v1768, %v1502
      %v1802 = vsel %vm1782, %v1769, %v1504
      %v1803 = vsel %vm1782, %v1770, %v1506
      %v1804 = vsel %vm1782, %v1771, %v1508
      %v1805 = vsel %vm1782, %v1772, %v1510
      %v1806 = vsel %vm1782, %v1773, %v1512
      %v1807 = vsel %vm1782, %v1774, %v1514
      %v1808 = vsel %vm1782, %v1775, %v1516
      %v1809 = vsel %vm1782, %v1776, %v1518
      %v1810 = vsel %vm1782, %v1777, %v1520
      %v1811 = vsel %vm1782, %v1778, %v1522
      %v1812 = vsel %vm1782, %v1779, %v1524
      %v1813 = vsel %vm1782, %v1780, %v1518
      %v1814 = vsel %vm1782, %v1781, %v1520
      %vm1815 = vcmask 293888
      %v1817 = vsel %vm1815, %v1783, 0
      %v1820 = vsel %vm1815, %v1784, 0
      %v1823 = vsel %vm1815, %v1785, 0
      %v1826 = vsel %vm1815, %v1786, 0
      %v1829 = vsel %vm1815, %v1787, 0
      %v1832 = vsel %vm1815, %v1788, 0
      %v1835 = vsel %vm1815, %v1789, 0
      %v1838 = vsel %vm1815, %v1790, 0
      %v1841 = vsel %vm1815, %v1791, 0
      %v1844 = vsel %vm1815, %v1792, 0
      %v1847 = vsel %vm1815, %v1793, 0
      %v1850 = vsel %vm1815, %v1794, 0
      %v1853 = vsel %vm1815, %v1795, 0
      %v1856 = vsel %vm1815, %v1796, 0
      %v1859 = vsel %vm1815, %v1797, 0
      %v1862 = vsel %vm1815, %v1798, 0
      %v1865 = vsel %vm1815, %v1799, 0
      %v1868 = vsel %vm1815, %v1800, 0
      %v1871 = vsel %vm1815, %v1801, 0
      %v1874 = vsel %vm1815, %v1802, 0
      %v1877 = vsel %vm1815, %v1803, 0
      %v1880 = vsel %vm1815, %v1804, 0
      %v1883 = vsel %vm1815, %v1805, 0
      %v1886 = vsel %vm1815, %v1806, 0
      %v1889 = vsel %vm1815, %v1807, 0
      %v1892 = vsel %vm1815, %v1808, 0
      %v1895 = vsel %vm1815, %v1809, 0
      %v1898 = vsel %vm1815, %v1810, 0
      %v1901 = vsel %vm1815, %v1811, 0
      %v1904 = vsel %vm1815, %v1812, 0
      %v1907 = vsel %vm1815, %v1813, 0
      %v1910 = vsel %vm1815, %v1814, 0
      %vm1912 = vcmask 1043456
      %v1914 = vsel %vm1912, %v622, 0
      %1916 = vmatprep.subr.mxu0 0.0
      %1917 = vmatpush1.msra.mxu0 0.0
      %1918 = vmatprep.subr.mxu0 0.0
      %1919 = vmatpush1.msra.mxu0 0.0
      %1920 = vmatprep.subr.mxu0 0.0
      %1921 = vmatpush1.msra.mxu0 0.0
      %1922 = vmatprep.subr.mxu0 0.0
      %1923 = vmatpush1.msra.mxu0 0.0
      %1924 = vmatprep.subr.mxu0 0.0
      %1925 = vmatpush1.msra.mxu0 0.0
      %1926 = vmatprep.subr.mxu0 0.0
      %1927 = vmatpush1.msra.mxu0 0.0
      %1928 = vmatprep.subr.mxu0 0.0
      %1929 = vmatpush1.msra.mxu0 0.0
      %1930 = vmatprep.subr.mxu0 0.0
      %1931 = vmatpush1.msra.mxu0 0.0
      %1932 = vmatprep.subr.mxu0 0.0
      %1933 = vmatpush1.msra.mxu0 0.0
      %1934 = vmatprep.subr.mxu0 0.0
      %1935 = vmatpush1.msra.mxu0 0.0
      %1936 = vmatprep.subr.mxu0 0.0
      %1937 = vmatpush1.msra.mxu0 0.0
      %1938 = vmatprep.subr.mxu0 0.0
      %1939 = vmatpush1.msra.mxu0 %v1914
      %1940 = vmatprep.subr.mxu0 0.0
      %1941 = vmatpush1.msra.mxu0 %v621
      %1942 = vmatprep.subr.mxu0 0.0
      %1943 = vmatpush1.msra.mxu0 %v620
      %1944 = vmatprep.subr.mxu0 0.0
      %1945 = vmatpush1.msra.mxu0 %v619
      %1946 = vmatprep.subr.mxu0 0.0
      %1947 = vmatpush1.msra.mxu0 %v618
      %1948 = vmatprep.subr.mxu0 0.0
      %1949 = vmatpush2.msra.mxu0 0.0
      %1950 = vmatprep.subr.mxu0 0.0
      %1951 = vmatpush2.msra.mxu0 0.0
      %1952 = vmatprep.subr.mxu0 0.0
      %1953 = vmatpush2.msra.mxu0 0.0
      %1954 = vmatprep.subr.mxu0 0.0
      %1955 = vmatpush2.msra.mxu0 0.0
      %1956 = vmatprep.subr.mxu0 0.0
      %1957 = vmatpush2.msra.mxu0 0.0
      %1958 = vmatprep.subr.mxu0 0.0
      %1959 = vmatpush2.msra.mxu0 0.0
      %1960 = vmatprep.subr.mxu0 0.0
      %1961 = vmatpush2.msra.mxu0 0.0
      %1962 = vmatprep.subr.mxu0 0.0
      %1963 = vmatpush2.msra.mxu0 0.0
      %1964 = vmatprep.subr.mxu0 0.0
      %1965 = vmatpush2.msra.mxu0 0.0
      %1966 = vmatprep.subr.mxu0 0.0
      %1967 = vmatpush2.msra.mxu0 0.0
      %1968 = vmatprep.subr.mxu0 0.0
      %1969 = vmatpush2.msra.mxu0 0.0
      %1970 = vmatprep.subr.mxu0 0.0
      %1971 = vmatpush2.msra.mxu0 0.0
      %1972 = vmatprep.subr.mxu0 0.0
      %1973 = vmatpush2.msra.mxu0 0.0
      %1974 = vmatprep.subr.mxu0 0.0
      %1975 = vmatpush2.msra.mxu0 0.0
      %1976 = vmatprep.subr.mxu0 0.0
      %1977 = vmatpush2.msra.mxu0 0.0
      %1978 = vmatprep.subr.mxu0 0.0
      %1979 = vmatpush2.msra.mxu0 0.0
      %1980 = vmatprep.mubr.f32.mxu0 0.0
      %1981 = vmatmul.mubr.f32.gmra.mxu0 %v1817
      %v1982 = vpop.f32.mrf.mxu0
      %v1983 = vadd.f32 0.0, %v1982
      %v1984 = vpop.f32.mrf.mxu0
      %1985 = vmatprep.mubr.f32.mxu0 0.0
      %1986 = vmatmul.mubr.f32.gmra.mxu0 %v1820
      %v1987 = vpop.f32.mrf.mxu0
      %v1988 = vadd.f32 0.0, %v1987
      %v1989 = vpop.f32.mrf.mxu0
      %1990 = vmatprep.mubr.f32.mxu0 0.0
      %1991 = vmatmul.mubr.f32.gmra.mxu0 %v1823
      %v1992 = vpop.f32.mrf.mxu0
      %v1993 = vadd.f32 0.0, %v1992
      %v1994 = vpop.f32.mrf.mxu0
      %1995 = vmatprep.mubr.f32.mxu0 0.0
      %1996 = vmatmul.mubr.f32.gmra.mxu0 %v1826
      %v1997 = vpop.f32.mrf.mxu0
      %v1998 = vadd.f32 0.0, %v1997
      %v1999 = vpop.f32.mrf.mxu0
      %2000 = vmatprep.mubr.f32.mxu0 0.0
      %2001 = vmatmul.mubr.f32.gmra.mxu0 %v1829
      %v2002 = vpop.f32.mrf.mxu0
      %v2003 = vadd.f32 0.0, %v2002
      %v2004 = vpop.f32.mrf.mxu0
      %2005 = vmatprep.mubr.f32.mxu0 0.0
      %2006 = vmatmul.mubr.f32.gmra.mxu0 %v1832
      %v2007 = vpop.f32.mrf.mxu0
      %v2008 = vadd.f32 0.0, %v2007
      %v2009 = vpop.f32.mrf.mxu0
      %2010 = vmatprep.mubr.f32.mxu0 0.0
      %2011 = vmatmul.mubr.f32.gmra.mxu0 %v1835
      %v2012 = vpop.f32.mrf.mxu0
      %v2013 = vadd.f32 0.0, %v2012
      %v2014 = vpop.f32.mrf.mxu0
      %2015 = vmatprep.mubr.f32.mxu0 0.0
      %2016 = vmatmul.mubr.f32.gmra.mxu0 %v1838
      %v2017 = vpop.f32.mrf.mxu0
      %v2018 = vadd.f32 0.0, %v2017
      %v2019 = vpop.f32.mrf.mxu0
      %2020 = vmatprep.mubr.f32.mxu0 0.0
      %2021 = vmatmul.mubr.f32.gmra.mxu0 %v1841
      %v2022 = vpop.f32.mrf.mxu0
      %v2023 = vadd.f32 0.0, %v2022
      %v2024 = vpop.f32.mrf.mxu0
      %2025 = vmatprep.mubr.f32.mxu0 0.0
      %2026 = vmatmul.mubr.f32.gmra.mxu0 %v1844
      %v2027 = vpop.f32.mrf.mxu0
      %v2028 = vadd.f32 0.0, %v2027
      %v2029 = vpop.f32.mrf.mxu0
      %2030 = vmatprep.mubr.f32.mxu0 0.0
      %2031 = vmatmul.mubr.f32.gmra.mxu0 %v1847
      %v2032 = vpop.f32.mrf.mxu0
      %v2033 = vadd.f32 0.0, %v2032
      %v2034 = vpop.f32.mrf.mxu0
      %2035 = vmatprep.mubr.f32.mxu0 0.0
      %2036 = vmatmul.mubr.f32.gmra.mxu0 %v1850
      %v2037 = vpop.f32.mrf.mxu0
      %v2038 = vadd.f32 0.0, %v2037
      %v2039 = vpop.f32.mrf.mxu0
      %2040 = vmatprep.mubr.f32.mxu0 0.0
      %2041 = vmatmul.mubr.f32.gmra.mxu0 %v1853
      %v2042 = vpop.f32.mrf.mxu0
      %v2043 = vadd.f32 0.0, %v2042
      %v2044 = vpop.f32.mrf.mxu0
      %2045 = vmatprep.mubr.f32.mxu0 0.0
      %2046 = vmatmul.mubr.f32.gmra.mxu0 %v1856
      %v2047 = vpop.f32.mrf.mxu0
      %v2048 = vadd.f32 0.0, %v2047
      %v2049 = vpop.f32.mrf.mxu0
      %2050 = vmatprep.mubr.f32.mxu0 0.0
      %2051 = vmatmul.mubr.f32.gmra.mxu0 %v1859
      %v2052 = vpop.f32.mrf.mxu0
      %v2053 = vadd.f32 0.0, %v2052
      %v2054 = vpop.f32.mrf.mxu0
      %2055 = vmatprep.mubr.f32.mxu0 0.0
      %2056 = vmatmul.mubr.f32.gmra.mxu0 %v1862
      %v2057 = vpop.f32.mrf.mxu0
      %v2058 = vadd.f32 0.0, %v2057
      %v2059 = vpop.f32.mrf.mxu0
      %2060 = vmatprep.mubr.f32.mxu0 0.0
      %2061 = vmatmul.mubr.f32.gmra.mxu0 %v1865
      %v2062 = vpop.f32.mrf.mxu0
      %v2063 = vadd.f32 0.0, %v2062
      %v2064 = vpop.f32.mrf.mxu0
      %2065 = vmatprep.mubr.f32.mxu0 0.0
      %2066 = vmatmul.mubr.f32.gmra.mxu0 %v1868
      %v2067 = vpop.f32.mrf.mxu0
      %v2068 = vadd.f32 0.0, %v2067
      %v2069 = vpop.f32.mrf.mxu0
      %2070 = vmatprep.mubr.f32.mxu0 0.0
      %2071 = vmatmul.mubr.f32.gmra.mxu0 %v1871
      %v2072 = vpop.f32.mrf.mxu0
      %v2073 = vadd.f32 0.0, %v2072
      %v2074 = vpop.f32.mrf.mxu0
      %2075 = vmatprep.mubr.f32.mxu0 0.0
      %2076 = vmatmul.mubr.f32.gmra.mxu0 %v1874
      %v2077 = vpop.f32.mrf.mxu0
      %v2078 = vadd.f32 0.0, %v2077
      %v2079 = vpop.f32.mrf.mxu0
      %2080 = vmatprep.mubr.f32.mxu0 0.0
      %2081 = vmatmul.mubr.f32.gmra.mxu0 %v1877
      %v2082 = vpop.f32.mrf.mxu0
      %v2083 = vadd.f32 0.0, %v2082
      %v2084 = vpop.f32.mrf.mxu0
      %2085 = vmatprep.mubr.f32.mxu0 0.0
      %2086 = vmatmul.mubr.f32.gmra.mxu0 %v1880
      %v2087 = vpop.f32.mrf.mxu0
      %v2088 = vadd.f32 0.0, %v2087
      %v2089 = vpop.f32.mrf.mxu0
      %2090 = vmatprep.mubr.f32.mxu0 0.0
      %2091 = vmatmul.mubr.f32.gmra.mxu0 %v1883
      %v2092 = vpop.f32.mrf.mxu0
      %v2093 = vadd.f32 0.0, %v2092
      %v2094 = vpop.f32.mrf.mxu0
      %2095 = vmatprep.mubr.f32.mxu0 0.0
      %2096 = vmatmul.mubr.f32.gmra.mxu0 %v1886
      %v2097 = vpop.f32.mrf.mxu0
      %v2098 = vadd.f32 0.0, %v2097
      %v2099 = vpop.f32.mrf.mxu0
      %2100 = vmatprep.mubr.f32.mxu0 0.0
      %2101 = vmatmul.mubr.f32.gmra.mxu0 %v1889
      %v2102 = vpop.f32.mrf.mxu0
      %v2103 = vadd.f32 0.0, %v2102
      %v2104 = vpop.f32.mrf.mxu0
      %2105 = vmatprep.mubr.f32.mxu0 0.0
      %2106 = vmatmul.mubr.f32.gmra.mxu0 %v1892
      %v2107 = vpop.f32.mrf.mxu0
      %v2108 = vadd.f32 0.0, %v2107
      %v2109 = vpop.f32.mrf.mxu0
      %2110 = vmatprep.mubr.f32.mxu0 0.0
      %2111 = vmatmul.mubr.f32.gmra.mxu0 %v1895
      %v2112 = vpop.f32.mrf.mxu0
      %v2113 = vadd.f32 0.0, %v2112
      %v2114 = vpop.f32.mrf.mxu0
      %2115 = vmatprep.mubr.f32.mxu0 0.0
      %2116 = vmatmul.mubr.f32.gmra.mxu0 %v1898
      %v2117 = vpop.f32.mrf.mxu0
      %v2118 = vadd.f32 0.0, %v2117
      %v2119 = vpop.f32.mrf.mxu0
      %2120 = vmatprep.mubr.f32.mxu0 0.0
      %2121 = vmatmul.mubr.f32.gmra.mxu0 %v1901
      %v2122 = vpop.f32.mrf.mxu0
      %v2123 = vadd.f32 0.0, %v2122
      %v2124 = vpop.f32.mrf.mxu0
      %2125 = vmatprep.mubr.f32.mxu0 0.0
      %2126 = vmatmul.mubr.f32.gmra.mxu0 %v1904
      %v2127 = vpop.f32.mrf.mxu0
      %v2128 = vadd.f32 0.0, %v2127
      %v2129 = vpop.f32.mrf.mxu0
      %2130 = vmatprep.mubr.f32.mxu0 0.0
      %2131 = vmatmul.mubr.f32.gmra.mxu0 %v1907
      %v2132 = vpop.f32.mrf.mxu0
      %v2133 = vadd.f32 0.0, %v2132
      %v2134 = vpop.f32.mrf.mxu0
      %2135 = vmatprep.mubr.f32.mxu0 0.0
      %2136 = vmatmul.mubr.f32.gmra.mxu0 %v1910
      %v2137 = vpop.f32.mrf.mxu0
      %v2138 = vadd.f32 0.0, %v2137
      %v2139 = vpop.f32.mrf.mxu0
      %2140 = vdwg.mxu0
      %v2141 = vld [vmem:[%s2] sm:$0x1]
      %v2143 = vlaneseq
      %v2144 = vshrl.u32 %v2143, 7
      %v2145 = vsub.s32 0, %v2144
      %v2146 = vrot.slane %v2141, %v2145
      %v2148 = vadd.f32 %v1983, %v2146
      %v2149 = vadd.f32 %v1988, %v2146
      %v2150 = vadd.f32 %v1993, %v2146
      %v2151 = vadd.f32 %v1998, %v2146
      %v2152 = vadd.f32 %v2003, %v2146
      %v2153 = vadd.f32 %v2008, %v2146
      %v2154 = vadd.f32 %v2013, %v2146
      %v2155 = vadd.f32 %v2018, %v2146
      %v2156 = vadd.f32 %v2023, %v2146
      %v2157 = vadd.f32 %v2028, %v2146
      %v2158 = vadd.f32 %v2033, %v2146
      %v2159 = vadd.f32 %v2038, %v2146
      %v2160 = vadd.f32 %v2043, %v2146
      %v2161 = vadd.f32 %v2048, %v2146
      %v2162 = vadd.f32 %v2053, %v2146
      %v2163 = vadd.f32 %v2058, %v2146
      %v2164 = vadd.f32 %v2063, %v2146
      %v2165 = vadd.f32 %v2068, %v2146
      %v2166 = vadd.f32 %v2073, %v2146
      %v2167 = vadd.f32 %v2078, %v2146
      %v2168 = vadd.f32 %v2083, %v2146
      %v2169 = vadd.f32 %v2088, %v2146
      %v2170 = vadd.f32 %v2093, %v2146
      %v2171 = vadd.f32 %v2098, %v2146
      %v2172 = vadd.f32 %v2103, %v2146
      %v2173 = vadd.f32 %v2108, %v2146
      %v2174 = vadd.f32 %v2113, %v2146
      %v2175 = vadd.f32 %v2118, %v2146
      %v2176 = vadd.f32 %v2123, %v2146
      %v2177 = vadd.f32 %v2128, %v2146
      %v2178 = vadd.f32 %v2133, %v2146
      %v2179 = vadd.f32 %v2138, %v2146
      %v2180 = vmax.f32 %v2148, 0.0
      %v2181 = vmax.f32 %v2149, 0.0
      %v2182 = vmax.f32 %v2150, 0.0
      %v2183 = vmax.f32 %v2151, 0.0
      %v2184 = vmax.f32 %v2152, 0.0
      %v2185 = vmax.f32 %v2153, 0.0
      %v2186 = vmax.f32 %v2154, 0.0
      %v2187 = vmax.f32 %v2155, 0.0
      %v2188 = vmax.f32 %v2156, 0.0
      %v2189 = vmax.f32 %v2157, 0.0
      %v2190 = vmax.f32 %v2158, 0.0
      %v2191 = vmax.f32 %v2159, 0.0
      %v2192 = vmax.f32 %v2160, 0.0
      %v2193 = vmax.f32 %v2161, 0.0
      %v2194 = vmax.f32 %v2162, 0.0
      %v2195 = vmax.f32 %v2163, 0.0
      %v2196 = vmax.f32 %v2164, 0.0
      %v2197 = vmax.f32 %v2165, 0.0
      %v2198 = vmax.f32 %v2166, 0.0
      %v2199 = vmax.f32 %v2167, 0.0
      %v2200 = vmax.f32 %v2168, 0.0
      %v2201 = vmax.f32 %v2169, 0.0
      %v2202 = vmax.f32 %v2170, 0.0
      %v2203 = vmax.f32 %v2171, 0.0
      %v2204 = vmax.f32 %v2172, 0.0
      %v2205 = vmax.f32 %v2173, 0.0
      %v2206 = vmax.f32 %v2174, 0.0
      %v2207 = vmax.f32 %v2175, 0.0
      %v2208 = vmax.f32 %v2176, 0.0
      %v2209 = vmax.f32 %v2177, 0.0
      %v2210 = vmax.f32 %v2178, 0.0
      %v2211 = vmax.f32 %v2179, 0.0
      %v2212 = vld [vmem:[%s347] sm:$0x1]
      %v2213 = vld [vmem:[%s350] sm:$0x1]
      %v2214 = vsel %vm1555, %v2180, 0.0
      %v2215 = vsel %vm1555, %v2181, 0.0
      %v2216 = vadd.f32 %v2214, %v2215
      %v2217 = vsel %vm1555, %v2182, 0.0
      %v2218 = vadd.f32 %v2216, %v2217
      %v2219 = vsel %vm1555, %v2183, 0.0
      %v2220 = vadd.f32 %v2218, %v2219
      %v2221 = vsel %vm1555, %v2184, 0.0
      %v2222 = vadd.f32 %v2220, %v2221
      %v2223 = vsel %vm1555, %v2185, 0.0
      %v2224 = vadd.f32 %v2222, %v2223
      %v2225 = vsel %vm1555, %v2186, 0.0
      %v2226 = vadd.f32 %v2224, %v2225
      %v2227 = vsel %vm1555, %v2187, 0.0
      %v2228 = vadd.f32 %v2226, %v2227
      %v2229 = vsel %vm1555, %v2188, 0.0
      %v2230 = vadd.f32 %v2228, %v2229
      %v2231 = vsel %vm1555, %v2189, 0.0
      %v2232 = vadd.f32 %v2230, %v2231
      %v2233 = vsel %vm1555, %v2190, 0.0
      %v2234 = vadd.f32 %v2232, %v2233
      %v2235 = vsel %vm1555, %v2191, 0.0
      %v2236 = vadd.f32 %v2234, %v2235
      %v2237 = vsel %vm1555, %v2192, 0.0
      %v2238 = vadd.f32 %v2236, %v2237
      %v2239 = vsel %vm1555, %v2193, 0.0
      %v2240 = vadd.f32 %v2238, %v2239
      %v2241 = vsel %vm1555, %v2194, 0.0
      %v2242 = vadd.f32 %v2240, %v2241
      %v2243 = vsel %vm1555, %v2195, 0.0
      %v2244 = vadd.f32 %v2242, %v2243
      %v2245 = vsel %vm1555, %v2196, 0.0
      %v2246 = vadd.f32 %v2244, %v2245
      %v2247 = vsel %vm1555, %v2197, 0.0
      %v2248 = vadd.f32 %v2246, %v2247
      %v2249 = vsel %vm1555, %v2198, 0.0
      %v2250 = vadd.f32 %v2248, %v2249
      %v2251 = vsel %vm1555, %v2199, 0.0
      %v2252 = vadd.f32 %v2250, %v2251
      %v2253 = vsel %vm1555, %v2200, 0.0
      %v2254 = vadd.f32 %v2252, %v2253
      %v2255 = vsel %vm1555, %v2201, 0.0
      %v2256 = vadd.f32 %v2254, %v2255
      %v2257 = vsel %vm1555, %v2202, 0.0
      %v2258 = vadd.f32 %v2256, %v2257
      %v2259 = vsel %vm1555, %v2203, 0.0
      %v2260 = vadd.f32 %v2258, %v2259
      %v2261 = vsel %vm1555, %v2204, 0.0
      %v2262 = vadd.f32 %v2260, %v2261
      %v2263 = vsel %vm1555, %v2205, 0.0
      %v2264 = vadd.f32 %v2262, %v2263
      %v2265 = vsel %vm1555, %v2206, 0.0
      %v2266 = vadd.f32 %v2264, %v2265
      %v2267 = vsel %vm1555, %v2207, 0.0
      %v2268 = vadd.f32 %v2266, %v2267
      %v2269 = vsel %vm1555, %v2208, 0.0
      %v2270 = vadd.f32 %v2268, %v2269
      %v2271 = vsel %vm1555, %v2209, 0.0
      %v2272 = vadd.f32 %v2270, %v2271
      %v2273 = vsel %vm1555, %v2210, 0.0
      %v2274 = vadd.f32 %v2272, %v2273
      %v2275 = vsel %vm1555, %v2211, 0.0
      %v2276 = vadd.f32 %v2274, %v2275
      %v2277 = vrot.slane %v2276, 4
      %v2278 = vadd.f32 %v2276, %v2277
      %v2279 = vrot.slane %v2278, 2
      %v2280 = vadd.f32 %v2278, %v2279
      %v2281 = vrot.slane %v2280, 1
      %v2282 = vadd.f32 %v2280, %v2281
      %v2283 = vmul.f32 %v2180, %v2180
      %v2284 = vmul.f32 %v2181, %v2181
      %v2285 = vmul.f32 %v2182, %v2182
      %v2286 = vmul.f32 %v2183, %v2183
      %v2287 = vmul.f32 %v2184, %v2184
      %v2288 = vmul.f32 %v2185, %v2185
      %v2289 = vmul.f32 %v2186, %v2186
      %v2290 = vmul.f32 %v2187, %v2187
      %v2291 = vmul.f32 %v2188, %v2188
      %v2292 = vmul.f32 %v2189, %v2189
      %v2293 = vmul.f32 %v2190, %v2190
      %v2294 = vmul.f32 %v2191, %v2191
      %v2295 = vmul.f32 %v2192, %v2192
      %v2296 = vmul.f32 %v2193, %v2193
      %v2297 = vmul.f32 %v2194, %v2194
      %v2298 = vmul.f32 %v2195, %v2195
      %v2299 = vmul.f32 %v2196, %v2196
      %v2300 = vmul.f32 %v2197, %v2197
      %v2301 = vmul.f32 %v2198, %v2198
      %v2302 = vmul.f32 %v2199, %v2199
      %v2303 = vmul.f32 %v2200, %v2200
      %v2304 = vmul.f32 %v2201, %v2201
      %v2305 = vmul.f32 %v2202, %v2202
      %v2306 = vmul.f32 %v2203, %v2203
      %v2307 = vmul.f32 %v2204, %v2204
      %v2308 = vmul.f32 %v2205, %v2205
      %v2309 = vmul.f32 %v2206, %v2206
      %v2310 = vmul.f32 %v2207, %v2207
      %v2311 = vmul.f32 %v2208, %v2208
      %v2312 = vmul.f32 %v2209, %v2209
      %v2313 = vmul.f32 %v2210, %v2210
      %v2314 = vmul.f32 %v2211, %v2211
      %v2315 = vsel %vm1555, %v2283, 0.0
      %v2316 = vsel %vm1555, %v2284, 0.0
      %v2317 = vadd.f32 %v2315, %v2316
      %v2318 = vsel %vm1555, %v2285, 0.0
      %v2319 = vadd.f32 %v2317, %v2318
      %v2320 = vsel %vm1555, %v2286, 0.0
      %v2321 = vadd.f32 %v2319, %v2320
      %v2322 = vsel %vm1555, %v2287, 0.0
      %v2323 = vadd.f32 %v2321, %v2322
      %v2324 = vsel %vm1555, %v2288, 0.0
      %v2325 = vadd.f32 %v2323, %v2324
      %v2326 = vsel %vm1555, %v2289, 0.0
      %v2327 = vadd.f32 %v2325, %v2326
      %v2328 = vsel %vm1555, %v2290, 0.0
      %v2329 = vadd.f32 %v2327, %v2328
      %v2330 = vsel %vm1555, %v2291, 0.0
      %v2331 = vadd.f32 %v2329, %v2330
      %v2332 = vsel %vm1555, %v2292, 0.0
      %v2333 = vadd.f32 %v2331, %v2332
      %v2334 = vsel %vm1555, %v2293, 0.0
      %v2335 = vadd.f32 %v2333, %v2334
      %v2336 = vsel %vm1555, %v2294, 0.0
      %v2337 = vadd.f32 %v2335, %v2336
      %v2338 = vsel %vm1555, %v2295, 0.0
      %v2339 = vadd.f32 %v2337, %v2338
      %v2340 = vsel %vm1555, %v2296, 0.0
      %v2341 = vadd.f32 %v2339, %v2340
      %v2342 = vsel %vm1555, %v2297, 0.0
      %v2343 = vadd.f32 %v2341, %v2342
      %v2344 = vsel %vm1555, %v2298, 0.0
      %v2345 = vadd.f32 %v2343, %v2344
      %v2346 = vsel %vm1555, %v2299, 0.0
      %v2347 = vadd.f32 %v2345, %v2346
      %v2348 = vsel %vm1555, %v2300, 0.0
      %v2349 = vadd.f32 %v2347, %v2348
      %v2350 = vsel %vm1555, %v2301, 0.0
      %v2351 = vadd.f32 %v2349, %v2350
      %v2352 = vsel %vm1555, %v2302, 0.0
      %v2353 = vadd.f32 %v2351, %v2352
      %v2354 = vsel %vm1555, %v2303, 0.0
      %v2355 = vadd.f32 %v2353, %v2354
      %v2356 = vsel %vm1555, %v2304, 0.0
      %v2357 = vadd.f32 %v2355, %v2356
      %v2358 = vsel %vm1555, %v2305, 0.0
      %v2359 = vadd.f32 %v2357, %v2358
      %v2360 = vsel %vm1555, %v2306, 0.0
      %v2361 = vadd.f32 %v2359, %v2360
      %v2362 = vsel %vm1555, %v2307, 0.0
      %v2363 = vadd.f32 %v2361, %v2362
      %v2364 = vsel %vm1555, %v2308, 0.0
      %v2365 = vadd.f32 %v2363, %v2364
      %v2366 = vsel %vm1555, %v2309, 0.0
      %v2367 = vadd.f32 %v2365, %v2366
      %v2368 = vsel %vm1555, %v2310, 0.0
      %v2369 = vadd.f32 %v2367, %v2368
      %v2370 = vsel %vm1555, %v2311, 0.0
      %v2371 = vadd.f32 %v2369, %v2370
      %v2372 = vsel %vm1555, %v2312, 0.0
      %v2373 = vadd.f32 %v2371, %v2372
      %v2374 = vsel %vm1555, %v2313, 0.0
      %v2375 = vadd.f32 %v2373, %v2374
      %v2376 = vsel %vm1555, %v2314, 0.0
      %v2377 = vadd.f32 %v2375, %v2376
      %v2378 = vrot.slane %v2377, 4
      %v2379 = vadd.f32 %v2377, %v2378
      %v2380 = vrot.slane %v2379, 2
      %v2381 = vadd.f32 %v2379, %v2380
      %v2382 = vrot.slane %v2381, 1
      %v2383 = vadd.f32 %v2381, %v2382
      %v2384 = vmul.f32 %v2282, 0.00390625
      %v2385 = vmul.f32 %v2383, 0.00390625
      %v2386 = vmul.f32 %v2384, %v2384
      %v2387 = vsub.f32 %v2385, %v2386
      %v2388 = vadd.f32 %v2387, 1e-05
      %v2389 = vrsqrt.pop %v2388
      %v2390 = vmul.f32 %v2212, %v2389
      %v2391 = vmul.f32 %v2384, %v2390
      %v2392 = vsub.f32 %v2213, %v2391
      %v2394 = vlaneseq
      %v2395 = vshrl.u32 %v2394, 7
      %v2396 = vsub.s32 0, %v2395
      %v2397 = vrot.slane %v2390, %v2396
      %v2399 = vmul.f32 %v2180, %v2397
      %v2400 = vmul.f32 %v2181, %v2397
      %v2401 = vmul.f32 %v2182, %v2397
      %v2402 = vmul.f32 %v2183, %v2397
      %v2403 = vmul.f32 %v2184, %v2397
      %v2404 = vmul.f32 %v2185, %v2397
      %v2405 = vmul.f32 %v2186, %v2397
      %v2406 = vmul.f32 %v2187, %v2397
      %v2407 = vmul.f32 %v2188, %v2397
      %v2408 = vmul.f32 %v2189, %v2397
      %v2409 = vmul.f32 %v2190, %v2397
      %v2410 = vmul.f32 %v2191, %v2397
      %v2411 = vmul.f32 %v2192, %v2397
      %v2412 = vmul.f32 %v2193, %v2397
      %v2413 = vmul.f32 %v2194, %v2397
      %v2414 = vmul.f32 %v2195, %v2397
      %v2415 = vmul.f32 %v2196, %v2397
      %v2416 = vmul.f32 %v2197, %v2397
      %v2417 = vmul.f32 %v2198, %v2397
      %v2418 = vmul.f32 %v2199, %v2397
      %v2419 = vmul.f32 %v2200, %v2397
      %v2420 = vmul.f32 %v2201, %v2397
      %v2421 = vmul.f32 %v2202, %v2397
      %v2422 = vmul.f32 %v2203, %v2397
      %v2423 = vmul.f32 %v2204, %v2397
      %v2424 = vmul.f32 %v2205, %v2397
      %v2425 = vmul.f32 %v2206, %v2397
      %v2426 = vmul.f32 %v2207, %v2397
      %v2427 = vmul.f32 %v2208, %v2397
      %v2428 = vmul.f32 %v2209, %v2397
      %v2429 = vmul.f32 %v2210, %v2397
      %v2430 = vmul.f32 %v2211, %v2397
      %v2432 = vlaneseq
      %v2433 = vshrl.u32 %v2432, 7
      %v2434 = vsub.s32 0, %v2433
      %v2435 = vrot.slane %v2392, %v2434
      %v2437 = vadd.f32 %v2399, %v2435
      %v2438 = vadd.f32 %v2400, %v2435
      %v2439 = vadd.f32 %v2401, %v2435
      %v2440 = vadd.f32 %v2402, %v2435
      %v2441 = vadd.f32 %v2403, %v2435
      %v2442 = vadd.f32 %v2404, %v2435
      %v2443 = vadd.f32 %v2405, %v2435
      %v2444 = vadd.f32 %v2406, %v2435
      %v2445 = vadd.f32 %v2407, %v2435
      %v2446 = vadd.f32 %v2408, %v2435
      %v2447 = vadd.f32 %v2409, %v2435
      %v2448 = vadd.f32 %v2410, %v2435
      %v2449 = vadd.f32 %v2411, %v2435
      %v2450 = vadd.f32 %v2412, %v2435
      %v2451 = vadd.f32 %v2413, %v2435
      %v2452 = vadd.f32 %v2414, %v2435
      %v2453 = vadd.f32 %v2415, %v2435
      %v2454 = vadd.f32 %v2416, %v2435
      %v2455 = vadd.f32 %v2417, %v2435
      %v2456 = vadd.f32 %v2418, %v2435
      %v2457 = vadd.f32 %v2419, %v2435
      %v2458 = vadd.f32 %v2420, %v2435
      %v2459 = vadd.f32 %v2421, %v2435
      %v2460 = vadd.f32 %v2422, %v2435
      %v2461 = vadd.f32 %v2423, %v2435
      %v2462 = vadd.f32 %v2424, %v2435
      %v2463 = vadd.f32 %v2425, %v2435
      %v2464 = vadd.f32 %v2426, %v2435
      %v2465 = vadd.f32 %v2427, %v2435
      %v2466 = vadd.f32 %v2428, %v2435
      %v2467 = vadd.f32 %v2429, %v2435
      %v2468 = vadd.f32 %v2430, %v2435
      %v2485 = vrot.slane %v2437, 1
      %v2486 = vrot.slane %v2439, 1
      %v2487 = vrot.slane %v2441, 1
      %v2488 = vrot.slane %v2443, 1
      %v2489 = vrot.slane %v2445, 1
      %v2490 = vrot.slane %v2447, 1
      %v2491 = vrot.slane %v2449, 1
      %v2492 = vrot.slane %v2451, 1
      %v2493 = vrot.slane %v2453, 1
      %v2494 = vrot.slane %v2455, 1
      %v2495 = vrot.slane %v2457, 1
      %v2496 = vrot.slane %v2459, 1
      %v2497 = vrot.slane %v2461, 1
      %v2498 = vrot.slane %v2463, 1
      %v2499 = vrot.slane %v2465, 1
      %v2500 = vrot.slane %v2467, 1
      %v2533 = vrot.slane %v2437, 7
      %v2534 = vrot.slane %v2438, 7
      %v2535 = vsel %vm458, %v2533, %v2534
      %v2536 = vrot.slane %v2439, 7
      %v2537 = vrot.slane %v2440, 7
      %v2538 = vsel %vm458, %v2536, %v2537
      %v2539 = vrot.slane %v2441, 7
      %v2540 = vrot.slane %v2442, 7
      %v2541 = vsel %vm458, %v2539, %v2540
      %v2542 = vrot.slane %v2443, 7
      %v2543 = vrot.slane %v2444, 7
      %v2544 = vsel %vm458, %v2542, %v2543
      %v2545 = vrot.slane %v2445, 7
      %v2546 = vrot.slane %v2446, 7
      %v2547 = vsel %vm458, %v2545, %v2546
      %v2548 = vrot.slane %v2447, 7
      %v2549 = vrot.slane %v2448, 7
      %v2550 = vsel %vm458, %v2548, %v2549
      %v2551 = vrot.slane %v2449, 7
      %v2552 = vrot.slane %v2450, 7
      %v2553 = vsel %vm458, %v2551, %v2552
      %v2554 = vrot.slane %v2451, 7
      %v2555 = vrot.slane %v2452, 7
      %v2556 = vsel %vm458, %v2554, %v2555
      %v2557 = vrot.slane %v2453, 7
      %v2558 = vrot.slane %v2454, 7
      %v2559 = vsel %vm458, %v2557, %v2558
      %v2560 = vrot.slane %v2455, 7
      %v2561 = vrot.slane %v2456, 7
      %v2562 = vsel %vm458, %v2560, %v2561
      %v2563 = vrot.slane %v2457, 7
      %v2564 = vrot.slane %v2458, 7
      %v2565 = vsel %vm458, %v2563, %v2564
      %v2566 = vrot.slane %v2459, 7
      %v2567 = vrot.slane %v2460, 7
      %v2568 = vsel %vm458, %v2566, %v2567
      %v2569 = vrot.slane %v2461, 7
      %v2570 = vrot.slane %v2462, 7
      %v2571 = vsel %vm458, %v2569, %v2570
      %v2572 = vrot.slane %v2463, 7
      %v2573 = vrot.slane %v2464, 7
      %v2574 = vsel %vm458, %v2572, %v2573
      %v2575 = vrot.slane %v2465, 7
      %v2576 = vrot.slane %v2466, 7
      %v2577 = vsel %vm458, %v2575, %v2576
      %v2578 = vrot.slane %v2467, 7
      %v2579 = vrot.slane %v2468, 7
      %v2580 = vsel %vm458, %v2578, %v2579
      %v2628 = vrot.slane %v2438, 5
      %v2629 = vrot.slane %v2440, 5
      %v2630 = vrot.slane %v2442, 5
      %v2631 = vrot.slane %v2444, 5
      %v2632 = vrot.slane %v2446, 5
      %v2633 = vrot.slane %v2448, 5
      %v2634 = vrot.slane %v2450, 5
      %v2635 = vrot.slane %v2452, 5
      %v2636 = vrot.slane %v2454, 5
      %v2637 = vrot.slane %v2456, 5
      %v2638 = vrot.slane %v2458, 5
      %v2639 = vrot.slane %v2460, 5
      %v2640 = vrot.slane %v2462, 5
      %v2641 = vrot.slane %v2464, 5
      %v2642 = vrot.slane %v2466, 5
      %v2643 = vrot.slane %v2468, 5
      %v2660 = vsel %vm458, %v2485, %v2533
      %v2661 = vsel %vm458, %v2486, %v2536
      %v2662 = vsel %vm458, %v2487, %v2539
      %v2663 = vsel %vm458, %v2488, %v2542
      %v2664 = vsel %vm458, %v2489, %v2545
      %v2665 = vsel %vm458, %v2490, %v2548
      %v2666 = vsel %vm458, %v2491, %v2551
      %v2667 = vsel %vm458, %v2492, %v2554
      %v2668 = vsel %vm458, %v2493, %v2557
      %v2669 = vsel %vm458, %v2494, %v2560
      %v2670 = vsel %vm458, %v2495, %v2563
      %v2671 = vsel %vm458, %v2496, %v2566
      %v2672 = vsel %vm458, %v2497, %v2569
      %v2673 = vsel %vm458, %v2498, %v2572
      %v2674 = vsel %vm458, %v2499, %v2575
      %v2675 = vsel %vm458, %v2500, %v2578
      %v2676 = vsel %vm458, %v2534, %v2628
      %v2677 = vsel %vm458, %v2537, %v2629
      %v2678 = vsel %vm458, %v2540, %v2630
      %v2679 = vsel %vm458, %v2543, %v2631
      %v2680 = vsel %vm458, %v2546, %v2632
      %v2681 = vsel %vm458, %v2549, %v2633
      %v2682 = vsel %vm458, %v2552, %v2634
      %v2683 = vsel %vm458, %v2555, %v2635
      %v2684 = vsel %vm458, %v2558, %v2636
      %v2685 = vsel %vm458, %v2561, %v2637
      %v2686 = vsel %vm458, %v2564, %v2638
      %v2687 = vsel %vm458, %v2567, %v2639
      %v2688 = vsel %vm458, %v2570, %v2640
      %v2689 = vsel %vm458, %v2573, %v2641
      %v2690 = vsel %vm458, %v2576, %v2642
      %v2691 = vsel %vm458, %v2579, %v2643
      %v2692 = vld [vmem:[%s5] sm:$0xff]
      %v2693 = vld [vmem:[%s5 + $0x8] sm:$0xff]
      %v2694 = vld [vmem:[%s5 + $0x10] sm:$0xff]
      %v2695 = vld [vmem:[%s5 + $0x18] sm:$0xff]
      %v2696 = vld [vmem:[%s5 + $0x20] sm:$0xf]
      %v2727 = vrot.slane %v2661, 1
      %v2728 = vrot.slane %v2538, 1
      %v2729 = vsel %vm653, %v2727, %v2728
      %v2730 = vrot.slane %v2677, 1
      %v2731 = vsel %vm653, %v2728, %v2730
      %v2732 = vrot.slane %v2660, 1
      %v2733 = vrot.slane %v2535, 1
      %v2734 = vsel %vm653, %v2732, %v2733
      %v2735 = vrot.slane %v2676, 1
      %v2736 = vsel %vm653, %v2733, %v2735
      %v2737 = vrot.slane %v2662, 1
      %v2738 = vrot.slane %v2541, 1
      %v2739 = vsel %vm653, %v2737, %v2738
      %v2740 = vrot.slane %v2678, 1
      %v2741 = vsel %vm653, %v2738, %v2740
      %v2742 = vrot.slane %v2663, 1
      %v2743 = vrot.slane %v2544, 1
      %v2744 = vsel %vm653, %v2742, %v2743
      %v2745 = vrot.slane %v2679, 1
      %v2746 = vsel %vm653, %v2743, %v2745
      %v2747 = vrot.slane %v2664, 1
      %v2748 = vrot.slane %v2547, 1
      %v2749 = vsel %vm653, %v2747, %v2748
      %v2750 = vrot.slane %v2680, 1
      %v2751 = vsel %vm653, %v2748, %v2750
      %v2752 = vrot.slane %v2665, 1
      %v2753 = vrot.slane %v2550, 1
      %v2754 = vsel %vm653, %v2752, %v2753
      %v2755 = vrot.slane %v2681, 1
      %v2756 = vsel %vm653, %v2753, %v2755
      %v2757 = vrot.slane %v2666, 1
      %v2758 = vrot.slane %v2553, 1
      %v2759 = vsel %vm653, %v2757, %v2758
      %v2760 = vrot.slane %v2682, 1
      %v2761 = vsel %vm653, %v2758, %v2760
      %v2762 = vrot.slane %v2667, 1
      %v2763 = vrot.slane %v2556, 1
      %v2764 = vsel %vm653, %v2762, %v2763
      %v2765 = vrot.slane %v2683, 1
      %v2766 = vsel %vm653, %v2763, %v2765
      %v2767 = vrot.slane %v2668, 1
      %v2768 = vrot.slane %v2559, 1
      %v2769 = vsel %vm653, %v2767, %v2768
      %v2770 = vrot.slane %v2684, 1
      %v2771 = vsel %vm653, %v2768, %v2770
      %v2772 = vrot.slane %v2669, 1
      %v2773 = vrot.slane %v2562, 1
      %v2774 = vsel %vm653, %v2772, %v2773
      %v2775 = vrot.slane %v2685, 1
      %v2776 = vsel %vm653, %v2773, %v2775
      %v2777 = vrot.slane %v2670, 1
      %v2778 = vrot.slane %v2565, 1
      %v2779 = vsel %vm653, %v2777, %v2778
      %v2780 = vrot.slane %v2686, 1
      %v2781 = vsel %vm653, %v2778, %v2780
      %v2782 = vrot.slane %v2671, 1
      %v2783 = vrot.slane %v2568, 1
      %v2784 = vsel %vm653, %v2782, %v2783
      %v2785 = vrot.slane %v2687, 1
      %v2786 = vsel %vm653, %v2783, %v2785
      %v2787 = vrot.slane %v2672, 1
      %v2788 = vrot.slane %v2571, 1
      %v2789 = vsel %vm653, %v2787, %v2788
      %v2790 = vrot.slane %v2688, 1
      %v2791 = vsel %vm653, %v2788, %v2790
      %v2792 = vrot.slane %v2673, 1
      %v2793 = vrot.slane %v2574, 1
      %v2794 = vsel %vm653, %v2792, %v2793
      %v2795 = vrot.slane %v2689, 1
      %v2796 = vsel %vm653, %v2793, %v2795
      %v2797 = vrot.slane %v2674, 1
      %v2798 = vrot.slane %v2577, 1
      %v2799 = vsel %vm653, %v2797, %v2798
      %v2800 = vrot.slane %v2690, 1
      %v2801 = vsel %vm653, %v2798, %v2800
      %2802 = vrot.lane.b32.xlu0 %v2729, 4
      %v2803 = vpop.permute.xlu0 %2802
      %2804 = vrot.lane.b32.xlu0 %v2731, 4
      %v2805 = vpop.permute.xlu0 %2804
      %2806 = vrot.lane.b32.xlu0 %v2734, 4
      %v2807 = vpop.permute.xlu0 %2806
      %2808 = vrot.lane.b32.xlu0 %v2736, 4
      %v2809 = vpop.permute.xlu0 %2808
      %2810 = vrot.lane.b32.xlu0 %v2739, 4
      %v2811 = vpop.permute.xlu0 %2810
      %2812 = vrot.lane.b32.xlu0 %v2741, 4
      %v2813 = vpop.permute.xlu0 %2812
      %2814 = vrot.lane.b32.xlu0 %v2744, 4
      %v2815 = vpop.permute.xlu0 %2814
      %2816 = vrot.lane.b32.xlu0 %v2746, 4
      %v2817 = vpop.permute.xlu0 %2816
      %2818 = vrot.lane.b32.xlu0 %v2749, 4
      %v2819 = vpop.permute.xlu0 %2818
      %2820 = vrot.lane.b32.xlu0 %v2751, 4
      %v2821 = vpop.permute.xlu0 %2820
      %2822 = vrot.lane.b32.xlu0 %v2754, 4
      %v2823 = vpop.permute.xlu0 %2822
      %2824 = vrot.lane.b32.xlu0 %v2756, 4
      %v2825 = vpop.permute.xlu0 %2824
      %2826 = vrot.lane.b32.xlu0 %v2759, 4
      %v2827 = vpop.permute.xlu0 %2826
      %2828 = vrot.lane.b32.xlu0 %v2761, 4
      %v2829 = vpop.permute.xlu0 %2828
      %2830 = vrot.lane.b32.xlu0 %v2764, 4
      %v2831 = vpop.permute.xlu0 %2830
      %2832 = vrot.lane.b32.xlu0 %v2766, 4
      %v2833 = vpop.permute.xlu0 %2832
      %2834 = vrot.lane.b32.xlu0 %v2769, 4
      %v2835 = vpop.permute.xlu0 %2834
      %2836 = vrot.lane.b32.xlu0 %v2771, 4
      %v2837 = vpop.permute.xlu0 %2836
      %2838 = vrot.lane.b32.xlu0 %v2774, 4
      %v2839 = vpop.permute.xlu0 %2838
      %2840 = vrot.lane.b32.xlu0 %v2776, 4
      %v2841 = vpop.permute.xlu0 %2840
      %2842 = vrot.lane.b32.xlu0 %v2779, 4
      %v2843 = vpop.permute.xlu0 %2842
      %2844 = vrot.lane.b32.xlu0 %v2781, 4
      %v2845 = vpop.permute.xlu0 %2844
      %2846 = vrot.lane.b32.xlu0 %v2784, 4
      %v2847 = vpop.permute.xlu0 %2846
      %2848 = vrot.lane.b32.xlu0 %v2786, 4
      %v2849 = vpop.permute.xlu0 %2848
      %2850 = vrot.lane.b32.xlu0 %v2789, 4
      %v2851 = vpop.permute.xlu0 %2850
      %2852 = vrot.lane.b32.xlu0 %v2791, 4
      %v2853 = vpop.permute.xlu0 %2852
      %2854 = vrot.lane.b32.xlu0 %v2794, 4
      %v2855 = vpop.permute.xlu0 %2854
      %2856 = vrot.lane.b32.xlu0 %v2796, 4
      %v2857 = vpop.permute.xlu0 %2856
      %2858 = vrot.lane.b32.xlu0 %v2799, 4
      %v2859 = vpop.permute.xlu0 %2858
      %2860 = vrot.lane.b32.xlu0 %v2801, 4
      %v2861 = vpop.permute.xlu0 %2860
      %v2892 = vrot.slane %v2661, 2
      %v2893 = vrot.slane %v2538, 2
      %v2894 = vsel %vm819, %v2892, %v2893
      %v2895 = vrot.slane %v2677, 2
      %v2896 = vsel %vm819, %v2893, %v2895
      %v2897 = vrot.slane %v2660, 2
      %v2898 = vrot.slane %v2535, 2
      %v2899 = vsel %vm819, %v2897, %v2898
      %v2900 = vrot.slane %v2676, 2
      %v2901 = vsel %vm819, %v2898, %v2900
      %v2902 = vrot.slane %v2662, 2
      %v2903 = vrot.slane %v2541, 2
      %v2904 = vsel %vm819, %v2902, %v2903
      %v2905 = vrot.slane %v2678, 2
      %v2906 = vsel %vm819, %v2903, %v2905
      %v2907 = vrot.slane %v2663, 2
      %v2908 = vrot.slane %v2544, 2
      %v2909 = vsel %vm819, %v2907, %v2908
      %v2910 = vrot.slane %v2679, 2
      %v2911 = vsel %vm819, %v2908, %v2910
      %v2912 = vrot.slane %v2664, 2
      %v2913 = vrot.slane %v2547, 2
      %v2914 = vsel %vm819, %v2912, %v2913
      %v2915 = vrot.slane %v2680, 2
      %v2916 = vsel %vm819, %v2913, %v2915
      %v2917 = vrot.slane %v2665, 2
      %v2918 = vrot.slane %v2550, 2
      %v2919 = vsel %vm819, %v2917, %v2918
      %v2920 = vrot.slane %v2681, 2
      %v2921 = vsel %vm819, %v2918, %v2920
      %v2922 = vrot.slane %v2666, 2
      %v2923 = vrot.slane %v2553, 2
      %v2924 = vsel %vm819, %v2922, %v2923
      %v2925 = vrot.slane %v2682, 2
      %v2926 = vsel %vm819, %v2923, %v2925
      %v2927 = vrot.slane %v2667, 2
      %v2928 = vrot.slane %v2556, 2
      %v2929 = vsel %vm819, %v2927, %v2928
      %v2930 = vrot.slane %v2683, 2
      %v2931 = vsel %vm819, %v2928, %v2930
      %v2932 = vrot.slane %v2668, 2
      %v2933 = vrot.slane %v2559, 2
      %v2934 = vsel %vm819, %v2932, %v2933
      %v2935 = vrot.slane %v2684, 2
      %v2936 = vsel %vm819, %v2933, %v2935
      %v2937 = vrot.slane %v2669, 2
      %v2938 = vrot.slane %v2562, 2
      %v2939 = vsel %vm819, %v2937, %v2938
      %v2940 = vrot.slane %v2685, 2
      %v2941 = vsel %vm819, %v2938, %v2940
      %v2942 = vrot.slane %v2670, 2
      %v2943 = vrot.slane %v2565, 2
      %v2944 = vsel %vm819, %v2942, %v2943
      %v2945 = vrot.slane %v2686, 2
      %v2946 = vsel %vm819, %v2943, %v2945
      %v2947 = vrot.slane %v2671, 2
      %v2948 = vrot.slane %v2568, 2
      %v2949 = vsel %vm819, %v2947, %v2948
      %v2950 = vrot.slane %v2687, 2
      %v2951 = vsel %vm819, %v2948, %v2950
      %v2952 = vrot.slane %v2672, 2
      %v2953 = vrot.slane %v2571, 2
      %v2954 = vsel %vm819, %v2952, %v2953
      %v2955 = vrot.slane %v2688, 2
      %v2956 = vsel %vm819, %v2953, %v2955
      %v2957 = vrot.slane %v2673, 2
      %v2958 = vrot.slane %v2574, 2
      %v2959 = vsel %vm819, %v2957, %v2958
      %v2960 = vrot.slane %v2689, 2
      %v2961 = vsel %vm819, %v2958, %v2960
      %v2962 = vrot.slane %v2674, 2
      %v2963 = vrot.slane %v2577, 2
      %v2964 = vsel %vm819, %v2962, %v2963
      %v2965 = vrot.slane %v2690, 2
      %v2966 = vsel %vm819, %v2963, %v2965
      %2967 = vrot.lane.b32.xlu0 %v2894, 8
      %v2968 = vpop.permute.xlu0 %2967
      %2969 = vrot.lane.b32.xlu0 %v2896, 8
      %v2970 = vpop.permute.xlu0 %2969
      %2971 = vrot.lane.b32.xlu0 %v2899, 8
      %v2972 = vpop.permute.xlu0 %2971
      %2973 = vrot.lane.b32.xlu0 %v2901, 8
      %v2974 = vpop.permute.xlu0 %2973
      %2975 = vrot.lane.b32.xlu0 %v2904, 8
      %v2976 = vpop.permute.xlu0 %2975
      %2977 = vrot.lane.b32.xlu0 %v2906, 8
      %v2978 = vpop.permute.xlu0 %2977
      %2979 = vrot.lane.b32.xlu0 %v2909, 8
      %v2980 = vpop.permute.xlu0 %2979
      %2981 = vrot.lane.b32.xlu0 %v2911, 8
      %v2982 = vpop.permute.xlu0 %2981
      %2983 = vrot.lane.b32.xlu0 %v2914, 8
      %v2984 = vpop.permute.xlu0 %2983
      %2985 = vrot.lane.b32.xlu0 %v2916, 8
      %v2986 = vpop.permute.xlu0 %2985
      %2987 = vrot.lane.b32.xlu0 %v2919, 8
      %v2988 = vpop.permute.xlu0 %2987
      %2989 = vrot.lane.b32.xlu0 %v2921, 8
      %v2990 = vpop.permute.xlu0 %2989
      %2991 = vrot.lane.b32.xlu0 %v2924, 8
      %v2992 = vpop.permute.xlu0 %2991
      %2993 = vrot.lane.b32.xlu0 %v2926, 8
      %v2994 = vpop.permute.xlu0 %2993
      %2995 = vrot.lane.b32.xlu0 %v2929, 8
      %v2996 = vpop.permute.xlu0 %2995
      %2997 = vrot.lane.b32.xlu0 %v2931, 8
      %v2998 = vpop.permute.xlu0 %2997
      %2999 = vrot.lane.b32.xlu0 %v2934, 8
      %v3000 = vpop.permute.xlu0 %2999
      %3001 = vrot.lane.b32.xlu0 %v2936, 8
      %v3002 = vpop.permute.xlu0 %3001
      %3003 = vrot.lane.b32.xlu0 %v2939, 8
      %v3004 = vpop.permute.xlu0 %3003
      %3005 = vrot.lane.b32.xlu0 %v2941, 8
      %v3006 = vpop.permute.xlu0 %3005
      %3007 = vrot.lane.b32.xlu0 %v2944, 8
      %v3008 = vpop.permute.xlu0 %3007
      %3009 = vrot.lane.b32.xlu0 %v2946, 8
      %v3010 = vpop.permute.xlu0 %3009
      %3011 = vrot.lane.b32.xlu0 %v2949, 8
      %v3012 = vpop.permute.xlu0 %3011
      %3013 = vrot.lane.b32.xlu0 %v2951, 8
      %v3014 = vpop.permute.xlu0 %3013
      %3015 = vrot.lane.b32.xlu0 %v2954, 8
      %v3016 = vpop.permute.xlu0 %3015
      %3017 = vrot.lane.b32.xlu0 %v2956, 8
      %v3018 = vpop.permute.xlu0 %3017
      %3019 = vrot.lane.b32.xlu0 %v2959, 8
      %v3020 = vpop.permute.xlu0 %3019
      %3021 = vrot.lane.b32.xlu0 %v2961, 8
      %v3022 = vpop.permute.xlu0 %3021
      %3023 = vrot.lane.b32.xlu0 %v2964, 8
      %v3024 = vpop.permute.xlu0 %3023
      %3025 = vrot.lane.b32.xlu0 %v2966, 8
      %v3026 = vpop.permute.xlu0 %3025
      %3058 = vrot.lane.b32.xlu0 %v2660, 12
      %v3059 = vpop.permute.xlu0 %3058
      %3060 = vrot.lane.b32.xlu0 %v2535, 12
      %v3061 = vpop.permute.xlu0 %3060
      %3062 = vrot.lane.b32.xlu0 %v2661, 12
      %v3063 = vpop.permute.xlu0 %3062
      %3064 = vrot.lane.b32.xlu0 %v2538, 12
      %v3065 = vpop.permute.xlu0 %3064
      %3066 = vrot.lane.b32.xlu0 %v2662, 12
      %v3067 = vpop.permute.xlu0 %3066
      %3068 = vrot.lane.b32.xlu0 %v2541, 12
      %v3069 = vpop.permute.xlu0 %3068
      %3070 = vrot.lane.b32.xlu0 %v2663, 12
      %v3071 = vpop.permute.xlu0 %3070
      %3072 = vrot.lane.b32.xlu0 %v2544, 12
      %v3073 = vpop.permute.xlu0 %3072
      %3074 = vrot.lane.b32.xlu0 %v2664, 12
      %v3075 = vpop.permute.xlu0 %3074
      %3076 = vrot.lane.b32.xlu0 %v2547, 12
      %v3077 = vpop.permute.xlu0 %3076
      %3078 = vrot.lane.b32.xlu0 %v2665, 12
      %v3079 = vpop.permute.xlu0 %3078
      %3080 = vrot.lane.b32.xlu0 %v2550, 12
      %v3081 = vpop.permute.xlu0 %3080
      %3082 = vrot.lane.b32.xlu0 %v2666, 12
      %v3083 = vpop.permute.xlu0 %3082
      %3084 = vrot.lane.b32.xlu0 %v2553, 12
      %v3085 = vpop.permute.xlu0 %3084
      %3086 = vrot.lane.b32.xlu0 %v2667, 12
      %v3087 = vpop.permute.xlu0 %3086
      %3088 = vrot.lane.b32.xlu0 %v2556, 12
      %v3089 = vpop.permute.xlu0 %3088
      %3090 = vrot.lane.b32.xlu0 %v2668, 12
      %v3091 = vpop.permute.xlu0 %3090
      %3092 = vrot.lane.b32.xlu0 %v2559, 12
      %v3093 = vpop.permute.xlu0 %3092
      %3094 = vrot.lane.b32.xlu0 %v2669, 12
      %v3095 = vpop.permute.xlu0 %3094
      %3096 = vrot.lane.b32.xlu0 %v2562, 12
      %v3097 = vpop.permute.xlu0 %3096
      %3098 = vrot.lane.b32.xlu0 %v2670, 12
      %v3099 = vpop.permute.xlu0 %3098
      %3100 = vrot.lane.b32.xlu0 %v2565, 12
      %v3101 = vpop.permute.xlu0 %3100
      %3102 = vrot.lane.b32.xlu0 %v2671, 12
      %v3103 = vpop.permute.xlu0 %3102
      %3104 = vrot.lane.b32.xlu0 %v2568, 12
      %v3105 = vpop.permute.xlu0 %3104
      %3106 = vrot.lane.b32.xlu0 %v2672, 12
      %v3107 = vpop.permute.xlu0 %3106
      %3108 = vrot.lane.b32.xlu0 %v2571, 12
      %v3109 = vpop.permute.xlu0 %3108
      %3110 = vrot.lane.b32.xlu0 %v2673, 12
      %v3111 = vpop.permute.xlu0 %3110
      %3112 = vrot.lane.b32.xlu0 %v2574, 12
      %v3113 = vpop.permute.xlu0 %3112
      %3114 = vrot.lane.b32.xlu0 %v2674, 12
      %v3115 = vpop.permute.xlu0 %3114
      %3116 = vrot.lane.b32.xlu0 %v2577, 12
      %v3117 = vpop.permute.xlu0 %3116
      %3118 = vrot.lane.b32.xlu0 %v2675, 12
      %v3119 = vpop.permute.xlu0 %3118
      %3120 = vrot.lane.b32.xlu0 %v2580, 12
      %v3121 = vpop.permute.xlu0 %3120
      %v3155 = vrot.slane %v2675, 1
      %v3156 = vrot.slane %v2580, 1
      %v3157 = vsel %vm653, %v3155, %v3156
      %v3158 = vrot.slane %v2691, 1
      %v3159 = vsel %vm653, %v3156, %v3158
      %3160 = vrot.lane.b32.xlu0 %v2734, 16
      %v3161 = vpop.permute.xlu0 %3160
      %3162 = vrot.lane.b32.xlu0 %v2736, 16
      %v3163 = vpop.permute.xlu0 %3162
      %3164 = vrot.lane.b32.xlu0 %v2729, 16
      %v3165 = vpop.permute.xlu0 %3164
      %3166 = vrot.lane.b32.xlu0 %v2731, 16
      %v3167 = vpop.permute.xlu0 %3166
      %3168 = vrot.lane.b32.xlu0 %v2739, 16
      %v3169 = vpop.permute.xlu0 %3168
      %3170 = vrot.lane.b32.xlu0 %v2741, 16
      %v3171 = vpop.permute.xlu0 %3170
      %3172 = vrot.lane.b32.xlu0 %v2744, 16
      %v3173 = vpop.permute.xlu0 %3172
      %3174 = vrot.lane.b32.xlu0 %v2746, 16
      %v3175 = vpop.permute.xlu0 %3174
      %3176 = vrot.lane.b32.xlu0 %v2749, 16
      %v3177 = vpop.permute.xlu0 %3176
      %3178 = vrot.lane.b32.xlu0 %v2751, 16
      %v3179 = vpop.permute.xlu0 %3178
      %3180 = vrot.lane.b32.xlu0 %v2754, 16
      %v3181 = vpop.permute.xlu0 %3180
      %3182 = vrot.lane.b32.xlu0 %v2756, 16
      %v3183 = vpop.permute.xlu0 %3182
      %3184 = vrot.lane.b32.xlu0 %v2759, 16
      %v3185 = vpop.permute.xlu0 %3184
      %3186 = vrot.lane.b32.xlu0 %v2761, 16
      %v3187 = vpop.permute.xlu0 %3186
      %3188 = vrot.lane.b32.xlu0 %v2764, 16
      %v3189 = vpop.permute.xlu0 %3188
      %3190 = vrot.lane.b32.xlu0 %v2766, 16
      %v3191 = vpop.permute.xlu0 %3190
      %3192 = vrot.lane.b32.xlu0 %v2769, 16
      %v3193 = vpop.permute.xlu0 %3192
      %3194 = vrot.lane.b32.xlu0 %v2771, 16
      %v3195 = vpop.permute.xlu0 %3194
      %3196 = vrot.lane.b32.xlu0 %v2774, 16
      %v3197 = vpop.permute.xlu0 %3196
      %3198 = vrot.lane.b32.xlu0 %v2776, 16
      %v3199 = vpop.permute.xlu0 %3198
      %3200 = vrot.lane.b32.xlu0 %v2779, 16
      %v3201 = vpop.permute.xlu0 %3200
      %3202 = vrot.lane.b32.xlu0 %v2781, 16
      %v3203 = vpop.permute.xlu0 %3202
      %3204 = vrot.lane.b32.xlu0 %v2784, 16
      %v3205 = vpop.permute.xlu0 %3204
      %3206 = vrot.lane.b32.xlu0 %v2786, 16
      %v3207 = vpop.permute.xlu0 %3206
      %3208 = vrot.lane.b32.xlu0 %v2789, 16
      %v3209 = vpop.permute.xlu0 %3208
      %3210 = vrot.lane.b32.xlu0 %v2791, 16
      %v3211 = vpop.permute.xlu0 %3210
      %3212 = vrot.lane.b32.xlu0 %v2794, 16
      %v3213 = vpop.permute.xlu0 %3212
      %3214 = vrot.lane.b32.xlu0 %v2796, 16
      %v3215 = vpop.permute.xlu0 %3214
      %3216 = vrot.lane.b32.xlu0 %v2799, 16
      %v3217 = vpop.permute.xlu0 %3216
      %3218 = vrot.lane.b32.xlu0 %v2801, 16
      %v3219 = vpop.permute.xlu0 %3218
      %3220 = vrot.lane.b32.xlu0 %v3157, 16
      %v3221 = vpop.permute.xlu0 %3220
      %3222 = vrot.lane.b32.xlu0 %v3159, 16
      %v3223 = vpop.permute.xlu0 %3222
      %v3256 = vrot.slane %v2675, 2
      %v3257 = vrot.slane %v2580, 2
      %v3258 = vsel %vm819, %v3256, %v3257
      %v3259 = vrot.slane %v2691, 2
      %v3260 = vsel %vm819, %v3257, %v3259
      %3261 = vrot.lane.b32.xlu0 %v2899, 20
      %v3262 = vpop.permute.xlu0 %3261
      %3263 = vrot.lane.b32.xlu0 %v2901, 20
      %v3264 = vpop.permute.xlu0 %3263
      %3265 = vrot.lane.b32.xlu0 %v2894, 20
      %v3266 = vpop.permute.xlu0 %3265
      %3267 = vrot.lane.b32.xlu0 %v2896, 20
      %v3268 = vpop.permute.xlu0 %3267
      %3269 = vrot.lane.b32.xlu0 %v2904, 20
      %v3270 = vpop.permute.xlu0 %3269
      %3271 = vrot.lane.b32.xlu0 %v2906, 20
      %v3272 = vpop.permute.xlu0 %3271
      %3273 = vrot.lane.b32.xlu0 %v2909, 20
      %v3274 = vpop.permute.xlu0 %3273
      %3275 = vrot.lane.b32.xlu0 %v2911, 20
      %v3276 = vpop.permute.xlu0 %3275
      %3277 = vrot.lane.b32.xlu0 %v2914, 20
      %v3278 = vpop.permute.xlu0 %3277
      %3279 = vrot.lane.b32.xlu0 %v2916, 20
      %v3280 = vpop.permute.xlu0 %3279
      %3281 = vrot.lane.b32.xlu0 %v2919, 20
      %v3282 = vpop.permute.xlu0 %3281
      %3283 = vrot.lane.b32.xlu0 %v2921, 20
      %v3284 = vpop.permute.xlu0 %3283
      %3285 = vrot.lane.b32.xlu0 %v2924, 20
      %v3286 = vpop.permute.xlu0 %3285
      %3287 = vrot.lane.b32.xlu0 %v2926, 20
      %v3288 = vpop.permute.xlu0 %3287
      %3289 = vrot.lane.b32.xlu0 %v2929, 20
      %v3290 = vpop.permute.xlu0 %3289
      %3291 = vrot.lane.b32.xlu0 %v2931, 20
      %v3292 = vpop.permute.xlu0 %3291
      %3293 = vrot.lane.b32.xlu0 %v2934, 20
      %v3294 = vpop.permute.xlu0 %3293
      %3295 = vrot.lane.b32.xlu0 %v2936, 20
      %v3296 = vpop.permute.xlu0 %3295
      %3297 = vrot.lane.b32.xlu0 %v2939, 20
      %v3298 = vpop.permute.xlu0 %3297
      %3299 = vrot.lane.b32.xlu0 %v2941, 20
      %v3300 = vpop.permute.xlu0 %3299
      %3301 = vrot.lane.b32.xlu0 %v2944, 20
      %v3302 = vpop.permute.xlu0 %3301
      %3303 = vrot.lane.b32.xlu0 %v2946, 20
      %v3304 = vpop.permute.xlu0 %3303
      %3305 = vrot.lane.b32.xlu0 %v2949, 20
      %v3306 = vpop.permute.xlu0 %3305
      %3307 = vrot.lane.b32.xlu0 %v2951, 20
      %v3308 = vpop.permute.xlu0 %3307
      %3309 = vrot.lane.b32.xlu0 %v2954, 20
      %v3310 = vpop.permute.xlu0 %3309
      %3311 = vrot.lane.b32.xlu0 %v2956, 20
      %v3312 = vpop.permute.xlu0 %3311
      %3313 = vrot.lane.b32.xlu0 %v2959, 20
      %v3314 = vpop.permute.xlu0 %3313
      %3315 = vrot.lane.b32.xlu0 %v2961, 20
      %v3316 = vpop.permute.xlu0 %3315
      %3317 = vrot.lane.b32.xlu0 %v2964, 20
      %v3318 = vpop.permute.xlu0 %3317
      %3319 = vrot.lane.b32.xlu0 %v2966, 20
      %v3320 = vpop.permute.xlu0 %3319
      %3321 = vrot.lane.b32.xlu0 %v3258, 20
      %v3322 = vpop.permute.xlu0 %3321
      %3323 = vrot.lane.b32.xlu0 %v3260, 20
      %v3324 = vpop.permute.xlu0 %3323
      %3357 = vrot.lane.b32.xlu0 %v2661, 24
      %v3358 = vpop.permute.xlu0 %3357
      %3359 = vrot.lane.b32.xlu0 %v2538, 24
      %v3360 = vpop.permute.xlu0 %3359
      %3361 = vrot.lane.b32.xlu0 %v2662, 24
      %v3362 = vpop.permute.xlu0 %3361
      %3363 = vrot.lane.b32.xlu0 %v2541, 24
      %v3364 = vpop.permute.xlu0 %3363
      %3365 = vrot.lane.b32.xlu0 %v2663, 24
      %v3366 = vpop.permute.xlu0 %3365
      %3367 = vrot.lane.b32.xlu0 %v2544, 24
      %v3368 = vpop.permute.xlu0 %3367
      %3369 = vrot.lane.b32.xlu0 %v2664, 24
      %v3370 = vpop.permute.xlu0 %3369
      %3371 = vrot.lane.b32.xlu0 %v2547, 24
      %v3372 = vpop.permute.xlu0 %3371
      %3373 = vrot.lane.b32.xlu0 %v2665, 24
      %v3374 = vpop.permute.xlu0 %3373
      %3375 = vrot.lane.b32.xlu0 %v2550, 24
      %v3376 = vpop.permute.xlu0 %3375
      %3377 = vrot.lane.b32.xlu0 %v2666, 24
      %v3378 = vpop.permute.xlu0 %3377
      %3379 = vrot.lane.b32.xlu0 %v2553, 24
      %v3380 = vpop.permute.xlu0 %3379
      %3381 = vrot.lane.b32.xlu0 %v2667, 24
      %v3382 = vpop.permute.xlu0 %3381
      %3383 = vrot.lane.b32.xlu0 %v2556, 24
      %v3384 = vpop.permute.xlu0 %3383
      %3385 = vrot.lane.b32.xlu0 %v2668, 24
      %v3386 = vpop.permute.xlu0 %3385
      %3387 = vrot.lane.b32.xlu0 %v2559, 24
      %v3388 = vpop.permute.xlu0 %3387
      %3389 = vrot.lane.b32.xlu0 %v2669, 24
      %v3390 = vpop.permute.xlu0 %3389
      %3391 = vrot.lane.b32.xlu0 %v2562, 24
      %v3392 = vpop.permute.xlu0 %3391
      %3393 = vrot.lane.b32.xlu0 %v2670, 24
      %v3394 = vpop.permute.xlu0 %3393
      %3395 = vrot.lane.b32.xlu0 %v2565, 24
      %v3396 = vpop.permute.xlu0 %3395
      %3397 = vrot.lane.b32.xlu0 %v2671, 24
      %v3398 = vpop.permute.xlu0 %3397
      %3399 = vrot.lane.b32.xlu0 %v2568, 24
      %v3400 = vpop.permute.xlu0 %3399
      %3401 = vrot.lane.b32.xlu0 %v2672, 24
      %v3402 = vpop.permute.xlu0 %3401
      %3403 = vrot.lane.b32.xlu0 %v2571, 24
      %v3404 = vpop.permute.xlu0 %3403
      %3405 = vrot.lane.b32.xlu0 %v2673, 24
      %v3406 = vpop.permute.xlu0 %3405
      %3407 = vrot.lane.b32.xlu0 %v2574, 24
      %v3408 = vpop.permute.xlu0 %3407
      %3409 = vrot.lane.b32.xlu0 %v2674, 24
      %v3410 = vpop.permute.xlu0 %3409
      %3411 = vrot.lane.b32.xlu0 %v2577, 24
      %v3412 = vpop.permute.xlu0 %3411
      %3413 = vrot.lane.b32.xlu0 %v2675, 24
      %v3414 = vpop.permute.xlu0 %3413
      %3415 = vrot.lane.b32.xlu0 %v2580, 24
      %v3416 = vpop.permute.xlu0 %3415
      %3447 = vrot.lane.b32.xlu0 %v2729, 28
      %v3448 = vpop.permute.xlu0 %3447
      %3449 = vrot.lane.b32.xlu0 %v2731, 28
      %v3450 = vpop.permute.xlu0 %3449
      %3451 = vrot.lane.b32.xlu0 %v2739, 28
      %v3452 = vpop.permute.xlu0 %3451
      %3453 = vrot.lane.b32.xlu0 %v2741, 28
      %v3454 = vpop.permute.xlu0 %3453
      %3455 = vrot.lane.b32.xlu0 %v2744, 28
      %v3456 = vpop.permute.xlu0 %3455
      %3457 = vrot.lane.b32.xlu0 %v2746, 28
      %v3458 = vpop.permute.xlu0 %3457
      %3459 = vrot.lane.b32.xlu0 %v2749, 28
      %v3460 = vpop.permute.xlu0 %3459
      %3461 = vrot.lane.b32.xlu0 %v2751, 28
      %v3462 = vpop.permute.xlu0 %3461
      %3463 = vrot.lane.b32.xlu0 %v2754, 28
      %v3464 = vpop.permute.xlu0 %3463
      %3465 = vrot.lane.b32.xlu0 %v2756, 28
      %v3466 = vpop.permute.xlu0 %3465
      %3467 = vrot.lane.b32.xlu0 %v2759, 28
      %v3468 = vpop.permute.xlu0 %3467
      %3469 = vrot.lane.b32.xlu0 %v2761, 28
      %v3470 = vpop.permute.xlu0 %3469
      %3471 = vrot.lane.b32.xlu0 %v2764, 28
      %v3472 = vpop.permute.xlu0 %3471
      %3473 = vrot.lane.b32.xlu0 %v2766, 28
      %v3474 = vpop.permute.xlu0 %3473
      %3475 = vrot.lane.b32.xlu0 %v2769, 28
      %v3476 = vpop.permute.xlu0 %3475
      %3477 = vrot.lane.b32.xlu0 %v2771, 28
      %v3478 = vpop.permute.xlu0 %3477
      %3479 = vrot.lane.b32.xlu0 %v2774, 28
      %v3480 = vpop.permute.xlu0 %3479
      %3481 = vrot.lane.b32.xlu0 %v2776, 28
      %v3482 = vpop.permute.xlu0 %3481
      %3483 = vrot.lane.b32.xlu0 %v2779, 28
      %v3484 = vpop.permute.xlu0 %3483
      %3485 = vrot.lane.b32.xlu0 %v2781, 28
      %v3486 = vpop.permute.xlu0 %3485
      %3487 = vrot.lane.b32.xlu0 %v2784, 28
      %v3488 = vpop.permute.xlu0 %3487
      %3489 = vrot.lane.b32.xlu0 %v2786, 28
      %v3490 = vpop.permute.xlu0 %3489
      %3491 = vrot.lane.b32.xlu0 %v2789, 28
      %v3492 = vpop.permute.xlu0 %3491
      %3493 = vrot.lane.b32.xlu0 %v2791, 28
      %v3494 = vpop.permute.xlu0 %3493
      %3495 = vrot.lane.b32.xlu0 %v2794, 28
      %v3496 = vpop.permute.xlu0 %3495
      %3497 = vrot.lane.b32.xlu0 %v2796, 28
      %v3498 = vpop.permute.xlu0 %3497
      %3499 = vrot.lane.b32.xlu0 %v2799, 28
      %v3500 = vpop.permute.xlu0 %3499
      %3501 = vrot.lane.b32.xlu0 %v2801, 28
      %v3502 = vpop.permute.xlu0 %3501
      %3503 = vrot.lane.b32.xlu0 %v3157, 28
      %v3504 = vpop.permute.xlu0 %3503
      %3505 = vrot.lane.b32.xlu0 %v3159, 28
      %v3506 = vpop.permute.xlu0 %3505
      %3537 = vrot.lane.b32.xlu0 %v2894, 32
      %v3538 = vpop.permute.xlu0 %3537
      %3539 = vrot.lane.b32.xlu0 %v2896, 32
      %v3540 = vpop.permute.xlu0 %3539
      %3541 = vrot.lane.b32.xlu0 %v2904, 32
      %v3542 = vpop.permute.xlu0 %3541
      %3543 = vrot.lane.b32.xlu0 %v2906, 32
      %v3544 = vpop.permute.xlu0 %3543
      %3545 = vrot.lane.b32.xlu0 %v2909, 32
      %v3546 = vpop.permute.xlu0 %3545
      %3547 = vrot.lane.b32.xlu0 %v2911, 32
      %v3548 = vpop.permute.xlu0 %3547
      %3549 = vrot.lane.b32.xlu0 %v2914, 32
      %v3550 = vpop.permute.xlu0 %3549
      %3551 = vrot.lane.b32.xlu0 %v2916, 32
      %v3552 = vpop.permute.xlu0 %3551
      %3553 = vrot.lane.b32.xlu0 %v2919, 32
      %v3554 = vpop.permute.xlu0 %3553
      %3555 = vrot.lane.b32.xlu0 %v2921, 32
      %v3556 = vpop.permute.xlu0 %3555
      %3557 = vrot.lane.b32.xlu0 %v2924, 32
      %v3558 = vpop.permute.xlu0 %3557
      %3559 = vrot.lane.b32.xlu0 %v2926, 32
      %v3560 = vpop.permute.xlu0 %3559
      %3561 = vrot.lane.b32.xlu0 %v2929, 32
      %v3562 = vpop.permute.xlu0 %3561
      %3563 = vrot.lane.b32.xlu0 %v2931, 32
      %v3564 = vpop.permute.xlu0 %3563
      %3565 = vrot.lane.b32.xlu0 %v2934, 32
      %v3566 = vpop.permute.xlu0 %3565
      %3567 = vrot.lane.b32.xlu0 %v2936, 32
      %v3568 = vpop.permute.xlu0 %3567
      %3569 = vrot.lane.b32.xlu0 %v2939, 32
      %v3570 = vpop.permute.xlu0 %3569
      %3571 = vrot.lane.b32.xlu0 %v2941, 32
      %v3572 = vpop.permute.xlu0 %3571
      %3573 = vrot.lane.b32.xlu0 %v2944, 32
      %v3574 = vpop.permute.xlu0 %3573
      %3575 = vrot.lane.b32.xlu0 %v2946, 32
      %v3576 = vpop.permute.xlu0 %3575
      %3577 = vrot.lane.b32.xlu0 %v2949, 32
      %v3578 = vpop.permute.xlu0 %3577
      %3579 = vrot.lane.b32.xlu0 %v2951, 32
      %v3580 = vpop.permute.xlu0 %3579
      %3581 = vrot.lane.b32.xlu0 %v2954, 32
      %v3582 = vpop.permute.xlu0 %3581
      %3583 = vrot.lane.b32.xlu0 %v2956, 32
      %v3584 = vpop.permute.xlu0 %3583
      %3585 = vrot.lane.b32.xlu0 %v2959, 32
      %v3586 = vpop.permute.xlu0 %3585
      %3587 = vrot.lane.b32.xlu0 %v2961, 32
      %v3588 = vpop.permute.xlu0 %3587
      %3589 = vrot.lane.b32.xlu0 %v2964, 32
      %v3590 = vpop.permute.xlu0 %3589
      %3591 = vrot.lane.b32.xlu0 %v2966, 32
      %v3592 = vpop.permute.xlu0 %3591
      %3593 = vrot.lane.b32.xlu0 %v3258, 32
      %v3594 = vpop.permute.xlu0 %3593
      %3595 = vrot.lane.b32.xlu0 %v3260, 32
      %v3596 = vpop.permute.xlu0 %3595
      %v3627 = vsel %vm1555, %v2661, %v2803
      %v3628 = vsel %vm1555, %v2538, %v2805
      %v3629 = vsel %vm1555, %v2660, %v2807
      %v3630 = vsel %vm1555, %v2535, %v2809
      %v3631 = vsel %vm1555, %v2662, %v2811
      %v3632 = vsel %vm1555, %v2541, %v2813
      %v3633 = vsel %vm1555, %v2663, %v2815
      %v3634 = vsel %vm1555, %v2544, %v2817
      %v3635 = vsel %vm1555, %v2664, %v2819
      %v3636 = vsel %vm1555, %v2547, %v2821
      %v3637 = vsel %vm1555, %v2665, %v2823
      %v3638 = vsel %vm1555, %v2550, %v2825
      %v3639 = vsel %vm1555, %v2666, %v2827
      %v3640 = vsel %vm1555, %v2553, %v2829
      %v3641 = vsel %vm1555, %v2667, %v2831
      %v3642 = vsel %vm1555, %v2556, %v2833
      %v3643 = vsel %vm1555, %v2668, %v2835
      %v3644 = vsel %vm1555, %v2559, %v2837
      %v3645 = vsel %vm1555, %v2669, %v2839
      %v3646 = vsel %vm1555, %v2562, %v2841
      %v3647 = vsel %vm1555, %v2670, %v2843
      %v3648 = vsel %vm1555, %v2565, %v2845
      %v3649 = vsel %vm1555, %v2671, %v2847
      %v3650 = vsel %vm1555, %v2568, %v2849
      %v3651 = vsel %vm1555, %v2672, %v2851
      %v3652 = vsel %vm1555, %v2571, %v2853
      %v3653 = vsel %vm1555, %v2673, %v2855
      %v3654 = vsel %vm1555, %v2574, %v2857
      %v3655 = vsel %vm1555, %v2674, %v2859
      %v3656 = vsel %vm1555, %v2577, %v2861
      %v3657 = vsel %vm1586, %v3627, %v2968
      %v3658 = vsel %vm1586, %v3628, %v2970
      %v3659 = vsel %vm1586, %v3629, %v2972
      %v3660 = vsel %vm1586, %v3630, %v2974
      %v3661 = vsel %vm1586, %v3631, %v2976
      %v3662 = vsel %vm1586, %v3632, %v2978
      %v3663 = vsel %vm1586, %v3633, %v2980
      %v3664 = vsel %vm1586, %v3634, %v2982
      %v3665 = vsel %vm1586, %v3635, %v2984
      %v3666 = vsel %vm1586, %v3636, %v2986
      %v3667 = vsel %vm1586, %v3637, %v2988
      %v3668 = vsel %vm1586, %v3638, %v2990
      %v3669 = vsel %vm1586, %v3639, %v2992
      %v3670 = vsel %vm1586, %v3640, %v2994
      %v3671 = vsel %vm1586, %v3641, %v2996
      %v3672 = vsel %vm1586, %v3642, %v2998
      %v3673 = vsel %vm1586, %v3643, %v3000
      %v3674 = vsel %vm1586, %v3644, %v3002
      %v3675 = vsel %vm1586, %v3645, %v3004
      %v3676 = vsel %vm1586, %v3646, %v3006
      %v3677 = vsel %vm1586, %v3647, %v3008
      %v3678 = vsel %vm1586, %v3648, %v3010
      %v3679 = vsel %vm1586, %v3649, %v3012
      %v3680 = vsel %vm1586, %v3650, %v3014
      %v3681 = vsel %vm1586, %v3651, %v3016
      %v3682 = vsel %vm1586, %v3652, %v3018
      %v3683 = vsel %vm1586, %v3653, %v3020
      %v3684 = vsel %vm1586, %v3654, %v3022
      %v3685 = vsel %vm1586, %v3655, %v3024
      %v3686 = vsel %vm1586, %v3656, %v3026
      %v3687 = vsel %vm1617, %v3657, %v3059
      %v3688 = vsel %vm1617, %v3658, %v3061
      %v3689 = vsel %vm1617, %v3659, %v3063
      %v3690 = vsel %vm1617, %v3660, %v3065
      %v3691 = vsel %vm1617, %v3657, %v3067
      %v3692 = vsel %vm1617, %v3658, %v3069
      %v3693 = vsel %vm1617, %v3661, %v3071
      %v3694 = vsel %vm1617, %v3662, %v3073
      %v3695 = vsel %vm1617, %v3663, %v3075
      %v3696 = vsel %vm1617, %v3664, %v3077
      %v3697 = vsel %vm1617, %v3665, %v3079
      %v3698 = vsel %vm1617, %v3666, %v3081
      %v3699 = vsel %vm1617, %v3667, %v3083
      %v3700 = vsel %vm1617, %v3668, %v3085
      %v3701 = vsel %vm1617, %v3669, %v3087
      %v3702 = vsel %vm1617, %v3670, %v3089
      %v3703 = vsel %vm1617, %v3671, %v3091
      %v3704 = vsel %vm1617, %v3672, %v3093
      %v3705 = vsel %vm1617, %v3673, %v3095
      %v3706 = vsel %vm1617, %v3674, %v3097
      %v3707 = vsel %vm1617, %v3675, %v3099
      %v3708 = vsel %vm1617, %v3676, %v3101
      %v3709 = vsel %vm1617, %v3677, %v3103
      %v3710 = vsel %vm1617, %v3678, %v3105
      %v3711 = vsel %vm1617, %v3679, %v3107
      %v3712 = vsel %vm1617, %v3680, %v3109
      %v3713 = vsel %vm1617, %v3681, %v3111
      %v3714 = vsel %vm1617, %v3682, %v3113
      %v3715 = vsel %vm1617, %v3683, %v3115
      %v3716 = vsel %vm1617, %v3684, %v3117
      %v3717 = vsel %vm1617, %v3685, %v3119
      %v3718 = vsel %vm1617, %v3686, %v3121
      %v3719 = vsel %vm1650, %v3687, %v3161
      %v3720 = vsel %vm1650, %v3688, %v3163
      %v3721 = vsel %vm1650, %v3689, %v3165
      %v3722 = vsel %vm1650, %v3690, %v3167
      %v3723 = vsel %vm1650, %v3691, %v3169
      %v3724 = vsel %vm1650, %v3692, %v3171
      %v3725 = vsel %vm1650, %v3693, %v3173
      %v3726 = vsel %vm1650, %v3694, %v3175
      %v3727 = vsel %vm1650, %v3695, %v3177
      %v3728 = vsel %vm1650, %v3696, %v3179
      %v3729 = vsel %vm1650, %v3697, %v3181
      %v3730 = vsel %vm1650, %v3698, %v3183
      %v3731 = vsel %vm1650, %v3699, %v3185
      %v3732 = vsel %vm1650, %v3700, %v3187
      %v3733 = vsel %vm1650, %v3701, %v3189
      %v3734 = vsel %vm1650, %v3702, %v3191
      %v3735 = vsel %vm1650, %v3703, %v3193
      %v3736 = vsel %vm1650, %v3704, %v3195
      %v3737 = vsel %vm1650, %v3705, %v3197
      %v3738 = vsel %vm1650, %v3706, %v3199
      %v3739 = vsel %vm1650, %v3707, %v3201
      %v3740 = vsel %vm1650, %v3708, %v3203
      %v3741 = vsel %vm1650, %v3709, %v3205
      %v3742 = vsel %vm1650, %v3710, %v3207
      %v3743 = vsel %vm1650, %v3711, %v3209
      %v3744 = vsel %vm1650, %v3712, %v3211
      %v3745 = vsel %vm1650, %v3713, %v3213
      %v3746 = vsel %vm1650, %v3714, %v3215
      %v3747 = vsel %vm1650, %v3715, %v3217
      %v3748 = vsel %vm1650, %v3716, %v3219
      %v3749 = vsel %vm1650, %v3717, %v3221
      %v3750 = vsel %vm1650, %v3718, %v3223
      %v3751 = vsel %vm1683, %v3719, %v3262
      %v3752 = vsel %vm1683, %v3720, %v3264
      %v3753 = vsel %vm1683, %v3721, %v3266
      %v3754 = vsel %vm1683, %v3722, %v3268
      %v3755 = vsel %vm1683, %v3723, %v3270
      %v3756 = vsel %vm1683, %v3724, %v3272
      %v3757 = vsel %vm1683, %v3725, %v3274
      %v3758 = vsel %vm1683, %v3726, %v3276
      %v3759 = vsel %vm1683, %v3727, %v3278
      %v3760 = vsel %vm1683, %v3728, %v3280
      %v3761 = vsel %vm1683, %v3729, %v3282
      %v3762 = vsel %vm1683, %v3730, %v3284
      %v3763 = vsel %vm1683, %v3731, %v3286
      %v3764 = vsel %vm1683, %v3732, %v3288
      %v3765 = vsel %vm1683, %v3733, %v3290
      %v3766 = vsel %vm1683, %v3734, %v3292
      %v3767 = vsel %vm1683, %v3735, %v3294
      %v3768 = vsel %vm1683, %v3736, %v3296
      %v3769 = vsel %vm1683, %v3737, %v3298
      %v3770 = vsel %vm1683, %v3738, %v3300
      %v3771 = vsel %vm1683, %v3739, %v3302
      %v3772 = vsel %vm1683, %v3740, %v3304
      %v3773 = vsel %vm1683, %v3741, %v3306
      %v3774 = vsel %vm1683, %v3742, %v3308
      %v3775 = vsel %vm1683, %v3743, %v3310
      %v3776 = vsel %vm1683, %v3744, %v3312
      %v3777 = vsel %vm1683, %v3745, %v3314
      %v3778 = vsel %vm1683, %v3746, %v3316
      %v3779 = vsel %vm1683, %v3747, %v3318
      %v3780 = vsel %vm1683, %v3748, %v3320
      %v3781 = vsel %vm1683, %v3749, %v3322
      %v3782 = vsel %vm1683, %v3750, %v3324
      %v3783 = vsel %vm1716, %v3751, %v3358
      %v3784 = vsel %vm1716, %v3752, %v3360
      %v3785 = vsel %vm1716, %v3753, %v3362
      %v3786 = vsel %vm1716, %v3754, %v3364
      %v3787 = vsel %vm1716, %v3755, %v3366
      %v3788 = vsel %vm1716, %v3756, %v3368
      %v3789 = vsel %vm1716, %v3757, %v3370
      %v3790 = vsel %vm1716, %v3758, %v3372
      %v3791 = vsel %vm1716, %v3759, %v3374
      %v3792 = vsel %vm1716, %v3760, %v3376
      %v3793 = vsel %vm1716, %v3761, %v3378
      %v3794 = vsel %vm1716, %v3762, %v3380
      %v3795 = vsel %vm1716, %v3763, %v3382
      %v3796 = vsel %vm1716, %v3764, %v3384
      %v3797 = vsel %vm1716, %v3765, %v3386
      %v3798 = vsel %vm1716, %v3766, %v3388
      %v3799 = vsel %vm1716, %v3767, %v3390
      %v3800 = vsel %vm1716, %v3768, %v3392
      %v3801 = vsel %vm1716, %v3769, %v3394
      %v3802 = vsel %vm1716, %v3770, %v3396
      %v3803 = vsel %vm1716, %v3771, %v3398
      %v3804 = vsel %vm1716, %v3772, %v3400
      %v3805 = vsel %vm1716, %v3773, %v3402
      %v3806 = vsel %vm1716, %v3774, %v3404
      %v3807 = vsel %vm1716, %v3775, %v3406
      %v3808 = vsel %vm1716, %v3776, %v3408
      %v3809 = vsel %vm1716, %v3777, %v3410
      %v3810 = vsel %vm1716, %v3778, %v3412
      %v3811 = vsel %vm1716, %v3779, %v3414
      %v3812 = vsel %vm1716, %v3780, %v3416
      %v3813 = vsel %vm1716, %v3781, %v3410
      %v3814 = vsel %vm1716, %v3782, %v3412
      %v3815 = vsel %vm1749, %v3783, %v3448
      %v3816 = vsel %vm1749, %v3784, %v3450
      %v3817 = vsel %vm1749, %v3785, %v3452
      %v3818 = vsel %vm1749, %v3786, %v3454
      %v3819 = vsel %vm1749, %v3787, %v3456
      %v3820 = vsel %vm1749, %v3788, %v3458
      %v3821 = vsel %vm1749, %v3789, %v3460
      %v3822 = vsel %vm1749, %v3790, %v3462
      %v3823 = vsel %vm1749, %v3791, %v3464
      %v3824 = vsel %vm1749, %v3792, %v3466
      %v3825 = vsel %vm1749, %v3793, %v3468
      %v3826 = vsel %vm1749, %v3794, %v3470
      %v3827 = vsel %vm1749, %v3795, %v3472
      %v3828 = vsel %vm1749, %v3796, %v3474
      %v3829 = vsel %vm1749, %v3797, %v3476
      %v3830 = vsel %vm1749, %v3798, %v3478
      %v3831 = vsel %vm1749, %v3799, %v3480
      %v3832 = vsel %vm1749, %v3800, %v3482
      %v3833 = vsel %vm1749, %v3801, %v3484
      %v3834 = vsel %vm1749, %v3802, %v3486
      %v3835 = vsel %vm1749, %v3803, %v3488
      %v3836 = vsel %vm1749, %v3804, %v3490
      %v3837 = vsel %vm1749, %v3805, %v3492
      %v3838 = vsel %vm1749, %v3806, %v3494
      %v3839 = vsel %vm1749, %v3807, %v3496
      %v3840 = vsel %vm1749, %v3808, %v3498
      %v3841 = vsel %vm1749, %v3809, %v3500
      %v3842 = vsel %vm1749, %v3810, %v3502
      %v3843 = vsel %vm1749, %v3811, %v3504
      %v3844 = vsel %vm1749, %v3812, %v3506
      %v3845 = vsel %vm1749, %v3813, %v3500
      %v3846 = vsel %vm1749, %v3814, %v3502
      %v3847 = vsel %vm1782, %v3815, %v3538
      %v3848 = vsel %vm1782, %v3816, %v3540
      %v3849 = vsel %vm1782, %v3817, %v3542
      %v3850 = vsel %vm1782, %v3818, %v3544
      %v3851 = vsel %vm1782, %v3819, %v3546
      %v3852 = vsel %vm1782, %v3820, %v3548
      %v3853 = vsel %vm1782, %v3821, %v3550
      %v3854 = vsel %vm1782, %v3822, %v3552
      %v3855 = vsel %vm1782, %v3823, %v3554
      %v3856 = vsel %vm1782, %v3824, %v3556
      %v3857 = vsel %vm1782, %v3825, %v3558
      %v3858 = vsel %vm1782, %v3826, %v3560
      %v3859 = vsel %vm1782, %v3827, %v3562
      %v3860 = vsel %vm1782, %v3828, %v3564
      %v3861 = vsel %vm1782, %v3829, %v3566
      %v3862 = vsel %vm1782, %v3830, %v3568
      %v3863 = vsel %vm1782, %v3831, %v3570
      %v3864 = vsel %vm1782, %v3832, %v3572
      %v3865 = vsel %vm1782, %v3833, %v3574
      %v3866 = vsel %vm1782, %v3834, %v3576
      %v3867 = vsel %vm1782, %v3835, %v3578
      %v3868 = vsel %vm1782, %v3836, %v3580
      %v3869 = vsel %vm1782, %v3837, %v3582
      %v3870 = vsel %vm1782, %v3838, %v3584
      %v3871 = vsel %vm1782, %v3839, %v3586
      %v3872 = vsel %vm1782, %v3840, %v3588
      %v3873 = vsel %vm1782, %v3841, %v3590
      %v3874 = vsel %vm1782, %v3842, %v3592
      %v3875 = vsel %vm1782, %v3843, %v3594
      %v3876 = vsel %vm1782, %v3844, %v3596
      %v3877 = vsel %vm1782, %v3845, %v3590
      %v3878 = vsel %vm1782, %v3846, %v3592
      %v3880 = vsel %vm1815, %v3847, 0
      %v3883 = vsel %vm1815, %v3848, 0
      %v3886 = vsel %vm1815, %v3849, 0
      %v3889 = vsel %vm1815, %v3850, 0
      %v3892 = vsel %vm1815, %v3851, 0
      %v3895 = vsel %vm1815, %v3852, 0
      %v3898 = vsel %vm1815, %v3853, 0
      %v3901 = vsel %vm1815, %v3854, 0
      %v3904 = vsel %vm1815, %v3855, 0
      %v3907 = vsel %vm1815, %v3856, 0
      %v3910 = vsel %vm1815, %v3857, 0
      %v3913 = vsel %vm1815, %v3858, 0
      %v3916 = vsel %vm1815, %v3859, 0
      %v3919 = vsel %vm1815, %v3860, 0
      %v3922 = vsel %vm1815, %v3861, 0
      %v3925 = vsel %vm1815, %v3862, 0
      %v3928 = vsel %vm1815, %v3863, 0
      %v3931 = vsel %vm1815, %v3864, 0
      %v3934 = vsel %vm1815, %v3865, 0
      %v3937 = vsel %vm1815, %v3866, 0
      %v3940 = vsel %vm1815, %v3867, 0
      %v3943 = vsel %vm1815, %v3868, 0
      %v3946 = vsel %vm1815, %v3869, 0
      %v3949 = vsel %vm1815, %v3870, 0
      %v3952 = vsel %vm1815, %v3871, 0
      %v3955 = vsel %vm1815, %v3872, 0
      %v3958 = vsel %vm1815, %v3873, 0
      %v3961 = vsel %vm1815, %v3874, 0
      %v3964 = vsel %vm1815, %v3875, 0
      %v3967 = vsel %vm1815, %v3876, 0
      %v3970 = vsel %vm1815, %v3877, 0
      %v3973 = vsel %vm1815, %v3878, 0
      %v3976 = vsel %vm1912, %v2696, 0
      %3978 = vmatprep.subr.mxu0 0.0
      %3979 = vmatpush1.msra.mxu0 0.0
      %3980 = vmatprep.subr.mxu0 0.0
      %3981 = vmatpush1.msra.mxu0 0.0
      %3982 = vmatprep.subr.mxu0 0.0
      %3983 = vmatpush1.msra.mxu0 0.0
      %3984 = vmatprep.subr.mxu0 0.0
      %3985 = vmatpush1.msra.mxu0 0.0
      %3986 = vmatprep.subr.mxu0 0.0
      %3987 = vmatpush1.msra.mxu0 0.0
      %3988 = vmatprep.subr.mxu0 0.0
      %3989 = vmatpush1.msra.mxu0 0.0
      %3990 = vmatprep.subr.mxu0 0.0
      %3991 = vmatpush1.msra.mxu0 0.0
      %3992 = vmatprep.subr.mxu0 0.0
      %3993 = vmatpush1.msra.mxu0 0.0
      %3994 = vmatprep.subr.mxu0 0.0
      %3995 = vmatpush1.msra.mxu0 0.0
      %3996 = vmatprep.subr.mxu0 0.0
      %3997 = vmatpush1.msra.mxu0 0.0
      %3998 = vmatprep.subr.mxu0 0.0
      %3999 = vmatpush1.msra.mxu0 0.0
      %4000 = vmatprep.subr.mxu0 0.0
      %4001 = vmatpush1.msra.mxu0 %v3976
      %4002 = vmatprep.subr.mxu0 0.0
      %4003 = vmatpush1.msra.mxu0 %v2695
      %4004 = vmatprep.subr.mxu0 0.0
      %4005 = vmatpush1.msra.mxu0 %v2694
      %4006 = vmatprep.subr.mxu0 0.0
      %4007 = vmatpush1.msra.mxu0 %v2693
      %4008 = vmatprep.subr.mxu0 0.0
      %4009 = vmatpush1.msra.mxu0 %v2692
      %4010 = vmatprep.subr.mxu0 0.0
      %4011 = vmatpush2.msra.mxu0 0.0
      %4012 = vmatprep.subr.mxu0 0.0
      %4013 = vmatpush2.msra.mxu0 0.0
      %4014 = vmatprep.subr.mxu0 0.0
      %4015 = vmatpush2.msra.mxu0 0.0
      %4016 = vmatprep.subr.mxu0 0.0
      %4017 = vmatpush2.msra.mxu0 0.0
      %4018 = vmatprep.subr.mxu0 0.0
      %4019 = vmatpush2.msra.mxu0 0.0
      %4020 = vmatprep.subr.mxu0 0.0
      %4021 = vmatpush2.msra.mxu0 0.0
      %4022 = vmatprep.subr.mxu0 0.0
      %4023 = vmatpush2.msra.mxu0 0.0
      %4024 = vmatprep.subr.mxu0 0.0
      %4025 = vmatpush2.msra.mxu0 0.0
      %4026 = vmatprep.subr.mxu0 0.0
      %4027 = vmatpush2.msra.mxu0 0.0
      %4028 = vmatprep.subr.mxu0 0.0
      %4029 = vmatpush2.msra.mxu0 0.0
      %4030 = vmatprep.subr.mxu0 0.0
      %4031 = vmatpush2.msra.mxu0 0.0
      %4032 = vmatprep.subr.mxu0 0.0
      %4033 = vmatpush2.msra.mxu0 0.0
      %4034 = vmatprep.subr.mxu0 0.0
      %4035 = vmatpush2.msra.mxu0 0.0
      %4036 = vmatprep.subr.mxu0 0.0
      %4037 = vmatpush2.msra.mxu0 0.0
      %4038 = vmatprep.subr.mxu0 0.0
      %4039 = vmatpush2.msra.mxu0 0.0
      %4040 = vmatprep.subr.mxu0 0.0
      %4041 = vmatpush2.msra.mxu0 0.0
      %4042 = vmatprep.mubr.f32.mxu0 0.0
      %4043 = vmatmul.mubr.f32.gmra.mxu0 %v3880
      %v4044 = vpop.f32.mrf.mxu0
      %v4045 = vadd.f32 0.0, %v4044
      %v4046 = vpop.f32.mrf.mxu0
      %4047 = vmatprep.mubr.f32.mxu0 0.0
      %4048 = vmatmul.mubr.f32.gmra.mxu0 %v3883
      %v4049 = vpop.f32.mrf.mxu0
      %v4050 = vadd.f32 0.0, %v4049
      %v4051 = vpop.f32.mrf.mxu0
      %4052 = vmatprep.mubr.f32.mxu0 0.0
      %4053 = vmatmul.mubr.f32.gmra.mxu0 %v3886
      %v4054 = vpop.f32.mrf.mxu0
      %v4055 = vadd.f32 0.0, %v4054
      %v4056 = vpop.f32.mrf.mxu0
      %4057 = vmatprep.mubr.f32.mxu0 0.0
      %4058 = vmatmul.mubr.f32.gmra.mxu0 %v3889
      %v4059 = vpop.f32.mrf.mxu0
      %v4060 = vadd.f32 0.0, %v4059
      %v4061 = vpop.f32.mrf.mxu0
      %4062 = vmatprep.mubr.f32.mxu0 0.0
      %4063 = vmatmul.mubr.f32.gmra.mxu0 %v3892
      %v4064 = vpop.f32.mrf.mxu0
      %v4065 = vadd.f32 0.0, %v4064
      %v4066 = vpop.f32.mrf.mxu0
      %4067 = vmatprep.mubr.f32.mxu0 0.0
      %4068 = vmatmul.mubr.f32.gmra.mxu0 %v3895
      %v4069 = vpop.f32.mrf.mxu0
      %v4070 = vadd.f32 0.0, %v4069
      %v4071 = vpop.f32.mrf.mxu0
      %4072 = vmatprep.mubr.f32.mxu0 0.0
      %4073 = vmatmul.mubr.f32.gmra.mxu0 %v3898
      %v4074 = vpop.f32.mrf.mxu0
      %v4075 = vadd.f32 0.0, %v4074
      %v4076 = vpop.f32.mrf.mxu0
      %4077 = vmatprep.mubr.f32.mxu0 0.0
      %4078 = vmatmul.mubr.f32.gmra.mxu0 %v3901
      %v4079 = vpop.f32.mrf.mxu0
      %v4080 = vadd.f32 0.0, %v4079
      %v4081 = vpop.f32.mrf.mxu0
      %4082 = vmatprep.mubr.f32.mxu0 0.0
      %4083 = vmatmul.mubr.f32.gmra.mxu0 %v3904
      %v4084 = vpop.f32.mrf.mxu0
      %v4085 = vadd.f32 0.0, %v4084
      %v4086 = vpop.f32.mrf.mxu0
      %4087 = vmatprep.mubr.f32.mxu0 0.0
      %4088 = vmatmul.mubr.f32.gmra.mxu0 %v3907
      %v4089 = vpop.f32.mrf.mxu0
      %v4090 = vadd.f32 0.0, %v4089
      %v4091 = vpop.f32.mrf.mxu0
      %4092 = vmatprep.mubr.f32.mxu0 0.0
      %4093 = vmatmul.mubr.f32.gmra.mxu0 %v3910
      %v4094 = vpop.f32.mrf.mxu0
      %v4095 = vadd.f32 0.0, %v4094
      %v4096 = vpop.f32.mrf.mxu0
      %4097 = vmatprep.mubr.f32.mxu0 0.0
      %4098 = vmatmul.mubr.f32.gmra.mxu0 %v3913
      %v4099 = vpop.f32.mrf.mxu0
      %v4100 = vadd.f32 0.0, %v4099
      %v4101 = vpop.f32.mrf.mxu0
      %4102 = vmatprep.mubr.f32.mxu0 0.0
      %4103 = vmatmul.mubr.f32.gmra.mxu0 %v3916
      %v4104 = vpop.f32.mrf.mxu0
      %v4105 = vadd.f32 0.0, %v4104
      %v4106 = vpop.f32.mrf.mxu0
      %4107 = vmatprep.mubr.f32.mxu0 0.0
      %4108 = vmatmul.mubr.f32.gmra.mxu0 %v3919
      %v4109 = vpop.f32.mrf.mxu0
      %v4110 = vadd.f32 0.0, %v4109
      %v4111 = vpop.f32.mrf.mxu0
      %4112 = vmatprep.mubr.f32.mxu0 0.0
      %4113 = vmatmul.mubr.f32.gmra.mxu0 %v3922
      %v4114 = vpop.f32.mrf.mxu0
      %v4115 = vadd.f32 0.0, %v4114
      %v4116 = vpop.f32.mrf.mxu0
      %4117 = vmatprep.mubr.f32.mxu0 0.0
      %4118 = vmatmul.mubr.f32.gmra.mxu0 %v3925
      %v4119 = vpop.f32.mrf.mxu0
      %v4120 = vadd.f32 0.0, %v4119
      %v4121 = vpop.f32.mrf.mxu0
      %4122 = vmatprep.mubr.f32.mxu0 0.0
      %4123 = vmatmul.mubr.f32.gmra.mxu0 %v3928
      %v4124 = vpop.f32.mrf.mxu0
      %v4125 = vadd.f32 0.0, %v4124
      %v4126 = vpop.f32.mrf.mxu0
      %4127 = vmatprep.mubr.f32.mxu0 0.0
      %4128 = vmatmul.mubr.f32.gmra.mxu0 %v3931
      %v4129 = vpop.f32.mrf.mxu0
      %v4130 = vadd.f32 0.0, %v4129
      %v4131 = vpop.f32.mrf.mxu0
      %4132 = vmatprep.mubr.f32.mxu0 0.0
      %4133 = vmatmul.mubr.f32.gmra.mxu0 %v3934
      %v4134 = vpop.f32.mrf.mxu0
      %v4135 = vadd.f32 0.0, %v4134
      %v4136 = vpop.f32.mrf.mxu0
      %4137 = vmatprep.mubr.f32.mxu0 0.0
      %4138 = vmatmul.mubr.f32.gmra.mxu0 %v3937
      %v4139 = vpop.f32.mrf.mxu0
      %v4140 = vadd.f32 0.0, %v4139
      %v4141 = vpop.f32.mrf.mxu0
      %4142 = vmatprep.mubr.f32.mxu0 0.0
      %4143 = vmatmul.mubr.f32.gmra.mxu0 %v3940
      %v4144 = vpop.f32.mrf.mxu0
      %v4145 = vadd.f32 0.0, %v4144
      %v4146 = vpop.f32.mrf.mxu0
      %4147 = vmatprep.mubr.f32.mxu0 0.0
      %4148 = vmatmul.mubr.f32.gmra.mxu0 %v3943
      %v4149 = vpop.f32.mrf.mxu0
      %v4150 = vadd.f32 0.0, %v4149
      %v4151 = vpop.f32.mrf.mxu0
      %4152 = vmatprep.mubr.f32.mxu0 0.0
      %4153 = vmatmul.mubr.f32.gmra.mxu0 %v3946
      %v4154 = vpop.f32.mrf.mxu0
      %v4155 = vadd.f32 0.0, %v4154
      %v4156 = vpop.f32.mrf.mxu0
      %4157 = vmatprep.mubr.f32.mxu0 0.0
      %4158 = vmatmul.mubr.f32.gmra.mxu0 %v3949
      %v4159 = vpop.f32.mrf.mxu0
      %v4160 = vadd.f32 0.0, %v4159
      %v4161 = vpop.f32.mrf.mxu0
      %4162 = vmatprep.mubr.f32.mxu0 0.0
      %4163 = vmatmul.mubr.f32.gmra.mxu0 %v3952
      %v4164 = vpop.f32.mrf.mxu0
      %v4165 = vadd.f32 0.0, %v4164
      %v4166 = vpop.f32.mrf.mxu0
      %4167 = vmatprep.mubr.f32.mxu0 0.0
      %4168 = vmatmul.mubr.f32.gmra.mxu0 %v3955
      %v4169 = vpop.f32.mrf.mxu0
      %v4170 = vadd.f32 0.0, %v4169
      %v4171 = vpop.f32.mrf.mxu0
      %4172 = vmatprep.mubr.f32.mxu0 0.0
      %4173 = vmatmul.mubr.f32.gmra.mxu0 %v3958
      %v4174 = vpop.f32.mrf.mxu0
      %v4175 = vadd.f32 0.0, %v4174
      %v4176 = vpop.f32.mrf.mxu0
      %4177 = vmatprep.mubr.f32.mxu0 0.0
      %4178 = vmatmul.mubr.f32.gmra.mxu0 %v3961
      %v4179 = vpop.f32.mrf.mxu0
      %v4180 = vadd.f32 0.0, %v4179
      %v4181 = vpop.f32.mrf.mxu0
      %4182 = vmatprep.mubr.f32.mxu0 0.0
      %4183 = vmatmul.mubr.f32.gmra.mxu0 %v3964
      %v4184 = vpop.f32.mrf.mxu0
      %v4185 = vadd.f32 0.0, %v4184
      %v4186 = vpop.f32.mrf.mxu0
      %4187 = vmatprep.mubr.f32.mxu0 0.0
      %4188 = vmatmul.mubr.f32.gmra.mxu0 %v3967
      %v4189 = vpop.f32.mrf.mxu0
      %v4190 = vadd.f32 0.0, %v4189
      %v4191 = vpop.f32.mrf.mxu0
      %4192 = vmatprep.mubr.f32.mxu0 0.0
      %4193 = vmatmul.mubr.f32.gmra.mxu0 %v3970
      %v4194 = vpop.f32.mrf.mxu0
      %v4195 = vadd.f32 0.0, %v4194
      %v4196 = vpop.f32.mrf.mxu0
      %4197 = vmatprep.mubr.f32.mxu0 0.0
      %4198 = vmatmul.mubr.f32.gmra.mxu0 %v3973
      %v4199 = vpop.f32.mrf.mxu0
      %v4200 = vadd.f32 0.0, %v4199
      %v4201 = vpop.f32.mrf.mxu0
      %4202 = vdwg.mxu0
      %v4203 = vld [vmem:[%s353] sm:$0x1]
      %v4204 = vld [vmem:[%s356] sm:$0x1]
      %v4205 = vsel %vm1555, %v4045, 0.0
      %v4206 = vsel %vm1555, %v4050, 0.0
      %v4207 = vadd.f32 %v4205, %v4206
      %v4208 = vsel %vm1555, %v4055, 0.0
      %v4209 = vadd.f32 %v4207, %v4208
      %v4210 = vsel %vm1555, %v4060, 0.0
      %v4211 = vadd.f32 %v4209, %v4210
      %v4212 = vsel %vm1555, %v4065, 0.0
      %v4213 = vadd.f32 %v4211, %v4212
      %v4214 = vsel %vm1555, %v4070, 0.0
      %v4215 = vadd.f32 %v4213, %v4214
      %v4216 = vsel %vm1555, %v4075, 0.0
      %v4217 = vadd.f32 %v4215, %v4216
      %v4218 = vsel %vm1555, %v4080, 0.0
      %v4219 = vadd.f32 %v4217, %v4218
      %v4220 = vsel %vm1555, %v4085, 0.0
      %v4221 = vadd.f32 %v4219, %v4220
      %v4222 = vsel %vm1555, %v4090, 0.0
      %v4223 = vadd.f32 %v4221, %v4222
      %v4224 = vsel %vm1555, %v4095, 0.0
      %v4225 = vadd.f32 %v4223, %v4224
      %v4226 = vsel %vm1555, %v4100, 0.0
      %v4227 = vadd.f32 %v4225, %v4226
      %v4228 = vsel %vm1555, %v4105, 0.0
      %v4229 = vadd.f32 %v4227, %v4228
      %v4230 = vsel %vm1555, %v4110, 0.0
      %v4231 = vadd.f32 %v4229, %v4230
      %v4232 = vsel %vm1555, %v4115, 0.0
      %v4233 = vadd.f32 %v4231, %v4232
      %v4234 = vsel %vm1555, %v4120, 0.0
      %v4235 = vadd.f32 %v4233, %v4234
      %v4236 = vsel %vm1555, %v4125, 0.0
      %v4237 = vadd.f32 %v4235, %v4236
      %v4238 = vsel %vm1555, %v4130, 0.0
      %v4239 = vadd.f32 %v4237, %v4238
      %v4240 = vsel %vm1555, %v4135, 0.0
      %v4241 = vadd.f32 %v4239, %v4240
      %v4242 = vsel %vm1555, %v4140, 0.0
      %v4243 = vadd.f32 %v4241, %v4242
      %v4244 = vsel %vm1555, %v4145, 0.0
      %v4245 = vadd.f32 %v4243, %v4244
      %v4246 = vsel %vm1555, %v4150, 0.0
      %v4247 = vadd.f32 %v4245, %v4246
      %v4248 = vsel %vm1555, %v4155, 0.0
      %v4249 = vadd.f32 %v4247, %v4248
      %v4250 = vsel %vm1555, %v4160, 0.0
      %v4251 = vadd.f32 %v4249, %v4250
      %v4252 = vsel %vm1555, %v4165, 0.0
      %v4253 = vadd.f32 %v4251, %v4252
      %v4254 = vsel %vm1555, %v4170, 0.0
      %v4255 = vadd.f32 %v4253, %v4254
      %v4256 = vsel %vm1555, %v4175, 0.0
      %v4257 = vadd.f32 %v4255, %v4256
      %v4258 = vsel %vm1555, %v4180, 0.0
      %v4259 = vadd.f32 %v4257, %v4258
      %v4260 = vsel %vm1555, %v4185, 0.0
      %v4261 = vadd.f32 %v4259, %v4260
      %v4262 = vsel %vm1555, %v4190, 0.0
      %v4263 = vadd.f32 %v4261, %v4262
      %v4264 = vsel %vm1555, %v4195, 0.0
      %v4265 = vadd.f32 %v4263, %v4264
      %v4266 = vsel %vm1555, %v4200, 0.0
      %v4267 = vadd.f32 %v4265, %v4266
      %v4268 = vrot.slane %v4267, 4
      %v4269 = vadd.f32 %v4267, %v4268
      %v4270 = vrot.slane %v4269, 2
      %v4271 = vadd.f32 %v4269, %v4270
      %v4272 = vrot.slane %v4271, 1
      %v4273 = vadd.f32 %v4271, %v4272
      %v4274 = vmul.f32 %v4045, %v4045
      %v4275 = vmul.f32 %v4050, %v4050
      %v4276 = vmul.f32 %v4055, %v4055
      %v4277 = vmul.f32 %v4060, %v4060
      %v4278 = vmul.f32 %v4065, %v4065
      %v4279 = vmul.f32 %v4070, %v4070
      %v4280 = vmul.f32 %v4075, %v4075
      %v4281 = vmul.f32 %v4080, %v4080
      %v4282 = vmul.f32 %v4085, %v4085
      %v4283 = vmul.f32 %v4090, %v4090
      %v4284 = vmul.f32 %v4095, %v4095
      %v4285 = vmul.f32 %v4100, %v4100
      %v4286 = vmul.f32 %v4105, %v4105
      %v4287 = vmul.f32 %v4110, %v4110
      %v4288 = vmul.f32 %v4115, %v4115
      %v4289 = vmul.f32 %v4120, %v4120
      %v4290 = vmul.f32 %v4125, %v4125
      %v4291 = vmul.f32 %v4130, %v4130
      %v4292 = vmul.f32 %v4135, %v4135
      %v4293 = vmul.f32 %v4140, %v4140
      %v4294 = vmul.f32 %v4145, %v4145
      %v4295 = vmul.f32 %v4150, %v4150
      %v4296 = vmul.f32 %v4155, %v4155
      %v4297 = vmul.f32 %v4160, %v4160
      %v4298 = vmul.f32 %v4165, %v4165
      %v4299 = vmul.f32 %v4170, %v4170
      %v4300 = vmul.f32 %v4175, %v4175
      %v4301 = vmul.f32 %v4180, %v4180
      %v4302 = vmul.f32 %v4185, %v4185
      %v4303 = vmul.f32 %v4190, %v4190
      %v4304 = vmul.f32 %v4195, %v4195
      %v4305 = vmul.f32 %v4200, %v4200
      %v4306 = vsel %vm1555, %v4274, 0.0
      %v4307 = vsel %vm1555, %v4275, 0.0
      %v4308 = vadd.f32 %v4306, %v4307
      %v4309 = vsel %vm1555, %v4276, 0.0
      %v4310 = vadd.f32 %v4308, %v4309
      %v4311 = vsel %vm1555, %v4277, 0.0
      %v4312 = vadd.f32 %v4310, %v4311
      %v4313 = vsel %vm1555, %v4278, 0.0
      %v4314 = vadd.f32 %v4312, %v4313
      %v4315 = vsel %vm1555, %v4279, 0.0
      %v4316 = vadd.f32 %v4314, %v4315
      %v4317 = vsel %vm1555, %v4280, 0.0
      %v4318 = vadd.f32 %v4316, %v4317
      %v4319 = vsel %vm1555, %v4281, 0.0
      %v4320 = vadd.f32 %v4318, %v4319
      %v4321 = vsel %vm1555, %v4282, 0.0
      %v4322 = vadd.f32 %v4320, %v4321
      %v4323 = vsel %vm1555, %v4283, 0.0
      %v4324 = vadd.f32 %v4322, %v4323
      %v4325 = vsel %vm1555, %v4284, 0.0
      %v4326 = vadd.f32 %v4324, %v4325
      %v4327 = vsel %vm1555, %v4285, 0.0
      %v4328 = vadd.f32 %v4326, %v4327
      %v4329 = vsel %vm1555, %v4286, 0.0
      %v4330 = vadd.f32 %v4328, %v4329
      %v4331 = vsel %vm1555, %v4287, 0.0
      %v4332 = vadd.f32 %v4330, %v4331
      %v4333 = vsel %vm1555, %v4288, 0.0
      %v4334 = vadd.f32 %v4332, %v4333
      %v4335 = vsel %vm1555, %v4289, 0.0
      %v4336 = vadd.f32 %v4334, %v4335
      %v4337 = vsel %vm1555, %v4290, 0.0
      %v4338 = vadd.f32 %v4336, %v4337
      %v4339 = vsel %vm1555, %v4291, 0.0
      %v4340 = vadd.f32 %v4338, %v4339
      %v4341 = vsel %vm1555, %v4292, 0.0
      %v4342 = vadd.f32 %v4340, %v4341
      %v4343 = vsel %vm1555, %v4293, 0.0
      %v4344 = vadd.f32 %v4342, %v4343
      %v4345 = vsel %vm1555, %v4294, 0.0
      %v4346 = vadd.f32 %v4344, %v4345
      %v4347 = vsel %vm1555, %v4295, 0.0
      %v4348 = vadd.f32 %v4346, %v4347
      %v4349 = vsel %vm1555, %v4296, 0.0
      %v4350 = vadd.f32 %v4348, %v4349
      %v4351 = vsel %vm1555, %v4297, 0.0
      %v4352 = vadd.f32 %v4350, %v4351
      %v4353 = vsel %vm1555, %v4298, 0.0
      %v4354 = vadd.f32 %v4352, %v4353
      %v4355 = vsel %vm1555, %v4299, 0.0
      %v4356 = vadd.f32 %v4354, %v4355
      %v4357 = vsel %vm1555, %v4300, 0.0
      %v4358 = vadd.f32 %v4356, %v4357
      %v4359 = vsel %vm1555, %v4301, 0.0
      %v4360 = vadd.f32 %v4358, %v4359
      %v4361 = vsel %vm1555, %v4302, 0.0
      %v4362 = vadd.f32 %v4360, %v4361
      %v4363 = vsel %vm1555, %v4303, 0.0
      %v4364 = vadd.f32 %v4362, %v4363
      %v4365 = vsel %vm1555, %v4304, 0.0
      %v4366 = vadd.f32 %v4364, %v4365
      %v4367 = vsel %vm1555, %v4305, 0.0
      %v4368 = vadd.f32 %v4366, %v4367
      %v4369 = vrot.slane %v4368, 4
      %v4370 = vadd.f32 %v4368, %v4369
      %v4371 = vrot.slane %v4370, 2
      %v4372 = vadd.f32 %v4370, %v4371
      %v4373 = vrot.slane %v4372, 1
      %v4374 = vadd.f32 %v4372, %v4373
      %v4375 = vmul.f32 %v4273, 0.00390625
      %v4376 = vmul.f32 %v4374, 0.00390625
      %v4377 = vmul.f32 %v4375, %v4375
      %v4378 = vsub.f32 %v4376, %v4377
      %v4379 = vadd.f32 %v4378, 1e-05
      %v4380 = vrsqrt.pop %v4379
      %v4381 = vmul.f32 %v4203, %v4380
      %v4382 = vmul.f32 %v4375, %v4381
      %v4383 = vsub.f32 %v4204, %v4382
      %v4385 = vlaneseq
      %v4386 = vshrl.u32 %v4385, 7
      %v4387 = vsub.s32 0, %v4386
      %v4388 = vrot.slane %v4381, %v4387
      %v4390 = vmul.f32 %v4045, %v4388
      %v4391 = vmul.f32 %v4050, %v4388
      %v4392 = vmul.f32 %v4055, %v4388
      %v4393 = vmul.f32 %v4060, %v4388
      %v4394 = vmul.f32 %v4065, %v4388
      %v4395 = vmul.f32 %v4070, %v4388
      %v4396 = vmul.f32 %v4075, %v4388
      %v4397 = vmul.f32 %v4080, %v4388
      %v4398 = vmul.f32 %v4085, %v4388
      %v4399 = vmul.f32 %v4090, %v4388
      %v4400 = vmul.f32 %v4095, %v4388
      %v4401 = vmul.f32 %v4100, %v4388
      %v4402 = vmul.f32 %v4105, %v4388
      %v4403 = vmul.f32 %v4110, %v4388
      %v4404 = vmul.f32 %v4115, %v4388
      %v4405 = vmul.f32 %v4120, %v4388
      %v4406 = vmul.f32 %v4125, %v4388
      %v4407 = vmul.f32 %v4130, %v4388
      %v4408 = vmul.f32 %v4135, %v4388
      %v4409 = vmul.f32 %v4140, %v4388
      %v4410 = vmul.f32 %v4145, %v4388
      %v4411 = vmul.f32 %v4150, %v4388
      %v4412 = vmul.f32 %v4155, %v4388
      %v4413 = vmul.f32 %v4160, %v4388
      %v4414 = vmul.f32 %v4165, %v4388
      %v4415 = vmul.f32 %v4170, %v4388
      %v4416 = vmul.f32 %v4175, %v4388
      %v4417 = vmul.f32 %v4180, %v4388
      %v4418 = vmul.f32 %v4185, %v4388
      %v4419 = vmul.f32 %v4190, %v4388
      %v4420 = vmul.f32 %v4195, %v4388
      %v4421 = vmul.f32 %v4200, %v4388
      %v4423 = vlaneseq
      %v4424 = vshrl.u32 %v4423, 7
      %v4425 = vsub.s32 0, %v4424
      %v4426 = vrot.slane %v4383, %v4425
      %v4428 = vadd.f32 %v4390, %v4426
      %v4429 = vadd.f32 %v4391, %v4426
      %v4430 = vadd.f32 %v4392, %v4426
      %v4431 = vadd.f32 %v4393, %v4426
      %v4432 = vadd.f32 %v4394, %v4426
      %v4433 = vadd.f32 %v4395, %v4426
      %v4434 = vadd.f32 %v4396, %v4426
      %v4435 = vadd.f32 %v4397, %v4426
      %v4436 = vadd.f32 %v4398, %v4426
      %v4437 = vadd.f32 %v4399, %v4426
      %v4438 = vadd.f32 %v4400, %v4426
      %v4439 = vadd.f32 %v4401, %v4426
      %v4440 = vadd.f32 %v4402, %v4426
      %v4441 = vadd.f32 %v4403, %v4426
      %v4442 = vadd.f32 %v4404, %v4426
      %v4443 = vadd.f32 %v4405, %v4426
      %v4444 = vadd.f32 %v4406, %v4426
      %v4445 = vadd.f32 %v4407, %v4426
      %v4446 = vadd.f32 %v4408, %v4426
      %v4447 = vadd.f32 %v4409, %v4426
      %v4448 = vadd.f32 %v4410, %v4426
      %v4449 = vadd.f32 %v4411, %v4426
      %v4450 = vadd.f32 %v4412, %v4426
      %v4451 = vadd.f32 %v4413, %v4426
      %v4452 = vadd.f32 %v4414, %v4426
      %v4453 = vadd.f32 %v4415, %v4426
      %v4454 = vadd.f32 %v4416, %v4426
      %v4455 = vadd.f32 %v4417, %v4426
      %v4456 = vadd.f32 %v4418, %v4426
      %v4457 = vadd.f32 %v4419, %v4426
      %v4458 = vadd.f32 %v4420, %v4426
      %v4459 = vadd.f32 %v4421, %v4426
      %v4460 = vadd.f32 %v4428, %v362
      %v4461 = vadd.f32 %v4429, %v363
      %v4462 = vadd.f32 %v4430, %v364
      %v4463 = vadd.f32 %v4431, %v365
      %v4464 = vadd.f32 %v4432, %v366
      %v4465 = vadd.f32 %v4433, %v367
      %v4466 = vadd.f32 %v4434, %v368
      %v4467 = vadd.f32 %v4435, %v369
      %v4468 = vadd.f32 %v4436, %v370
      %v4469 = vadd.f32 %v4437, %v371
      %v4470 = vadd.f32 %v4438, %v372
      %v4471 = vadd.f32 %v4439, %v373
      %v4472 = vadd.f32 %v4440, %v374
      %v4473 = vadd.f32 %v4441, %v375
      %v4474 = vadd.f32 %v4442, %v376
      %v4475 = vadd.f32 %v4443, %v377
      %v4476 = vadd.f32 %v4444, %v378
      %v4477 = vadd.f32 %v4445, %v379
      %v4478 = vadd.f32 %v4446, %v380
      %v4479 = vadd.f32 %v4447, %v381
      %v4480 = vadd.f32 %v4448, %v382
      %v4481 = vadd.f32 %v4449, %v383
      %v4482 = vadd.f32 %v4450, %v384
      %v4483 = vadd.f32 %v4451, %v385
      %v4484 = vadd.f32 %v4452, %v386
      %v4485 = vadd.f32 %v4453, %v387
      %v4486 = vadd.f32 %v4454, %v388
      %v4487 = vadd.f32 %v4455, %v389
      %v4488 = vadd.f32 %v4456, %v390
      %v4489 = vadd.f32 %v4457, %v391
      %v4490 = vadd.f32 %v4458, %v392
      %v4491 = vadd.f32 %v4459, %v393
      %4492 = vst.msk [vmem:[%s361] sm:$0xff] %vm1555, %v4460
      %4493 = vst.msk [vmem:[%s361 + $0x8] sm:$0xff] %vm1555, %v4461
      %4494 = vst.msk [vmem:[%s361 + $0x10] sm:$0xff] %vm1555, %v4462
      %4495 = vst.msk [vmem:[%s361 + $0x18] sm:$0xff] %vm1555, %v4463
      %4496 = vst.msk [vmem:[%s361 + $0x20] sm:$0xff] %vm1555, %v4464
      %4497 = vst.msk [vmem:[%s361 + $0x28] sm:$0xff] %vm1555, %v4465
      %4498 = vst.msk [vmem:[%s361 + $0x30] sm:$0xff] %vm1555, %v4466
      %4499 = vst.msk [vmem:[%s361 + $0x38] sm:$0xff] %vm1555, %v4467
      %4500 = vst.msk [vmem:[%s361 + $0x40] sm:$0xff] %vm1555, %v4468
      %4501 = vst.msk [vmem:[%s361 + $0x48] sm:$0xff] %vm1555, %v4469
      %4502 = vst.msk [vmem:[%s361 + $0x50] sm:$0xff] %vm1555, %v4470
      %4503 = vst.msk [vmem:[%s361 + $0x58] sm:$0xff] %vm1555, %v4471
      %4504 = vst.msk [vmem:[%s361 + $0x60] sm:$0xff] %vm1555, %v4472
      %4505 = vst.msk [vmem:[%s361 + $0x68] sm:$0xff] %vm1555, %v4473
      %4506 = vst.msk [vmem:[%s361 + $0x70] sm:$0xff] %vm1555, %v4474
      %4507 = vst.msk [vmem:[%s361 + $0x78] sm:$0xff] %vm1555, %v4475
      %4508 = vst.msk [vmem:[%s361 + $0x80] sm:$0xff] %vm1555, %v4476
      %4509 = vst.msk [vmem:[%s361 + $0x88] sm:$0xff] %vm1555, %v4477
      %4510 = vst.msk [vmem:[%s361 + $0x90] sm:$0xff] %vm1555, %v4478
      %4511 = vst.msk [vmem:[%s361 + $0x98] sm:$0xff] %vm1555, %v4479
      %4512 = vst.msk [vmem:[%s361 + $0xa0] sm:$0xff] %vm1555, %v4480
      %4513 = vst.msk [vmem:[%s361 + $0xa8] sm:$0xff] %vm1555, %v4481
      %4514 = vst.msk [vmem:[%s361 + $0xb0] sm:$0xff] %vm1555, %v4482
      %4515 = vst.msk [vmem:[%s361 + $0xb8] sm:$0xff] %vm1555, %v4483
      %4516 = vst.msk [vmem:[%s361 + $0xc0] sm:$0xff] %vm1555, %v4484
      %4517 = vst.msk [vmem:[%s361 + $0xc8] sm:$0xff] %vm1555, %v4485
      %4518 = vst.msk [vmem:[%s361 + $0xd0] sm:$0xff] %vm1555, %v4486
      %4519 = vst.msk [vmem:[%s361 + $0xd8] sm:$0xff] %vm1555, %v4487
      %4520 = vst.msk [vmem:[%s361 + $0xe0] sm:$0xff] %vm1555, %v4488
      %4521 = vst.msk [vmem:[%s361 + $0xe8] sm:$0xff] %vm1555, %v4489
      %4522 = vst.msk [vmem:[%s361 + $0xf0] sm:$0xff] %vm1555, %v4490
      %4523 = vst.msk [vmem:[%s361 + $0xf8] sm:$0xff] %vm1555, %v4491
      %p4524 = scmp.lt.s32.totalorder %s19, 1
      %s4525 = scalar_select %p4524, %s19, 1
      %s4526 = smul.addr %s4525, 32
      %s4527 = smul.addr %s4526, 8
      %s4528 = scalar_lea.vmem %s8, %s4527
      // Predicated region
      $region53: #{tpu_custom_call.1} parent=51 // pred_check
        %p4529 = pneg %p230
      $region54: #{tpu_custom_call.1} parent=51 // pred_check_branch
        %4531 = sbr.rel (%p4529) target = $region56
      $region55: #{tpu_custom_call.1} parent=51 // pred_region
        _
      $region56: #{tpu_custom_call.1} parent=51 // pred_fallthru
        _
    $region52: #{tpu_custom_call.1} parent=5 // pred_fallthru
      _
    %p4532 = scmp.le.s32.totalorder 2, %s14
    // Predicated region
    $region57: #{tpu_custom_call.1} parent=5 // pred_check
      %p4533 = pneg %p4532
    $region58: #{tpu_custom_call.1} parent=5 // pred_check_branch
      %4535 = sbr.rel (%p4533) target = $region60
    $region59: #{tpu_custom_call.1} parent=5 // pred_region
      %s4536 = ssub.s32 %s14, 2
      // Predicated region
      $region61: #{tpu_custom_call.1} parent=59 // pred_check
        %p4537 = pneg %p236
      $region62: #{tpu_custom_call.1} parent=59 // pred_check_branch
        %4539 = sbr.rel (%p4537) target = $region64
      $region63: #{tpu_custom_call.1} parent=59 // pred_region
        %p4540 = scmp.lt.s32.totalorder %s20, 1
        %s4541 = scalar_select %p4540, %s20, 1
        %s4542 = smul.addr %s4541, 32
        %s4543 = smul.addr %s4542, 8
        %s4544 = scalar_lea.vmem %s8, %s4543
      $region64: #{tpu_custom_call.1} parent=59 // pred_fallthru
        _
    $region60: #{tpu_custom_call.1} parent=5 // pred_fallthru
      _
  $region6: #{tpu_custom_call.1} parent=0 // loop_footer
    %s18 = sadd.s32 1, %s14
  $region7: #{tpu_custom_call.1} parent=0 // loop_footer_branch
    %13 = sbr.rel target = $region3
  $region8: #{tpu_custom_call.1} parent=0 // loop_exit
    _

</llo_original>
